<compile_context>
chip_gen: v5e
topology: v5e:2x2
jax: 0.10.0
libtpu: 0.0.40
codegen_flags: <defaults>
</compile_context>

<pallas_src>
import functools

import jax
import jax.numpy as jnp
from jax import lax
from jax.experimental import pallas as pl
from jax.experimental.pallas import tpu as pltpu

DTYPE = jnp.float32
NS = 2                                   # "Ns" from the reference module
EPS = 1e-30                              # guard for sum(h*h) underflow in f32

_VMEM_LIMIT_BYTES = 48 * 1024 * 1024     # explicit scoped-VMEM limit (fits v7x's 64 MiB too)
_STREAM_BUDGET_BYTES = 24 * 1024 * 1024  # budget for double-buffered X+e row blocks


# ----------------------------------------------------------------------------
# Kernel: candidate scoring  score_j = mean_c ( (e^T h_j)_c^2 / sum_n h_{n,j}^2 )
# Fast path: whole N in one block  -> grid (NC/tile_nc,), no scratch.
# General path: N split in blocks  -> grid (NC/tile_nc, N/tile_n), f32 accumulators.
# ----------------------------------------------------------------------------
def _score_kernel_single(x_ref, e_ref, w_ref, b_ref, score_ref):
    z = jnp.dot(x_ref[...], w_ref[...], preferred_element_type=jnp.float32) + b_ref[...]
    h = jax.nn.sigmoid(z)                                             # (N, tile_nc) f32
    num = lax.dot_general(e_ref[...], h, (((0,), (0,)), ((), ())),
                          preferred_element_type=jnp.float32)         # (C, tile_nc)
    den = jnp.sum(h * h, axis=0, keepdims=True)                       # (1, tile_nc)
    v = (num * num) / (den + EPS)
    score_ref[...] = jnp.mean(v, axis=0, keepdims=True).astype(score_ref.dtype)


def _make_score_kernel_multi(n_valid, tile_n):
    needs_mask = bool(n_valid % tile_n)

    def kernel(x_ref, e_ref, w_ref, b_ref, score_ref, num_acc, den_acc):
        ni = pl.program_id(1)

        @pl.when(ni == 0)
        def _():
            num_acc[...] = jnp.zeros_like(num_acc)
            den_acc[...] = jnp.zeros_like(den_acc)

        z = jnp.dot(x_ref[...], w_ref[...], preferred_element_type=jnp.float32) + b_ref[...]
        h = jax.nn.sigmoid(z)                                          # (tile_n, tile_nc)
        if needs_mask:  # zero padded rows so they contribute nothing to num / den
            rows = ni * tile_n + lax.broadcasted_iota(jnp.int32, h.shape, 0)
            h = jnp.where(rows < n_valid, h, 0.0)

        num_acc[...] += lax.dot_general(e_ref[...], h, (((0,), (0,)), ((), ())),
                                        preferred_element_type=jnp.float32)
        den_acc[...] += jnp.sum(h * h, axis=0, keepdims=True)

        @pl.when(ni == pl.num_programs(1) - 1)
        def _():
            v = (num_acc[...] * num_acc[...]) / (den_acc[...] + EPS)
            score_ref[...] = jnp.mean(v, axis=0, keepdims=True).astype(score_ref.dtype)

    return kernel


def candidate_scores(X, e, W_random, b_random):
    N, d = X.shape
    C = e.shape[1]
    NC = W_random.shape[1]

    # Candidate (lane) tiling: keep >=2 blocks when NC allows (candidate axis stays a
    # "parallel" grid dimension -> shardable across TensorCores on v7x).
    tile_nc = 128 if (NC % 128 == 0 and NC > 128) else NC

    # Row tiling against an explicit VMEM budget (X + e double-buffered, f32).
    row_bytes = (d + C) * 4 * 2
    max_rows = max(8, _STREAM_BUDGET_BYTES // row_bytes)

    cparams_1d = pltpu.CompilerParams(dimension_semantics=("parallel",),
                                      vmem_limit_bytes=_VMEM_LIMIT_BYTES)
    cparams_2d = pltpu.CompilerParams(dimension_semantics=("parallel", "arbitrary"),
                                      vmem_limit_bytes=_VMEM_LIMIT_BYTES)

    if N <= max_rows:
        # Fast path: one fat block over N -> 1 grid step per candidate lane-block.
        return pl.pallas_call(
            _score_kernel_single,
            out_shape=jax.ShapeDtypeStruct((1, NC), DTYPE),
            grid_spec=pltpu.PrefetchScalarGridSpec(
                num_scalar_prefetch=0,
                grid=(NC // tile_nc,),
                in_specs=[
                    pl.BlockSpec((N, d), lambda j: (0, 0)),          # X  (f32)
                    pl.BlockSpec((N, C), lambda j: (0, 0)),          # e  (f32)
                    pl.BlockSpec((d, tile_nc), lambda j: (0, j)),    # W_random
                    pl.BlockSpec((1, tile_nc), lambda j: (0, j)),    # b_random
                ],
                out_specs=pl.BlockSpec((1, tile_nc), lambda j: (0, j)),
            ),
            compiler_params=cparams_1d,
        )(X, e, W_random, b_random)

    # General path: large N -> pipelined reduction over row blocks, VMEM accumulators.
    tile_n = min((max_rows // 8) * 8, 4096)
    n_blocks = pl.cdiv(N, tile_n)
    n_pad = n_blocks * tile_n
    if n_pad != N:
        X = jnp.pad(X, ((0, n_pad - N), (0, 0)))
        e = jnp.pad(e, ((0, n_pad - N), (0, 0)))

    kernel = _make_score_kernel_multi(N, tile_n)
    return pl.pallas_call(
        kernel,
        out_shape=jax.ShapeDtypeStruct((1, NC), DTYPE),
        grid_spec=pltpu.PrefetchScalarGridSpec(
            num_scalar_prefetch=0,
            grid=(NC // tile_nc, n_blocks),               # candidates parallel, N-reduction last
            in_specs=[
                pl.BlockSpec((tile_n, d), lambda j, i: (i, 0)),
                pl.BlockSpec((tile_n, C), lambda j, i: (i, 0)),
                pl.BlockSpec((d, tile_nc), lambda j, i: (0, j)),
                pl.BlockSpec((1, tile_nc), lambda j, i: (0, j)),
            ],
            out_specs=pl.BlockSpec((1, tile_nc), lambda j, i: (0, j)),
            scratch_shapes=[pltpu.VMEM((C, tile_nc), jnp.float32),
                            pltpu.VMEM((1, tile_nc), jnp.float32)],
        ),
        compiler_params=cparams_2d,
    )(X, e, W_random, b_random)


# ----------------------------------------------------------------------------
# Shared per-step pieces (inside jit): random pool, scoring kernel, best column.
# ----------------------------------------------------------------------------
def _propose_neuron(k, reconfig_number, X, e, lambdas_arr, key):
    d = X.shape[1]
    L = lambdas_arr.shape[0]
    NC = L * reconfig_number

    step_key = jax.random.fold_in(key, k)
    kw, kb = jax.random.split(step_key)
    wu = jax.random.uniform(kw, (d, L, reconfig_number), DTYPE)
    bu = jax.random.uniform(kb, (1, L, reconfig_number), DTYPE)
    W_random = (lambdas_arr[None, :, None] * (2.0 * wu - 1.0)).reshape(d, NC)
    b_random = (lambdas_arr[None, :, None] * (2.0 * bu - 1.0)).reshape(1, NC)

    scores = candidate_scores(X, e, W_random, b_random)            # (1, NC), Pallas
    best_idx = jnp.argmax(scores[0])                               # stays on device

    w_best = lax.dynamic_slice_in_dim(W_random, best_idx, 1, axis=1)   # (d, 1)
    b_best = lax.dynamic_slice_in_dim(b_random, best_idx, 1, axis=1)   # (1, 1)
    # Winning column recomputed in plain jnp (trivial matvec; fuses with the H update).
    h_c = jax.nn.sigmoid(X @ w_best + b_best)[:, 0]                    # (N,)
    return h_c, w_best, b_best


def _insert_neuron(k, H, W, b, h_c, w_best, b_best):
    H = lax.dynamic_update_slice(H, h_c[:, None], (0, k))
    W = lax.dynamic_update_slice(W, w_best, (0, k))
    b = lax.dynamic_update_slice(b, b_best[0], (k,))
    return H, W, b


# ----------------------------------------------------------------------------
# Three jitted step variants (exactly 3 XLA compiles for the whole run):
#   k < Ns  : normal equations on padded H (identity padding on the Gram diagonal)
#   k == Ns : QR of H[:, :Ns+1], then pad Q/R/QT into max_neurons buffers
#   k > Ns  : rank-1 Gram–Schmidt QR update with k traced (single compile for all k)
# ----------------------------------------------------------------------------
@functools.partial(jax.jit, static_argnums=(0,))
def _step_normal_eq(reconfig_number, k, X, Y, e, H, W, b, lambdas_arr, key):
    h_c, w_best, b_best = _propose_neuron(k, reconfig_number, X, e, lambdas_arr, key)
    H, W, b = _insert_neuron(k, H, W, b, h_c, w_best, b_best)
    M = H.shape[1]
    pad_diag = jnp.where(jnp.arange(M) > k, 1.0, 0.0).astype(DTYPE)
    G = H.T @ H + jnp.diag(pad_diag)          # blockdiag(Hk^T Hk, I) -> padded rows solve to 0
    beta = jnp.linalg.solve(G, H.T @ Y)
    e_new = Y - H @ beta
    rmse = jnp.sqrt(jnp.mean(e_new * e_new))
    return H, W, b, beta, e_new, rmse


@functools.partial(jax.jit, static_argnums=(0, 1))
def _step_qr_init(reconfig_number, k, X, Y, e, H, W, b, lambdas_arr, key):
    h_c, w_best, b_best = _propose_neuron(k, reconfig_number, X, e, lambdas_arr, key)
    H, W, b = _insert_neuron(k, H, W, b, h_c, w_best, b_best)
    N, M = H.shape
    C = Y.shape[1]

    Hk = H[:, :k + 1]
    Qk, Rk = jnp.linalg.qr(Hk)                                     # (N,k+1), (k+1,k+1)
    QTk = Qk.T @ Y
    beta_k = jax.scipy.linalg.solve_triangular(Rk, QTk, lower=False)

    Q = jnp.zeros((N, M), DTYPE).at[:, :k + 1].set(Qk)
    R = jnp.eye(M, dtype=DTYPE).at[:k + 1, :k + 1].set(Rk)         # identity padding
    QT = jnp.zeros((M, C), DTYPE).at[:k + 1, :].set(QTk)
    beta = jnp.zeros((M, C), DTYPE).at[:k + 1, :].set(beta_k)

    e_new = Y - H @ beta
    rmse = jnp.sqrt(jnp.mean(e_new * e_new))
    return H, W, b, beta, Q, R, QT, e_new, rmse


@functools.partial(jax.jit, static_argnums=(0,))
def _step_qr_update(reconfig_number, k, X, Y, e, H, W, b, Q, R, QT, lambdas_arr, key):
    # TODO(synk): single-pass classical Gram–Schmidt in f32 loses orthogonality faster than the
    #             f64 reference for large max_neurons (matches the reference algorithm otherwise).
    h_c, w_best, b_best = _propose_neuron(k, reconfig_number, X, e, lambdas_arr, key)
    H, W, b = _insert_neuron(k, H, W, b, h_c, w_best, b_best)
    M = H.shape[1]

    r1 = Q.T @ h_c                               # entries beyond the current count are exactly 0
    t = h_c - Q @ r1
    r2 = jnp.linalg.norm(t)
    q = t / r2

    Q = lax.dynamic_update_slice(Q, q[:, None], (0, k))
    new_col = jnp.where(jnp.arange(M) == k, r2, r1).astype(DTYPE)
    R = lax.dynamic_update_slice(R, new_col[:, None], (0, k))
    QT = lax.dynamic_update_slice(QT, (q @ Y)[None, :], (k, 0))

    beta = jax.scipy.linalg.solve_triangular(R, QT, lower=False)   # padded rows stay 0
    e_new = Y - H @ beta
    rmse = jnp.sqrt(jnp.mean(e_new * e_new))
    return H, W, b, beta, Q, R, QT, e_new, rmse


# ----------------------------------------------------------------------------
# SCNUTrain.forward equivalent
# ----------------------------------------------------------------------------
def scnu_train(X, Y, lambdas, max_neurons, reconfig_number, key):
    X = jnp.asarray(X, DTYPE)
    Y = jnp.asarray(Y, DTYPE)
    N, d = X.shape
    C = Y.shape[1]
    lambdas_arr = jnp.asarray(lambdas, DTYPE)
    M = max_neurons

    e = Y
    H = jnp.zeros((N, M), DTYPE)
    W = jnp.zeros((d, M), DTYPE)
    b = jnp.zeros((M,), DTYPE)
    beta = jnp.zeros((M, C), DTYPE)
    Q = jnp.zeros((N, M), DTYPE)
    R = jnp.eye(M, dtype=DTYPE)
    QT = jnp.zeros((M, C), DTYPE)

    rmses = []
    for k in range(max_neurons):
        if k < NS:
            H, W, b, beta, e, rmse = _step_normal_eq(
                reconfig_number, jnp.int32(k), X, Y, e, H, W, b, lambdas_arr, key)
        elif k == NS:
            H, W, b, beta, Q, R, QT, e, rmse = _step_qr_init(
                reconfig_number, k, X, Y, e, H, W, b, lambdas_arr, key)
        else:
            H, W, b, beta, Q, R, QT, e, rmse = _step_qr_update(
                reconfig_number, jnp.int32(k), X, Y, e, H, W, b, Q, R, QT, lambdas_arr, key)
        rmses.append(rmse)

    return W, b, beta, jnp.stack(rmses)


# ----------------------------------------------------------------------------
if __name__ == "__main__":
    key = jax.random.PRNGKey(0)
    kx, ky, ktrain = jax.random.split(key, 3)

    # small, MNIST-flavoured shapes
    N, d, C = 1024, 16, 10
    max_neurons = 6
    reconfig_number = 64
    lambdas = [0.5, 1.0, 2.0, 4.0]        # NC = 4 * 64 = 256 candidates -> 2 lane blocks of 128

    X = jax.random.uniform(kx, (N, d), dtype=DTYPE)
    labels = jax.random.randint(ky, (N,), 0, C)
    Y = jax.nn.one_hot(labels, C, dtype=DTYPE)

    W, b, beta, rmses = scnu_train(X, Y, lambdas, max_neurons, reconfig_number, ktrain)
    jax.block_until_ready((W, b, beta, rmses))

    assert W.shape == (d, max_neurons)
    assert b.shape == (max_neurons,)
    assert beta.shape == (max_neurons, C)
    assert bool(jnp.all(jnp.isfinite(rmses)))
    print("KERNEL_OK")
</pallas_src>

<mosaic_0001>
module attributes {stable_mosaic.version = 11 : i64} {
  func.func @_score_kernel_single(%arg0: i32, %arg1: memref<1024x16xf32, #tpu.memory_space<vmem>>, %arg2: memref<1024x10xf32, #tpu.memory_space<vmem>>, %arg3: memref<16x128xf32, #tpu.memory_space<vmem>>, %arg4: memref<1x128xf32, #tpu.memory_space<vmem>>, %arg5: memref<1x128xf32, #tpu.memory_space<vmem>>) attributes {dimension_semantics = [#tpu.dimension_semantics<parallel>], iteration_bounds = array<i64: 2>, scalar_prefetch = 0 : i64, scratch_operands = 0 : i64, tpu.core_type = #tpu.core_type<tc>, window_params = [{pipeline_mode = #tpu.pipeline_mode<synchronous>, transform_indices = @transform_0, window_bounds = array<i64: 1024, 16>}, {pipeline_mode = #tpu.pipeline_mode<synchronous>, transform_indices = @transform_1, window_bounds = array<i64: 1024, 10>}, {transform_indices = @transform_2, window_bounds = array<i64: 16, 128>}, {transform_indices = @transform_3, window_bounds = array<i64: 1, 128>}, {transform_indices = @transform_4, window_bounds = array<i64: 1, 128>}]} {
    %c0 = arith.constant 0 : index
    %c0_0 = arith.constant 0 : index
    %0 = vector.load %arg1[%c0, %c0_0] : memref<1024x16xf32, #tpu.memory_space<vmem>>, vector<1024x16xf32>
    %c0_1 = arith.constant 0 : index
    %c0_2 = arith.constant 0 : index
    %1 = vector.load %arg3[%c0_1, %c0_2] : memref<16x128xf32, #tpu.memory_space<vmem>>, vector<16x128xf32>
    %cst = arith.constant dense<0.000000e+00> : vector<1024x128xf32>
    %2 = tpu.matmul %0, %1, %cst {dimension_numbers = #tpu.dot_dimension_numbers<[1], [0], [0], [1], [0, 0, 1, 1], [], []>} : vector<1024x16xf32>, vector<16x128xf32>, vector<1024x128xf32> -> vector<1024x128xf32>
    %c0_3 = arith.constant 0 : index
    %c0_4 = arith.constant 0 : index
    %3 = vector.load %arg4[%c0_3, %c0_4] : memref<1x128xf32, #tpu.memory_space<vmem>>, vector<1x128xf32>
    %4 = vector.broadcast %3 : vector<1x128xf32> to vector<1024x128xf32>
    %5 = arith.addf %2, %4 : vector<1024x128xf32>
    %6 = arith.negf %5 : vector<1024x128xf32>
    %7 = math.exp %6 : vector<1024x128xf32>
    %cst_5 = arith.constant 1.000000e+00 : f32
    %8 = vector.broadcast %cst_5 : f32 to vector<1024x128xf32>
    %9 = arith.addf %8, %7 : vector<1024x128xf32>
    %10 = arith.divf %8, %9 : vector<1024x128xf32>
    %c0_6 = arith.constant 0 : index
    %c0_7 = arith.constant 0 : index
    %11 = vector.load %arg2[%c0_6, %c0_7] : memref<1024x10xf32, #tpu.memory_space<vmem>>, vector<1024x10xf32>
    %cst_8 = arith.constant dense<0.000000e+00> : vector<10x128xf32>
    %12 = tpu.matmul %11, %10, %cst_8 {dimension_numbers = #tpu.dot_dimension_numbers<[0], [0], [1], [1], [0, 1, 1, 1], [], []>} : vector<1024x10xf32>, vector<1024x128xf32>, vector<10x128xf32> -> vector<10x128xf32>
    %13 = arith.mulf %10, %10 : vector<1024x128xf32>
    %cst_9 = arith.constant dense<0.000000e+00> : vector<128xf32>
    %14 = vector.multi_reduction <add>, %13, %cst_9 [0] : vector<1024x128xf32> to vector<128xf32>
    %15 = vector.shape_cast %14 : vector<128xf32> to vector<1x128xf32>
    %16 = arith.mulf %12, %12 : vector<10x128xf32>
    %cst_10 = arith.constant 1.000000e-30 : f32
    %17 = vector.broadcast %cst_10 : f32 to vector<1x128xf32>
    %18 = arith.addf %15, %17 : vector<1x128xf32>
    %19 = vector.broadcast %18 : vector<1x128xf32> to vector<10x128xf32>
    %20 = arith.divf %16, %19 : vector<10x128xf32>
    %cst_11 = arith.constant dense<0.000000e+00> : vector<128xf32>
    %21 = vector.multi_reduction <add>, %20, %cst_11 [0] : vector<10x128xf32> to vector<128xf32>
    %22 = vector.shape_cast %21 : vector<128xf32> to vector<1x128xf32>
    %cst_12 = arith.constant 1.000000e+01 : f32
    %23 = vector.broadcast %cst_12 : f32 to vector<1x128xf32>
    %24 = arith.divf %22, %23 : vector<1x128xf32>
    %c0_13 = arith.constant 0 : index
    %c0_14 = arith.constant 0 : index
    %25 = vector.load %arg5[%c0_13, %c0_14] : memref<1x128xf32, #tpu.memory_space<vmem>>, vector<1x128xf32>
    tpu.vector_store %arg5[%c0_13, %c0_14], %24 {strides = array<i32>} : memref<1x128xf32, #tpu.memory_space<vmem>>, vector<1x128xf32>,
    return
  }
  func.func @transform_0(%arg0: i32) -> (i32, i32) {
    %c0_i32 = arith.constant 0 : i32
    %c0_i32_0 = arith.constant 0 : i32
    %c0_i32_1 = arith.constant 0 : i32
    return %c0_i32, %c0_i32_0 : i32, i32
  }
  func.func @transform_1(%arg0: i32) -> (i32, i32) {
    %c0_i32 = arith.constant 0 : i32
    %c0_i32_0 = arith.constant 0 : i32
    %c0_i32_1 = arith.constant 0 : i32
    return %c0_i32, %c0_i32_0 : i32, i32
  }
  func.func @transform_2(%arg0: i32) -> (i32, i32) {
    %c0_i32 = arith.constant 0 : i32
    %c0_i32_0 = arith.constant 0 : i32
    return %c0_i32, %arg0 : i32, i32
  }
  func.func @transform_3(%arg0: i32) -> (i32, i32) {
    %c0_i32 = arith.constant 0 : i32
    %c0_i32_0 = arith.constant 0 : i32
    return %c0_i32, %arg0 : i32, i32
  }
  func.func @transform_4(%arg0: i32) -> (i32, i32) {
    %c0_i32 = arith.constant 0 : i32
    %c0_i32_0 = arith.constant 0 : i32
    return %c0_i32, %arg0 : i32, i32
  }
}

</mosaic_0001>

<llo_original>
// kernel: custom-call.8
$region0: #{custom-call.8}
  %s0 = inlined_call_operand.vmem [shape: f32[6,6], index: 0, kind: input, shape index: {}]
  %s1 = inlined_call_operand.vmem [shape: f32[6,6], index: 1, kind: output, shape index: {0}]
  %s2 = inlined_call_operand.hbm [shape: s32[6], index: 2, kind: output, shape index: {1}]
  %s3 = inlined_call_operand.vmem [shape: s32[6], index: 3, kind: output, shape index: {2}]
  %4 = xla_tuple %s1, %s2, %s3
  $region1: #{custom-call.8} parent=0
    #allocation0 [shape = 'u8[4096]{0}', space=vmem, size = 0x1000, scoped, tag = 'operand span for operand 0']
    #allocation1 [shape = 'u8[4096]{0}', space=vmem, size = 0x1000, scoped, tag = 'operand span for operand 1']
    #allocation2 [shape = 'u8[4096]{0}', space=vmem, size = 0x1000, scoped, tag = 'operand span for operand 2']
    #allocation3 [shape = 'u8[512]{0}', space=vmem, size = 0x400, scoped, tag = 'packed  for operand 2']
    #allocation4 [shape = 's32[1]{0}', space=sflag, size = 0x4, scoped, tag = 'scoped memory for custom-call.8']
    #allocation5 [shape = 'u8[4096]{0}', space=vmem, size = 0x1000, scoped, tag = 'operand span for operand 3']
    #allocation6 [shape = 'u8[512]{0}', space=vmem, size = 0x400, scoped, tag = 'packed  for operand 3']
    #allocation7 [shape = 's32[6,128]{1,0}', space=vmem, size = 0x1000, scoped, tag = 'scratch for permutations']
    %5 = vsyncpa [#allocation4], 0
    // Predicated region
    $region2: #{custom-call.8} parent=1 // pred_check
      _
    $region3: #{custom-call.8} parent=1 // pred_check_branch
      %7 = sbr.rel (0) target = $region5
    $region4: #{custom-call.8} parent=1 // pred_region
      %p9 = scmp.gt.s32.totalorder 1, 0
      // Predicated region
      $region6: #{custom-call.8} parent=4 // pred_check
        %p10 = pneg %p9
      $region7: #{custom-call.8} parent=4 // pred_check_branch
        %12 = sbr.rel (%p10) target = $region9
      $region8: #{custom-call.8} parent=4 // pred_region
        %s13 = ssub.s32 1, 1
        %s14 = smul.u32 %s13, 8
        %s15 = scalar_lea.vmem %s0, %s14
        %v16 = vld [vmem:[%s0] sm:$0xff]
        // While loop
        $region10: #{custom-call.8} parent=8 // loop_pre_header
          _
        $region11: #{custom-call.8} parent=8 // loop_header
          %s17 = sphi %s0, %s39
          %s18 = sphi [#allocation0], %s40
          %v19 = vphi %v16, %v41
          %s20 = ssub.s32 %s15, 64
          %p21 = scmp.gt.s32.totalorder %s17, %s20
        $region12: #{custom-call.8} parent=8 // loop_header_branch
          %23 = sbr.rel (%p21) target = $region16
        $region13: #{custom-call.8} parent=8 // loop_body
          %24 = vst [vmem:[%s18] sm:$0xff] %v19
          %v25 = vld [vmem:[%s17 + $0x8] sm:$0xff]
          %26 = vst [vmem:[%s18 + $0x8] sm:$0xff] %v25
          %v27 = vld [vmem:[%s17 + $0x10] sm:$0xff]
          %28 = vst [vmem:[%s18 + $0x10] sm:$0xff] %v27
          %v29 = vld [vmem:[%s17 + $0x18] sm:$0xff]
          %30 = vst [vmem:[%s18 + $0x18] sm:$0xff] %v29
          %v31 = vld [vmem:[%s17 + $0x20] sm:$0xff]
          %32 = vst [vmem:[%s18 + $0x20] sm:$0xff] %v31
          %v33 = vld [vmem:[%s17 + $0x28] sm:$0xff]
          %34 = vst [vmem:[%s18 + $0x28] sm:$0xff] %v33
          %v35 = vld [vmem:[%s17 + $0x30] sm:$0xff]
          %36 = vst [vmem:[%s18 + $0x30] sm:$0xff] %v35
          %v37 = vld [vmem:[%s17 + $0x38] sm:$0xff]
          %38 = vst [vmem:[%s18 + $0x38] sm:$0xff] %v37
        $region14: #{custom-call.8} parent=8 // loop_footer
          %s39 = scalar_lea.vmem %s17, 64
          %s40 = scalar_lea.vmem %s18, 64
          %v41 = vld [vmem:[%s17 + $0x40] sm:$0xff]
        $region15: #{custom-call.8} parent=8 // loop_footer_branch
          %42 = sbr.rel target = $region11
        $region16: #{custom-call.8} parent=8 // loop_exit
          _
        // While loop
        $region17: #{custom-call.8} parent=8 // loop_pre_header
          _
        $region18: #{custom-call.8} parent=8 // loop_header
          %s43 = sphi %s17, %s51
          %s44 = sphi %s18, %s52
          %v45 = vphi %v19, %v45
          %p46 = scmp.gt.s32.totalorder %s43, %s15
        $region19: #{custom-call.8} parent=8 // loop_header_branch
          %48 = sbr.rel (%p46) target = $region23
        $region20: #{custom-call.8} parent=8 // loop_body
          %v49 = vld [vmem:[%s43] sm:$0xff]
          %50 = vst [vmem:[%s44] sm:$0xff] %v49
        $region21: #{custom-call.8} parent=8 // loop_footer
          %s51 = scalar_lea.vmem %s43, 8
          %s52 = scalar_lea.vmem %s44, 8
        $region22: #{custom-call.8} parent=8 // loop_footer_branch
          %53 = sbr.rel target = $region18
        $region23: #{custom-call.8} parent=8 // loop_exit
          _
      $region9: #{custom-call.8} parent=4 // pred_fallthru
        _
      %s55 = ssub.s32 1, 1
      %s56 = smul.u32 1, 8
      %s57 = scalar_lea.vmem [#allocation0], %s56
      %s58 = smul.u32 1, 8
      %s59 = scalar_lea.vmem %s0, %s58
      %v60 = vld [vmem:[%s59] sm:%s55]
      %61 = vst [vmem:[%s57] sm:%s55] %v60
    $region5: #{custom-call.8} parent=1 // pred_fallthru
      _
    %v62 = vld [vmem:[#allocation0] sm:$0xff]
    %63 = vst [vmem:[#allocation1] sm:$0xff] %v62
    %64 = vst [vmem:[#allocation2] sm:$0x1] 0
    %v65 = vlaneseq
    %v66 = vshrl.u32 %v65, 7
    %v67 = vmov %v66
    %69 = vst [vmem:[#allocation7] sm:$0xff] %v67
    loop: start=0, step=1, limit=6
    $region25: #{custom-call.8} parent=1 // loop_pre_header
      _
    $region26: #{custom-call.8} parent=1 // loop_header
      %s71 = sphi 0, %s75
      %p72 = scmp.ge.s32.totalorder %s71, 6
    $region27: #{custom-call.8} parent=1 // loop_header_branch
      %74 = sbr.rel (%p72) target = $region31
    $region28: #{custom-call.8} parent=1 // loop_body
      %v76 = vstv %s71
      %v77 = vlaneseq
      %v78 = vshrl.u32 %v77, 7
      %v79 = vmov %v78
      %v80 = vld [vmem:[#allocation1] sm:$0xff]
      %v81 = vand.u32 2147483647, %v80
      %v83 = vstv %s71
      %vm84 = vcmp.ge.s32.totalorder %v79, %v83
      %vm85 = vcmp.lt.s32.totalorder %v79, 6
      %vm86 = vmand %vm84, %vm85
      %vm87 = vcmp.lt.f32.partialorder -inf, %v81
      %vm88 = vmand %vm86, %vm87
      %v89 = vsel %vm88, %v79, %v76
      %v90 = vsel %vm88, %v81, -inf
      %v91 = vrot.slane %v90, 1
      %v92 = vrot.slane %v89, 1
      %vm93 = vcmp.ge.f32.partialorder %v91, %v90
      %v94 = vsel %vm93, %v91, %v90
      %v95 = vsel %vm93, %v92, %v89
      %v96 = vrot.slane %v91, 1
      %v97 = vrot.slane %v92, 1
      %vm98 = vcmp.ge.f32.partialorder %v96, %v94
      %v99 = vsel %vm98, %v96, %v94
      %v100 = vsel %vm98, %v97, %v95
      %v101 = vrot.slane %v96, 1
      %v102 = vrot.slane %v97, 1
      %vm103 = vcmp.ge.f32.partialorder %v101, %v99
      %v104 = vsel %vm103, %v101, %v99
      %v105 = vsel %vm103, %v102, %v100
      %v106 = vrot.slane %v101, 1
      %v107 = vrot.slane %v102, 1
      %vm108 = vcmp.ge.f32.partialorder %v106, %v104
      %v109 = vsel %vm108, %v106, %v104
      %v110 = vsel %vm108, %v107, %v105
      %v111 = vrot.slane %v106, 1
      %v112 = vrot.slane %v107, 1
      %vm113 = vcmp.ge.f32.partialorder %v111, %v109
      %v114 = vsel %vm113, %v111, %v109
      %v115 = vsel %vm113, %v112, %v110
      %v116 = vrot.slane %v111, 1
      %v117 = vrot.slane %v112, 1
      %vm118 = vcmp.ge.f32.partialorder %v116, %v114
      %v119 = vsel %vm118, %v116, %v114
      %v120 = vsel %vm118, %v117, %v115
      %v121 = vrot.slane %v116, 1
      %v122 = vrot.slane %v117, 1
      %vm123 = vcmp.ge.f32.partialorder %v121, %v119
      %v124 = vsel %vm123, %v121, %v119
      %v125 = vsel %vm123, %v122, %v120
      %s126 = ssub.s32 128, %s71
      %127 = vrot.lane.b32.xlu0 %v125, %s126
      %v128 = vpop.permute.xlu0 %127
      %s129 = vtos %v128
      %v130 = vstv %s71
      %v131 = vlaneseq
      %v132 = vand.u32 %v131, 127
      %vm133 = vcmp.eq.s32.totalorder %v132, %v130
      %v134 = vstv %s129
      %v135 = vld [vmem:[#allocation2] ss:$0 sm:$0xff]
      %v136 = vsel %vm133, %v134, %v135
      %137 = vst [vmem:[#allocation2] sm:$0x1] %v136
      %s138 = scalar_lea.vmem [#allocation1], %s71
      %s139 = scalar_lea.vmem [#allocation1], %s129
      %v140 = vld [vmem:[%s138] ss:$0 sm:$0xff]
      %v141 = vld [vmem:[%s139] ss:$0 sm:$0xff]
      %142 = vst [vmem:[%s139] sm:$0x1] %v140
      %143 = vst [vmem:[%s138] sm:$0x1] %v141
      %s144 = scalar_lea.vmem [#allocation7], %s71
      %s145 = scalar_lea.vmem [#allocation7], %s129
      %v146 = vld [vmem:[%s144] ss:$0 sm:$0xff]
      %v147 = vld [vmem:[%s145] ss:$0 sm:$0xff]
      %148 = vst [vmem:[%s145] sm:$0x1] %v146
      %149 = vst [vmem:[%s144] sm:$0x1] %v147
      %vm150 = vcmp.ne.f32.partialorder %v141, 0.0
      %vm151 = vmand %vm133, %vm150
      %v152 = vsel %vm151, %v141, 1.0
      %v153 = vlaneseq
      %v154 = vand.u32 %v153, 127
      %v155 = vstv %s71
      %vm156 = vcmp.gt.s32.totalorder %v154, %v155
      %v157 = vsel %vm156, %v141, 0.0
      %v158 = vlaneseq
      %v159 = vshrl.u32 %v158, 7
      %v160 = vmov %v159
      %v161 = vld [vmem:[#allocation1] sm:$0xff]
      %v163 = vstv %s71
      %vm164 = vcmp.gt.s32.totalorder %v160, %v163
      %v165 = vsel %vm164, %v152, 1.0
      %v166 = vrcp.pop %v165
      %v167 = vmul.f32 %v165, %v166
      %v168 = vsub.f32 1.0, %v167
      %v169 = vmul.f32 %v166, %v168
      %v170 = vadd.f32 %v166, %v169
      %vm171 = vweird.f32 %v165
      %vm172 = vweird.f32 %v166
      %vm173 = vmor %vm171, %vm172
      %v174 = vsel %vm173, %v166, %v170
      %v175 = vand.u32 2147483647, %v165
      %vm176 = vcmp.eq.f32.partialorder %v175, 8.507059e+37
      %v177 = vand.u32 %v165, 2147483648
      %v178 = vor.u32 1.1754944e-38, %v177
      %v179 = vsel %vm176, %v178, %v174
      %v180 = vmul.f32 %v161, %v179
      %vm181 = vmand %vm164, %vm133
      %v182 = vsel %vm181, %v180, 0.0
      %183 = vadd.xlane.f32.xlu0 %v182
      %v184 = vpop.xlane.xlu0 %183
      %v185 = vmul.f32 %v184, %v157
      %v186 = vsub.f32 %v180, %v185
      %187 = vst [vmem:[#allocation1] sm:$0xff] %v186
    $region29: #{custom-call.8} parent=1 // loop_footer
      %s75 = sadd.s32 1, %s71
    $region30: #{custom-call.8} parent=1 // loop_footer_branch
      %70 = sbr.rel target = $region26
    $region31: #{custom-call.8} parent=1 // loop_exit
      _
    %v188 = vld [vmem:[#allocation7] sm:$0xff]
    %s189 = scalar_lea.vmem [#allocation7], 8
    %s190 = scalar_lea.vmem [#allocation7], 16
    %s191 = scalar_lea.vmem [#allocation7], 24
    %s192 = scalar_lea.vmem [#allocation7], 32
    %s193 = scalar_lea.vmem [#allocation7], 40
    %s194 = scalar_lea.vmem [#allocation7], 48
    %s195 = scalar_lea.vmem [#allocation7], 56
    %s196 = scalar_lea.vmem [#allocation7], 64
    %s197 = scalar_lea.vmem [#allocation7], 72
    %s198 = scalar_lea.vmem [#allocation7], 80
    %s199 = scalar_lea.vmem [#allocation7], 88
    %s200 = scalar_lea.vmem [#allocation7], 96
    %s201 = scalar_lea.vmem [#allocation7], 104
    %s202 = scalar_lea.vmem [#allocation7], 112
    %s203 = scalar_lea.vmem [#allocation7], 120
    %204 = vxpose.xlu0.b32.start [1/16] %v188, 128
    %205 = vxpose.xlu0.b32.cont [2/16] 0, 128
    %206 = vxpose.xlu0.b32.cont [3/16] 0, 128
    %207 = vxpose.xlu0.b32.cont [4/16] 0, 128
    %208 = vxpose.xlu0.b32.cont [5/16] 0, 128
    %209 = vxpose.xlu0.b32.cont [6/16] 0, 128
    %210 = vxpose.xlu0.b32.cont [7/16] 0, 128
    %211 = vxpose.xlu0.b32.cont [8/16] 0, 128
    %212 = vxpose.xlu0.b32.cont [9/16] 0, 128
    %213 = vxpose.xlu0.b32.cont [10/16] 0, 128
    %214 = vxpose.xlu0.b32.cont [11/16] 0, 128
    %215 = vxpose.xlu0.b32.cont [12/16] 0, 128
    %216 = vxpose.xlu0.b32.cont [13/16] 0, 128
    %217 = vxpose.xlu0.b32.cont [14/16] 0, 128
    %218 = vxpose.xlu0.b32.cont [15/16] 0, 128
    %219 = vxpose.xlu0.b32.end [16/16] 0, 128
    %v220 = vpop.trf.xlu0
    %v221 = vpop.trf.xlu0
    %v222 = vpop.trf.xlu0
    %v223 = vpop.trf.xlu0
    %v224 = vpop.trf.xlu0
    %v225 = vpop.trf.xlu0
    %v226 = vpop.trf.xlu0
    %v227 = vpop.trf.xlu0
    %v228 = vpop.trf.xlu0
    %v229 = vpop.trf.xlu0
    %v230 = vpop.trf.xlu0
    %v231 = vpop.trf.xlu0
    %v232 = vpop.trf.xlu0
    %v233 = vpop.trf.xlu0
    %v234 = vpop.trf.xlu0
    %v235 = vpop.trf.xlu0
    %236 = vst [vmem:[#allocation5] sm:$0x1] %v220
    %s238 = ssub.s32 2, 1
    %v239 = vld [vmem:[#allocation2] sm:%s238]
    %s241 = ssub.s32 2, 1
    %242 = vst [vmem:[#allocation3] sm:%s241] %v239
    %s244 = ssub.s32 2, 1
    %v245 = vld [vmem:[#allocation5] sm:%s244]
    %s247 = ssub.s32 2, 1
    %248 = vst [vmem:[#allocation6] sm:%s247] %v245
    // Predicated region
    $region32: #{custom-call.8} parent=1 // pred_check
      _
    $region33: #{custom-call.8} parent=1 // pred_check_branch
      %250 = sbr.rel (0) target = $region35
    $region34: #{custom-call.8} parent=1 // pred_region
      %p252 = scmp.gt.s32.totalorder 1, 0
      // Predicated region
      $region36: #{custom-call.8} parent=34 // pred_check
        %p253 = pneg %p252
      $region37: #{custom-call.8} parent=34 // pred_check_branch
        %255 = sbr.rel (%p253) target = $region39
      $region38: #{custom-call.8} parent=34 // pred_region
        %s256 = ssub.s32 1, 1
        %s257 = smul.u32 %s256, 8
        %s258 = scalar_lea.vmem [#allocation1], %s257
        %v259 = vld [vmem:[#allocation1] sm:$0xff]
        // While loop
        $region40: #{custom-call.8} parent=38 // loop_pre_header
          _
        $region41: #{custom-call.8} parent=38 // loop_header
          %s260 = sphi [#allocation1], %s282
          %s261 = sphi %s1, %s283
          %v262 = vphi %v259, %v284
          %s263 = ssub.s32 %s258, 64
          %p264 = scmp.gt.s32.totalorder %s260, %s263
        $region42: #{custom-call.8} parent=38 // loop_header_branch
          %266 = sbr.rel (%p264) target = $region46
        $region43: #{custom-call.8} parent=38 // loop_body
          %267 = vst [vmem:[%s261] sm:$0xff] %v262
          %v268 = vld [vmem:[%s260 + $0x8] sm:$0xff]
          %269 = vst [vmem:[%s261 + $0x8] sm:$0xff] %v268
          %v270 = vld [vmem:[%s260 + $0x10] sm:$0xff]
          %271 = vst [vmem:[%s261 + $0x10] sm:$0xff] %v270
          %v272 = vld [vmem:[%s260 + $0x18] sm:$0xff]
          %273 = vst [vmem:[%s261 + $0x18] sm:$0xff] %v272
          %v274 = vld [vmem:[%s260 + $0x20] sm:$0xff]
          %275 = vst [vmem:[%s261 + $0x20] sm:$0xff] %v274
          %v276 = vld [vmem:[%s260 + $0x28] sm:$0xff]
          %277 = vst [vmem:[%s261 + $0x28] sm:$0xff] %v276
          %v278 = vld [vmem:[%s260 + $0x30] sm:$0xff]
          %279 = vst [vmem:[%s261 + $0x30] sm:$0xff] %v278
          %v280 = vld [vmem:[%s260 + $0x38] sm:$0xff]
          %281 = vst [vmem:[%s261 + $0x38] sm:$0xff] %v280
        $region44: #{custom-call.8} parent=38 // loop_footer
          %s282 = scalar_lea.vmem %s260, 64
          %s283 = scalar_lea.vmem %s261, 64
          %v284 = vld [vmem:[%s260 + $0x40] sm:$0xff]
        $region45: #{custom-call.8} parent=38 // loop_footer_branch
          %285 = sbr.rel target = $region41
        $region46: #{custom-call.8} parent=38 // loop_exit
          _
        // While loop
        $region47: #{custom-call.8} parent=38 // loop_pre_header
          _
        $region48: #{custom-call.8} parent=38 // loop_header
          %s286 = sphi %s260, %s294
          %s287 = sphi %s261, %s295
          %v288 = vphi %v262, %v288
          %p289 = scmp.gt.s32.totalorder %s286, %s258
        $region49: #{custom-call.8} parent=38 // loop_header_branch
          %291 = sbr.rel (%p289) target = $region53
        $region50: #{custom-call.8} parent=38 // loop_body
          %v292 = vld [vmem:[%s286] sm:$0xff]
          %293 = vst [vmem:[%s287] sm:$0xff] %v292
        $region51: #{custom-call.8} parent=38 // loop_footer
          %s294 = scalar_lea.vmem %s286, 8
          %s295 = scalar_lea.vmem %s287, 8
        $region52: #{custom-call.8} parent=38 // loop_footer_branch
          %296 = sbr.rel target = $region48
        $region53: #{custom-call.8} parent=38 // loop_exit
          _
      $region39: #{custom-call.8} parent=34 // pred_fallthru
        _
      %s298 = ssub.s32 1, 1
      %s299 = smul.u32 1, 8
      %s300 = scalar_lea.vmem %s1, %s299
      %s301 = smul.u32 1, 8
      %s302 = scalar_lea.vmem [#allocation1], %s301
      %v303 = vld [vmem:[%s302] sm:%s298]
      %304 = vst [vmem:[%s300] sm:%s298] %v303
    $region35: #{custom-call.8} parent=1 // pred_fallthru
      _
    // Predicated region
    $region54: #{custom-call.8} parent=1 // pred_check
      _
    $region55: #{custom-call.8} parent=1 // pred_check_branch
      %306 = sbr.rel (0) target = $region57
    $region56: #{custom-call.8} parent=1 // pred_region
      %308 = vsyncadd [#allocation4], 0
      %s310 = sshll.u32 [#allocation3], 4
      %s311 = int_to_ptr.vmem [resolvable:$true] %s310
      %s312 = sshll.u32 %s2, 4
      %s313 = int_to_ptr.hbm [resolvable:$true] %s312
      %315 = dma.vmem_to_hbm [thread:$0]  %s311, 16, %s313, [#allocation4]
    $region57: #{custom-call.8} parent=1 // pred_fallthru
      _
    // Predicated region
    $region58: #{custom-call.8} parent=1 // pred_check
      _
    $region59: #{custom-call.8} parent=1 // pred_check_branch
      %317 = sbr.rel (0) target = $region61
    $region60: #{custom-call.8} parent=1 // pred_region
      // Predicated region
      $region62: #{custom-call.8} parent=60 // pred_check
        _
      $region63: #{custom-call.8} parent=60 // pred_check_branch
        %319 = sbr.rel (0) target = $region65
      $region64: #{custom-call.8} parent=60 // pred_region
        %p321 = scmp.gt.s32.totalorder 0, 0
        // Predicated region
        $region66: #{custom-call.8} parent=64 // pred_check
          %p322 = pneg %p321
        $region67: #{custom-call.8} parent=64 // pred_check_branch
          %324 = sbr.rel (%p322) target = $region69
        $region68: #{custom-call.8} parent=64 // pred_region
          %s325 = ssub.s32 0, 1
          %s326 = smul.u32 %s325, 8
          %s327 = scalar_lea.vmem [#allocation6], %s326
          %v328 = vld [vmem:[#allocation6] sm:$0xff]
          // While loop
          $region70: #{custom-call.8} parent=68 // loop_pre_header
            _
          $region71: #{custom-call.8} parent=68 // loop_header
            %s329 = sphi [#allocation6], %s351
            %s330 = sphi %s3, %s352
            %v331 = vphi %v328, %v353
            %s332 = ssub.s32 %s327, 64
            %p333 = scmp.gt.s32.totalorder %s329, %s332
          $region72: #{custom-call.8} parent=68 // loop_header_branch
            %335 = sbr.rel (%p333) target = $region76
          $region73: #{custom-call.8} parent=68 // loop_body
            %336 = vst [vmem:[%s330] sm:$0xff] %v331
            %v337 = vld [vmem:[%s329 + $0x8] sm:$0xff]
            %338 = vst [vmem:[%s330 + $0x8] sm:$0xff] %v337
            %v339 = vld [vmem:[%s329 + $0x10] sm:$0xff]
            %340 = vst [vmem:[%s330 + $0x10] sm:$0xff] %v339
            %v341 = vld [vmem:[%s329 + $0x18] sm:$0xff]
            %342 = vst [vmem:[%s330 + $0x18] sm:$0xff] %v341
            %v343 = vld [vmem:[%s329 + $0x20] sm:$0xff]
            %344 = vst [vmem:[%s330 + $0x20] sm:$0xff] %v343
            %v345 = vld [vmem:[%s329 + $0x28] sm:$0xff]
            %346 = vst [vmem:[%s330 + $0x28] sm:$0xff] %v345
            %v347 = vld [vmem:[%s329 + $0x30] sm:$0xff]
            %348 = vst [vmem:[%s330 + $0x30] sm:$0xff] %v347
            %v349 = vld [vmem:[%s329 + $0x38] sm:$0xff]
            %350 = vst [vmem:[%s330 + $0x38] sm:$0xff] %v349
          $region74: #{custom-call.8} parent=68 // loop_footer
            %s351 = scalar_lea.vmem %s329, 64
            %s352 = scalar_lea.vmem %s330, 64
            %v353 = vld [vmem:[%s329 + $0x40] sm:$0xff]
          $region75: #{custom-call.8} parent=68 // loop_footer_branch
            %354 = sbr.rel target = $region71
          $region76: #{custom-call.8} parent=68 // loop_exit
            _
          // While loop
          $region77: #{custom-call.8} parent=68 // loop_pre_header
            _
          $region78: #{custom-call.8} parent=68 // loop_header
            %s355 = sphi %s329, %s363
            %s356 = sphi %s330, %s364
            %v357 = vphi %v331, %v357
            %p358 = scmp.gt.s32.totalorder %s355, %s327
          $region79: #{custom-call.8} parent=68 // loop_header_branch
            %360 = sbr.rel (%p358) target = $region83
          $region80: #{custom-call.8} parent=68 // loop_body
            %v361 = vld [vmem:[%s355] sm:$0xff]
            %362 = vst [vmem:[%s356] sm:$0xff] %v361
          $region81: #{custom-call.8} parent=68 // loop_footer
            %s363 = scalar_lea.vmem %s355, 8
            %s364 = scalar_lea.vmem %s356, 8
          $region82: #{custom-call.8} parent=68 // loop_footer_branch
            %365 = sbr.rel target = $region78
          $region83: #{custom-call.8} parent=68 // loop_exit
            _
        $region69: #{custom-call.8} parent=64 // pred_fallthru
          _
        %s367 = ssub.s32 2, 1
        %s368 = smul.u32 0, 8
        %s369 = scalar_lea.vmem %s3, %s368
        %s370 = smul.u32 0, 8
        %s371 = scalar_lea.vmem [#allocation6], %s370
        %v372 = vld [vmem:[%s371] sm:%s367]
        %373 = vst [vmem:[%s369] sm:%s367] %v372
      $region65: #{custom-call.8} parent=60 // pred_fallthru
        _
    $region61: #{custom-call.8} parent=1 // pred_fallthru
      _
    // Predicated region
    $region84: #{custom-call.8} parent=1 // pred_check
      _
    $region85: #{custom-call.8} parent=1 // pred_check_branch
      %375 = sbr.rel (0) target = $region87
    $region86: #{custom-call.8} parent=1 // pred_region
      %377 = dma.done [#allocation4], 16
    $region87: #{custom-call.8} parent=1 // pred_fallthru
      _
    // Predicated region
    $region88: #{custom-call.8} parent=1 // pred_check
      _
    $region89: #{custom-call.8} parent=1 // pred_check_branch
      %379 = sbr.rel (0) target = $region91
    $region90: #{custom-call.8} parent=1 // pred_region
      _
    $region91: #{custom-call.8} parent=1 // pred_fallthru
      _
    %380 = vsyncpa [#allocation4], 1

// kernel: custom-call.10
$region0: #{custom-call.10}
  %s0 = inlined_call_operand.vmem [shape: f32[1,6,6], index: 0, kind: input, shape index: {}]
  %s1 = inlined_call_operand.vmem [shape: f32[1,6,6], index: 1, kind: output, shape index: {}]
  $region1: #{custom-call.10} parent=0
    #allocation0 [shape = 'u8[4096]{0}', space=vmem, size = 0x1000, scoped, tag = 'operand span for operand 0']
    #allocation1 [shape = 'u8[4096]{0}', space=vmem, size = 0x1000, scoped, tag = 'operand span for operand 1']
    #allocation2 [shape = 'f32[6,6]{1,0}', space=vmem, size = 0x1000, scoped, tag = 'rescaled input a']
    // Predicated region
    $region2: #{custom-call.10} parent=1 // pred_check
      _
    $region3: #{custom-call.10} parent=1 // pred_check_branch
      %3 = sbr.rel (0) target = $region5
    $region4: #{custom-call.10} parent=1 // pred_region
      // Predicated region
      $region6: #{custom-call.10} parent=4 // pred_check
        _
      $region7: #{custom-call.10} parent=4 // pred_check_branch
        %5 = sbr.rel (0) target = $region9
      $region8: #{custom-call.10} parent=4 // pred_region
        // Predicated region
        $region21: #{custom-call.10} parent=8 // pred_check
          _
        $region22: #{custom-call.10} parent=8 // pred_check_branch
          %21 = sbr.rel (0) target = $region24
        $region23: #{custom-call.10} parent=8 // pred_region
          loop: start=0, step=1, limit=1
          $region25: #{custom-call.10} parent=23 // loop_pre_header
            _
          $region26: #{custom-call.10} parent=23 // loop_header
            %s23 = sphi 0, %s27
            %p24 = scmp.ge.s32.totalorder %s23, 1
            %s28 = sphi %s0, %s0
            %s29 = sphi [#allocation0], [#allocation0]
          $region27: #{custom-call.10} parent=23 // loop_header_branch
            %26 = sbr.rel (%p24) target = $region31
          $region28: #{custom-call.10} parent=23 // loop_body
            %v30 = vld [vmem:[%s28] sm:$0xff]
            %31 = vst [vmem:[%s29] sm:$0xff] %v30
          $region29: #{custom-call.10} parent=23 // loop_footer
            %s27 = sadd.s32 1, %s23
          $region30: #{custom-call.10} parent=23 // loop_footer_branch
            %22 = sbr.rel target = $region26
          $region31: #{custom-call.10} parent=23 // loop_exit
            _
        $region24: #{custom-call.10} parent=8 // pred_fallthru
          _
        // Predicated region
        $region32: #{custom-call.10} parent=8 // pred_check
          _
        $region33: #{custom-call.10} parent=8 // pred_check_branch
          %33 = sbr.rel target = $region35
        $region34: #{custom-call.10} parent=8 // pred_region
          _
        $region35: #{custom-call.10} parent=8 // pred_fallthru
          _
      $region9: #{custom-call.10} parent=4 // pred_fallthru
        _
      // Predicated region
      $region10: #{custom-call.10} parent=4 // pred_check
        _
      $region11: #{custom-call.10} parent=4 // pred_check_branch
        %7 = sbr.rel target = $region13
      $region12: #{custom-call.10} parent=4 // pred_region
        %s9 = ssub.s32 256, 1
        loop: start=0, step=1, limit=1
        $region14: #{custom-call.10} parent=12 // loop_pre_header
          _
        $region15: #{custom-call.10} parent=12 // loop_header
          %s11 = sphi 0, %s15
          %p12 = scmp.ge.s32.totalorder %s11, 1
          %s16 = sphi %s0, %s0
          %s17 = sphi [#allocation0], [#allocation0]
        $region16: #{custom-call.10} parent=12 // loop_header_branch
          %14 = sbr.rel (%p12) target = $region20
        $region17: #{custom-call.10} parent=12 // loop_body
          %v18 = vld [vmem:[%s16] sm:%s9]
          %19 = vst [vmem:[%s17] sm:%s9] %v18
        $region18: #{custom-call.10} parent=12 // loop_footer
          %s15 = sadd.s32 1, %s11
        $region19: #{custom-call.10} parent=12 // loop_footer_branch
          %10 = sbr.rel target = $region15
        $region20: #{custom-call.10} parent=12 // loop_exit
          _
      $region13: #{custom-call.10} parent=4 // pred_fallthru
        _
    $region5: #{custom-call.10} parent=1 // pred_fallthru
      _
    %34 = vnop
    %v35 = vlaneseq
    %v36 = vand.u32 %v35, 127
    %vm37 = vcmp.lt.s32.totalorder %v36, 6
    %v38 = vlaneseq
    %v39 = vshrl.u32 %v38, 7
    %vm41 = vcmp.eq.s32.totalorder %v39, %v36
    %v42 = vld [vmem:[#allocation0] sm:$0xff]
    %v43 = vsel %vm41, %v42, 0.0
    %44 = vadd.xlane.f32.xlu0 %v43
    %v45 = vpop.xlane.xlu0 %44
    %vm46 = vcmp.ge.s32.totalorder %v39, %v36
    %vm47 = vmand %vm46, %vm37
    %v48 = vsel %vm47, %v42, 0.0
    %v49 = vrcp.pop %v45
    %v50 = vmul.f32 %v45, %v49
    %v51 = vsub.f32 1.0, %v50
    %v52 = vmul.f32 %v49, %v51
    %v53 = vadd.f32 %v49, %v52
    %vm54 = vweird.f32 %v45
    %vm55 = vweird.f32 %v49
    %vm56 = vmor %vm54, %vm55
    %v57 = vsel %vm56, %v49, %v53
    %v58 = vand.u32 2147483647, %v45
    %vm59 = vcmp.eq.f32.partialorder %v58, 8.507059e+37
    %v60 = vand.u32 %v45, 2147483648
    %v61 = vor.u32 1.1754944e-38, %v60
    %v62 = vsel %vm59, %v61, %v57
    %v63 = vmul.f32 %v48, %v62
    %64 = vst [vmem:[#allocation2] sm:$0xff] %v63
    %v65 = vlaneseq
    %v66 = vand.u32 %v65, 127
    %v67 = vlaneseq
    %v68 = vshrl.u32 %v67, 7
    %vm70 = vcmp.eq.s32.totalorder %v66, %v68
    %v71 = vlaneseq
    %v72 = vand.u32 %v71, 127
    %vm73 = vcmp.eq.s32.totalorder %v72, 0
    %v74 = vsel %vm73, 1.0, -1.0
    %v75 = vsel %vm70, %v74, 0.0
    %s76 = scalar_lea.vmem [#allocation2], 1
    %v77 = vld [vmem:[%s76] ss:$0 sm:$0xff]
    %v78 = vxor.u32 %v77, 2147483648
    %v79 = vlaneseq
    %v80 = vand.u32 %v79, 127
    %vm81 = vcmp.eq.s32.totalorder %v80, 1
    %v82 = vmul.f32 %v78, %v75
    %83 = vadd.xlane.f32.xlu0 %v82
    %v84 = vpop.xlane.xlu0 %83
    %v85 = vsel %vm81, %v84, %v75
    %s86 = scalar_lea.vmem [#allocation2], 2
    %v87 = vld [vmem:[%s86] ss:$0 sm:$0xff]
    %v88 = vxor.u32 %v87, 2147483648
    %v89 = vlaneseq
    %v90 = vand.u32 %v89, 127
    %vm91 = vcmp.eq.s32.totalorder %v90, 2
    %v92 = vmul.f32 %v88, %v85
    %93 = vadd.xlane.f32.xlu0 %v92
    %v94 = vpop.xlane.xlu0 %93
    %v95 = vsel %vm91, %v94, %v85
    %s96 = scalar_lea.vmem [#allocation2], 3
    %v97 = vld [vmem:[%s96] ss:$0 sm:$0xff]
    %v98 = vxor.u32 %v97, 2147483648
    %v99 = vlaneseq
    %v100 = vand.u32 %v99, 127
    %vm101 = vcmp.eq.s32.totalorder %v100, 3
    %v102 = vmul.f32 %v98, %v95
    %103 = vadd.xlane.f32.xlu0 %v102
    %v104 = vpop.xlane.xlu0 %103
    %v105 = vsel %vm101, %v104, %v95
    %s106 = scalar_lea.vmem [#allocation2], 4
    %v107 = vld [vmem:[%s106] ss:$0 sm:$0xff]
    %v108 = vxor.u32 %v107, 2147483648
    %v109 = vlaneseq
    %v110 = vand.u32 %v109, 127
    %vm111 = vcmp.eq.s32.totalorder %v110, 4
    %v112 = vmul.f32 %v108, %v105
    %113 = vadd.xlane.f32.xlu0 %v112
    %v114 = vpop.xlane.xlu0 %113
    %v115 = vsel %vm111, %v114, %v105
    %s116 = scalar_lea.vmem [#allocation2], 5
    %v117 = vld [vmem:[%s116] ss:$0 sm:$0xff]
    %v118 = vxor.u32 %v117, 2147483648
    %v119 = vlaneseq
    %v120 = vand.u32 %v119, 127
    %vm121 = vcmp.eq.s32.totalorder %v120, 5
    %v122 = vmul.f32 %v118, %v115
    %123 = vadd.xlane.f32.xlu0 %v122
    %v124 = vpop.xlane.xlu0 %123
    %v125 = vsel %vm121, %v124, %v115
    %v126 = vrcp.pop %v45
    %v127 = vmul.f32 %v45, %v126
    %v128 = vsub.f32 1.0, %v127
    %v129 = vmul.f32 %v126, %v128
    %v130 = vadd.f32 %v126, %v129
    %vm131 = vweird.f32 %v45
    %vm132 = vweird.f32 %v126
    %vm133 = vmor %vm131, %vm132
    %v134 = vsel %vm133, %v126, %v130
    %v135 = vand.u32 2147483647, %v45
    %vm136 = vcmp.eq.f32.partialorder %v135, 8.507059e+37
    %v137 = vand.u32 %v45, 2147483648
    %v138 = vor.u32 1.1754944e-38, %v137
    %v139 = vsel %vm136, %v138, %v134
    %v140 = vmul.f32 %v125, %v139
    %vm141 = vweird.f32 %v45
    %v142 = vsel %vm141, %v125, %v140
    %143 = vst [vmem:[#allocation1] sm:$0xff] %v142
    // Predicated region
    $region36: #{custom-call.10} parent=1 // pred_check
      _
    $region37: #{custom-call.10} parent=1 // pred_check_branch
      %145 = sbr.rel (0) target = $region39
    $region38: #{custom-call.10} parent=1 // pred_region
      // Predicated region
      $region40: #{custom-call.10} parent=38 // pred_check
        _
      $region41: #{custom-call.10} parent=38 // pred_check_branch
        %147 = sbr.rel (0) target = $region43
      $region42: #{custom-call.10} parent=38 // pred_region
        // Predicated region
        $region55: #{custom-call.10} parent=42 // pred_check
          _
        $region56: #{custom-call.10} parent=42 // pred_check_branch
          %163 = sbr.rel (0) target = $region58
        $region57: #{custom-call.10} parent=42 // pred_region
          loop: start=0, step=1, limit=1
          $region59: #{custom-call.10} parent=57 // loop_pre_header
            _
          $region60: #{custom-call.10} parent=57 // loop_header
            %s165 = sphi 0, %s169
            %p166 = scmp.ge.s32.totalorder %s165, 1
            %s170 = sphi [#allocation1], [#allocation1]
            %s171 = sphi %s1, %s1
          $region61: #{custom-call.10} parent=57 // loop_header_branch
            %168 = sbr.rel (%p166) target = $region65
          $region62: #{custom-call.10} parent=57 // loop_body
            %v172 = vld [vmem:[%s170] sm:$0xff]
            %173 = vst [vmem:[%s171] sm:$0xff] %v172
          $region63: #{custom-call.10} parent=57 // loop_footer
            %s169 = sadd.s32 1, %s165
          $region64: #{custom-call.10} parent=57 // loop_footer_branch
            %164 = sbr.rel target = $region60
          $region65: #{custom-call.10} parent=57 // loop_exit
            _
        $region58: #{custom-call.10} parent=42 // pred_fallthru
          _
        // Predicated region
        $region66: #{custom-call.10} parent=42 // pred_check
          _
        $region67: #{custom-call.10} parent=42 // pred_check_branch
          %175 = sbr.rel target = $region69
        $region68: #{custom-call.10} parent=42 // pred_region
          _
        $region69: #{custom-call.10} parent=42 // pred_fallthru
          _
      $region43: #{custom-call.10} parent=38 // pred_fallthru
        _
      // Predicated region
      $region44: #{custom-call.10} parent=38 // pred_check
        _
      $region45: #{custom-call.10} parent=38 // pred_check_branch
        %149 = sbr.rel target = $region47
      $region46: #{custom-call.10} parent=38 // pred_region
        %s151 = ssub.s32 256, 1
        loop: start=0, step=1, limit=1
        $region48: #{custom-call.10} parent=46 // loop_pre_header
          _
        $region49: #{custom-call.10} parent=46 // loop_header
          %s153 = sphi 0, %s157
          %p154 = scmp.ge.s32.totalorder %s153, 1
          %s158 = sphi [#allocation1], [#allocation1]
          %s159 = sphi %s1, %s1
        $region50: #{custom-call.10} parent=46 // loop_header_branch
          %156 = sbr.rel (%p154) target = $region54
        $region51: #{custom-call.10} parent=46 // loop_body
          %v160 = vld [vmem:[%s158] sm:%s151]
          %161 = vst [vmem:[%s159] sm:%s151] %v160
        $region52: #{custom-call.10} parent=46 // loop_footer
          %s157 = sadd.s32 1, %s153
        $region53: #{custom-call.10} parent=46 // loop_footer_branch
          %152 = sbr.rel target = $region49
        $region54: #{custom-call.10} parent=46 // loop_exit
          _
      $region47: #{custom-call.10} parent=38 // pred_fallthru
        _
    $region39: #{custom-call.10} parent=1 // pred_fallthru
      _
    %176 = vnop

// kernel: custom-call.9
$region0: #{custom-call.9}
  %s0 = inlined_call_operand.vmem [shape: f32[1,6,6], index: 0, kind: input, shape index: {}]
  %s1 = inlined_call_operand.vmem [shape: f32[1,6,6], index: 1, kind: output, shape index: {}]
  $region1: #{custom-call.9} parent=0
    #allocation0 [shape = 'u8[4096]{0}', space=vmem, size = 0x1000, scoped, tag = 'operand span for operand 0']
    #allocation1 [shape = 'u8[4096]{0}', space=vmem, size = 0x1000, scoped, tag = 'operand span for operand 1']
    #allocation2 [shape = 'f32[6,6]{1,0}', space=vmem, size = 0x1000, scoped, tag = 'rescaled input a']
    // Predicated region
    $region2: #{custom-call.9} parent=1 // pred_check
      _
    $region3: #{custom-call.9} parent=1 // pred_check_branch
      %3 = sbr.rel (0) target = $region5
    $region4: #{custom-call.9} parent=1 // pred_region
      // Predicated region
      $region6: #{custom-call.9} parent=4 // pred_check
        _
      $region7: #{custom-call.9} parent=4 // pred_check_branch
        %5 = sbr.rel (0) target = $region9
      $region8: #{custom-call.9} parent=4 // pred_region
        // Predicated region
        $region21: #{custom-call.9} parent=8 // pred_check
          _
        $region22: #{custom-call.9} parent=8 // pred_check_branch
          %21 = sbr.rel (0) target = $region24
        $region23: #{custom-call.9} parent=8 // pred_region
          loop: start=0, step=1, limit=1
          $region25: #{custom-call.9} parent=23 // loop_pre_header
            _
          $region26: #{custom-call.9} parent=23 // loop_header
            %s23 = sphi 0, %s27
            %p24 = scmp.ge.s32.totalorder %s23, 1
            %s28 = sphi %s0, %s0
            %s29 = sphi [#allocation0], [#allocation0]
          $region27: #{custom-call.9} parent=23 // loop_header_branch
            %26 = sbr.rel (%p24) target = $region31
          $region28: #{custom-call.9} parent=23 // loop_body
            %v30 = vld [vmem:[%s28] sm:$0xff]
            %31 = vst [vmem:[%s29] sm:$0xff] %v30
          $region29: #{custom-call.9} parent=23 // loop_footer
            %s27 = sadd.s32 1, %s23
          $region30: #{custom-call.9} parent=23 // loop_footer_branch
            %22 = sbr.rel target = $region26
          $region31: #{custom-call.9} parent=23 // loop_exit
            _
        $region24: #{custom-call.9} parent=8 // pred_fallthru
          _
        // Predicated region
        $region32: #{custom-call.9} parent=8 // pred_check
          _
        $region33: #{custom-call.9} parent=8 // pred_check_branch
          %33 = sbr.rel target = $region35
        $region34: #{custom-call.9} parent=8 // pred_region
          _
        $region35: #{custom-call.9} parent=8 // pred_fallthru
          _
      $region9: #{custom-call.9} parent=4 // pred_fallthru
        _
      // Predicated region
      $region10: #{custom-call.9} parent=4 // pred_check
        _
      $region11: #{custom-call.9} parent=4 // pred_check_branch
        %7 = sbr.rel target = $region13
      $region12: #{custom-call.9} parent=4 // pred_region
        %s9 = ssub.s32 256, 1
        loop: start=0, step=1, limit=1
        $region14: #{custom-call.9} parent=12 // loop_pre_header
          _
        $region15: #{custom-call.9} parent=12 // loop_header
          %s11 = sphi 0, %s15
          %p12 = scmp.ge.s32.totalorder %s11, 1
          %s16 = sphi %s0, %s0
          %s17 = sphi [#allocation0], [#allocation0]
        $region16: #{custom-call.9} parent=12 // loop_header_branch
          %14 = sbr.rel (%p12) target = $region20
        $region17: #{custom-call.9} parent=12 // loop_body
          %v18 = vld [vmem:[%s16] sm:%s9]
          %19 = vst [vmem:[%s17] sm:%s9] %v18
        $region18: #{custom-call.9} parent=12 // loop_footer
          %s15 = sadd.s32 1, %s11
        $region19: #{custom-call.9} parent=12 // loop_footer_branch
          %10 = sbr.rel target = $region15
        $region20: #{custom-call.9} parent=12 // loop_exit
          _
      $region13: #{custom-call.9} parent=4 // pred_fallthru
        _
    $region5: #{custom-call.9} parent=1 // pred_fallthru
      _
    %34 = vnop
    %v35 = vlaneseq
    %v36 = vand.u32 %v35, 127
    %vm37 = vcmp.lt.s32.totalorder %v36, 6
    %v38 = vlaneseq
    %v39 = vshrl.u32 %v38, 7
    %vm41 = vcmp.eq.s32.totalorder %v39, %v36
    %v42 = vld [vmem:[#allocation0] sm:$0xff]
    %v43 = vsel %vm41, %v42, 0.0
    %44 = vadd.xlane.f32.xlu0 %v43
    %v45 = vpop.xlane.xlu0 %44
    %vm46 = vcmp.le.s32.totalorder %v39, %v36
    %vm47 = vmand %vm46, %vm37
    %v48 = vsel %vm47, %v42, 0.0
    %v49 = vrcp.pop %v45
    %v50 = vmul.f32 %v45, %v49
    %v51 = vsub.f32 1.0, %v50
    %v52 = vmul.f32 %v49, %v51
    %v53 = vadd.f32 %v49, %v52
    %vm54 = vweird.f32 %v45
    %vm55 = vweird.f32 %v49
    %vm56 = vmor %vm54, %vm55
    %v57 = vsel %vm56, %v49, %v53
    %v58 = vand.u32 2147483647, %v45
    %vm59 = vcmp.eq.f32.partialorder %v58, 8.507059e+37
    %v60 = vand.u32 %v45, 2147483648
    %v61 = vor.u32 1.1754944e-38, %v60
    %v62 = vsel %vm59, %v61, %v57
    %v63 = vmul.f32 %v48, %v62
    %64 = vst [vmem:[#allocation2] sm:$0xff] %v63
    %v65 = vlaneseq
    %v66 = vand.u32 %v65, 127
    %v67 = vlaneseq
    %v68 = vshrl.u32 %v67, 7
    %vm70 = vcmp.eq.s32.totalorder %v66, %v68
    %v71 = vlaneseq
    %v72 = vand.u32 %v71, 127
    %vm73 = vcmp.eq.s32.totalorder %v72, 5
    %v74 = vsel %vm73, 1.0, -1.0
    %v75 = vsel %vm70, %v74, 0.0
    %s76 = scalar_lea.vmem [#allocation2], 4
    %v77 = vld [vmem:[%s76] ss:$0 sm:$0xff]
    %v78 = vxor.u32 %v77, 2147483648
    %v79 = vlaneseq
    %v80 = vand.u32 %v79, 127
    %vm81 = vcmp.eq.s32.totalorder %v80, 4
    %v82 = vmul.f32 %v78, %v75
    %83 = vadd.xlane.f32.xlu0 %v82
    %v84 = vpop.xlane.xlu0 %83
    %v85 = vsel %vm81, %v84, %v75
    %s86 = scalar_lea.vmem [#allocation2], 3
    %v87 = vld [vmem:[%s86] ss:$0 sm:$0xff]
    %v88 = vxor.u32 %v87, 2147483648
    %v89 = vlaneseq
    %v90 = vand.u32 %v89, 127
    %vm91 = vcmp.eq.s32.totalorder %v90, 3
    %v92 = vmul.f32 %v88, %v85
    %93 = vadd.xlane.f32.xlu0 %v92
    %v94 = vpop.xlane.xlu0 %93
    %v95 = vsel %vm91, %v94, %v85
    %s96 = scalar_lea.vmem [#allocation2], 2
    %v97 = vld [vmem:[%s96] ss:$0 sm:$0xff]
    %v98 = vxor.u32 %v97, 2147483648
    %v99 = vlaneseq
    %v100 = vand.u32 %v99, 127
    %vm101 = vcmp.eq.s32.totalorder %v100, 2
    %v102 = vmul.f32 %v98, %v95
    %103 = vadd.xlane.f32.xlu0 %v102
    %v104 = vpop.xlane.xlu0 %103
    %v105 = vsel %vm101, %v104, %v95
    %s106 = scalar_lea.vmem [#allocation2], 1
    %v107 = vld [vmem:[%s106] ss:$0 sm:$0xff]
    %v108 = vxor.u32 %v107, 2147483648
    %v109 = vlaneseq
    %v110 = vand.u32 %v109, 127
    %vm111 = vcmp.eq.s32.totalorder %v110, 1
    %v112 = vmul.f32 %v108, %v105
    %113 = vadd.xlane.f32.xlu0 %v112
    %v114 = vpop.xlane.xlu0 %113
    %v115 = vsel %vm111, %v114, %v105
    %v116 = vld [vmem:[#allocation2] ss:$0 sm:$0xff]
    %v117 = vxor.u32 %v116, 2147483648
    %v118 = vlaneseq
    %v119 = vand.u32 %v118, 127
    %vm120 = vcmp.eq.s32.totalorder %v119, 0
    %v121 = vmul.f32 %v117, %v115
    %122 = vadd.xlane.f32.xlu0 %v121
    %v123 = vpop.xlane.xlu0 %122
    %v124 = vsel %vm120, %v123, %v115
    %v125 = vrcp.pop %v45
    %v126 = vmul.f32 %v45, %v125
    %v127 = vsub.f32 1.0, %v126
    %v128 = vmul.f32 %v125, %v127
    %v129 = vadd.f32 %v125, %v128
    %vm130 = vweird.f32 %v45
    %vm131 = vweird.f32 %v125
    %vm132 = vmor %vm130, %vm131
    %v133 = vsel %vm132, %v125, %v129
    %v134 = vand.u32 2147483647, %v45
    %vm135 = vcmp.eq.f32.partialorder %v134, 8.507059e+37
    %v136 = vand.u32 %v45, 2147483648
    %v137 = vor.u32 1.1754944e-38, %v136
    %v138 = vsel %vm135, %v137, %v133
    %v139 = vmul.f32 %v124, %v138
    %vm140 = vweird.f32 %v45
    %v141 = vsel %vm140, %v124, %v139
    %142 = vst [vmem:[#allocation1] sm:$0xff] %v141
    // Predicated region
    $region36: #{custom-call.9} parent=1 // pred_check
      _
    $region37: #{custom-call.9} parent=1 // pred_check_branch
      %144 = sbr.rel (0) target = $region39
    $region38: #{custom-call.9} parent=1 // pred_region
      // Predicated region
      $region40: #{custom-call.9} parent=38 // pred_check
        _
      $region41: #{custom-call.9} parent=38 // pred_check_branch
        %146 = sbr.rel (0) target = $region43
      $region42: #{custom-call.9} parent=38 // pred_region
        // Predicated region
        $region55: #{custom-call.9} parent=42 // pred_check
          _
        $region56: #{custom-call.9} parent=42 // pred_check_branch
          %162 = sbr.rel (0) target = $region58
        $region57: #{custom-call.9} parent=42 // pred_region
          loop: start=0, step=1, limit=1
          $region59: #{custom-call.9} parent=57 // loop_pre_header
            _
          $region60: #{custom-call.9} parent=57 // loop_header
            %s164 = sphi 0, %s168
            %p165 = scmp.ge.s32.totalorder %s164, 1
            %s169 = sphi [#allocation1], [#allocation1]
            %s170 = sphi %s1, %s1
          $region61: #{custom-call.9} parent=57 // loop_header_branch
            %167 = sbr.rel (%p165) target = $region65
          $region62: #{custom-call.9} parent=57 // loop_body
            %v171 = vld [vmem:[%s169] sm:$0xff]
            %172 = vst [vmem:[%s170] sm:$0xff] %v171
          $region63: #{custom-call.9} parent=57 // loop_footer
            %s168 = sadd.s32 1, %s164
          $region64: #{custom-call.9} parent=57 // loop_footer_branch
            %163 = sbr.rel target = $region60
          $region65: #{custom-call.9} parent=57 // loop_exit
            _
        $region58: #{custom-call.9} parent=42 // pred_fallthru
          _
        // Predicated region
        $region66: #{custom-call.9} parent=42 // pred_check
          _
        $region67: #{custom-call.9} parent=42 // pred_check_branch
          %174 = sbr.rel target = $region69
        $region68: #{custom-call.9} parent=42 // pred_region
          _
        $region69: #{custom-call.9} parent=42 // pred_fallthru
          _
      $region43: #{custom-call.9} parent=38 // pred_fallthru
        _
      // Predicated region
      $region44: #{custom-call.9} parent=38 // pred_check
        _
      $region45: #{custom-call.9} parent=38 // pred_check_branch
        %148 = sbr.rel target = $region47
      $region46: #{custom-call.9} parent=38 // pred_region
        %s150 = ssub.s32 256, 1
        loop: start=0, step=1, limit=1
        $region48: #{custom-call.9} parent=46 // loop_pre_header
          _
        $region49: #{custom-call.9} parent=46 // loop_header
          %s152 = sphi 0, %s156
          %p153 = scmp.ge.s32.totalorder %s152, 1
          %s157 = sphi [#allocation1], [#allocation1]
          %s158 = sphi %s1, %s1
        $region50: #{custom-call.9} parent=46 // loop_header_branch
          %155 = sbr.rel (%p153) target = $region54
        $region51: #{custom-call.9} parent=46 // loop_body
          %v159 = vld [vmem:[%s157] sm:%s150]
          %160 = vst [vmem:[%s158] sm:%s150] %v159
        $region52: #{custom-call.9} parent=46 // loop_footer
          %s156 = sadd.s32 1, %s152
        $region53: #{custom-call.9} parent=46 // loop_footer_branch
          %151 = sbr.rel target = $region49
        $region54: #{custom-call.9} parent=46 // loop_exit
          _
      $region47: #{custom-call.9} parent=38 // pred_fallthru
        _
    $region39: #{custom-call.9} parent=1 // pred_fallthru
      _
    %175 = vnop

// kernel: _step_normal_eq.1
$region0: #{_step_normal_eq.1}
  #allocation0 [shape = 'u32[]', space=smem, size = 0x4, offset = 0x4, fixed_abs, tag = 'smem constant byte address 0x4 - core index']
  #allocation1 [shape = 'u32[72,128]{1,0:T(1,128)}', space=vmem, size = 0x9000, scoped, tag = 'internal scratch']
  %s0 = inlined_call_operand.vmem [shape: f32[1024,16], index: 0, kind: input, shape index: {}]
  %s1 = inlined_call_operand.vmem [shape: f32[1024,10], index: 1, kind: input, shape index: {}]
  %s2 = inlined_call_operand.vmem [shape: f32[16,256], index: 2, kind: input, shape index: {}]
  %s3 = inlined_call_operand.vmem [shape: f32[1,256], index: 3, kind: input, shape index: {}]
  %s4 = inlined_call_operand.vmem [shape: f32[1,256], index: 4, kind: output, shape index: {}]
  %s5 = sld [smem:[#allocation0]]
  $region87: #{_step_normal_eq.1} parent=0
    _
  %s7 = ssub.s32 1, %s5
  %s8 = scalar_select 0, %s7, %s5
  $region1: #{_step_normal_eq.1} parent=0
    #allocation2 [shape = 'u8[16384]{0}', space=vmem, size = 0x4000, scoped, tag = 'input window, operand 2']
    loop: start=0, step=1, limit=4
    $region2: #{_step_normal_eq.1} parent=1 // loop_pre_header
      _
    $region3: #{_step_normal_eq.1} parent=1 // loop_header
      %s10 = sphi 0, %s14
      %p11 = scmp.ge.s32.totalorder %s10, 4
      %s18 = sphi 0, %s18
      %s20 = sphi 0, %s18
      %s21 = sphi 0, %s20
      %s35 = sphi 0, %s21
      %s39 = sphi 0, %s39
      %s41 = sphi 0, %s39
      %s42 = sphi 0, %s41
      %s56 = sphi 0, %s42
      %s62 = sphi 0, %s64
      %s65 = sphi 0, %s62
      %s66 = sphi 0, %s65
      %s82 = sphi 0, %s66
      %s88 = sphi 0, %s90
      %s91 = sphi 0, %s88
      %s92 = sphi 0, %s91
      %s108 = sphi 0, %s92
      %s114 = sphi 0, %s116
      %s117 = sphi 0, %s114
      %s118 = sphi 0, %s117
      %s134 = sphi 0, %s118
    $region4: #{_step_normal_eq.1} parent=1 // loop_header_branch
      %13 = sbr.rel (%p11) target = $region8
    $region5: #{_step_normal_eq.1} parent=1 // loop_body
      %s15 = ssub.s32 %s10, 1
      %s16 = ssub.s32 %s10, 2
      %s17 = sadd.s32 %s10, 1
      %s19 = sadd.s32 %s18, 1
      %p22 = scmp.eq.s32.totalorder %s10, 1
      %p23 = scmp.ne.s32.totalorder %s18, %s20
      %p24 = scmp.eq.s32.totalorder %s10, 0
      %p25 = por %p23, %p24
      %p26 = scmp.ne.s32.totalorder %s18, %s20
      %p27 = scmp.eq.s32.totalorder %s15, 1
      %p28 = por %p26, %p27
      %p29 = scmp.ne.s32.totalorder %s20, %s21
      %p30 = scmp.eq.s32.totalorder %s15, 0
      %p31 = por %p29, %p30
      %p32 = scmp.ne.s32.totalorder %s20, %s21
      %p33 = scmp.eq.s32.totalorder %s16, 1
      %p34 = por %p32, %p33
      %p36 = scmp.ne.s32.totalorder %s21, %s35
      %p37 = scmp.eq.s32.totalorder %s16, 0
      %p38 = por %p36, %p37
      %s40 = sadd.s32 %s39, 1
      %p43 = scmp.eq.s32.totalorder %s10, 1
      %p44 = scmp.ne.s32.totalorder %s39, %s41
      %p45 = scmp.eq.s32.totalorder %s10, 0
      %p46 = por %p44, %p45
      %p47 = scmp.ne.s32.totalorder %s39, %s41
      %p48 = scmp.eq.s32.totalorder %s15, 1
      %p49 = por %p47, %p48
      %p50 = scmp.ne.s32.totalorder %s41, %s42
      %p51 = scmp.eq.s32.totalorder %s15, 0
      %p52 = por %p50, %p51
      %p53 = scmp.ne.s32.totalorder %s41, %s42
      %p54 = scmp.eq.s32.totalorder %s16, 1
      %p55 = por %p53, %p54
      %p57 = scmp.ne.s32.totalorder %s42, %s56
      %p58 = scmp.eq.s32.totalorder %s16, 0
      %p59 = por %p57, %p58
      %s60 = ssub.s32 %s10, %s17
      %p61 = scmp.eq.s32.totalorder %s60, 0
      %s63 = sadd.s32 %s62, 1
      %s64 = scalar_select %p61, %s62, %s63
      %p67 = pneg %p61
      %p68 = scmp.eq.s32.totalorder %s10, 1
      %p69 = por %p67, %p68
      %p70 = scmp.ne.s32.totalorder %s62, %s65
      %p71 = scmp.eq.s32.totalorder %s10, 0
      %p72 = por %p70, %p71
      %p73 = scmp.ne.s32.totalorder %s62, %s65
      %p74 = scmp.eq.s32.totalorder %s15, 1
      %p75 = por %p73, %p74
      %p76 = scmp.ne.s32.totalorder %s65, %s66
      %p77 = scmp.eq.s32.totalorder %s15, 0
      %p78 = por %p76, %p77
      %p79 = scmp.ne.s32.totalorder %s65, %s66
      %p80 = scmp.eq.s32.totalorder %s16, 1
      %p81 = por %p79, %p80
      %p83 = scmp.ne.s32.totalorder %s66, %s82
      %p84 = scmp.eq.s32.totalorder %s16, 0
      %p85 = por %p83, %p84
      %s86 = ssub.s32 %s10, %s17
      %p87 = scmp.eq.s32.totalorder %s86, 0
      %s89 = sadd.s32 %s88, 1
      %s90 = scalar_select %p87, %s88, %s89
      %p93 = pneg %p87
      %p94 = scmp.eq.s32.totalorder %s10, 1
      %p95 = por %p93, %p94
      %p96 = scmp.ne.s32.totalorder %s88, %s91
      %p97 = scmp.eq.s32.totalorder %s10, 0
      %p98 = por %p96, %p97
      %p99 = scmp.ne.s32.totalorder %s88, %s91
      %p100 = scmp.eq.s32.totalorder %s15, 1
      %p101 = por %p99, %p100
      %p102 = scmp.ne.s32.totalorder %s91, %s92
      %p103 = scmp.eq.s32.totalorder %s15, 0
      %p104 = por %p102, %p103
      %p105 = scmp.ne.s32.totalorder %s91, %s92
      %p106 = scmp.eq.s32.totalorder %s16, 1
      %p107 = por %p105, %p106
      %p109 = scmp.ne.s32.totalorder %s92, %s108
      %p110 = scmp.eq.s32.totalorder %s16, 0
      %p111 = por %p109, %p110
      %s112 = ssub.s32 %s10, %s17
      %p113 = scmp.eq.s32.totalorder %s112, 0
      %s115 = sadd.s32 %s114, 1
      %s116 = scalar_select %p113, %s114, %s115
      %p119 = pneg %p113
      %p120 = scmp.eq.s32.totalorder %s10, 1
      %p121 = por %p119, %p120
      %p122 = scmp.ne.s32.totalorder %s114, %s117
      %p123 = scmp.eq.s32.totalorder %s10, 0
      %p124 = por %p122, %p123
      %p125 = scmp.ne.s32.totalorder %s114, %s117
      %p126 = scmp.eq.s32.totalorder %s15, 1
      %p127 = por %p125, %p126
      %p128 = scmp.ne.s32.totalorder %s117, %s118
      %p129 = scmp.eq.s32.totalorder %s15, 0
      %p130 = por %p128, %p129
      %p131 = scmp.ne.s32.totalorder %s117, %s118
      %p132 = scmp.eq.s32.totalorder %s16, 1
      %p133 = por %p131, %p132
      %p135 = scmp.ne.s32.totalorder %s118, %s134
      %p136 = scmp.eq.s32.totalorder %s16, 0
      %p137 = por %p135, %p136
      %p138 = scmp.le.s32.totalorder 1, %s10
      %p139 = scmp.lt.s32.totalorder %s10, 3
      %p140 = pnand %p138, %p139
      %p141 = pneg %p140
      // Predicated region
      $region9: #{_step_normal_eq.1} parent=5 // pred_check
        _
      $region10: #{_step_normal_eq.1} parent=5 // pred_check_branch
        %143 = sbr.rel (%p140) target = $region12
      $region11: #{_step_normal_eq.1} parent=5 // pred_region
        %s144 = ssub.s32 %s10, 1
        // Predicated region
        $region13: #{_step_normal_eq.1} parent=11 // pred_check
          %p145 = pneg %p31
        $region14: #{_step_normal_eq.1} parent=11 // pred_check_branch
          %147 = sbr.rel (%p145) target = $region16
        $region15: #{_step_normal_eq.1} parent=11 // pred_region
          _
        $region16: #{_step_normal_eq.1} parent=11 // pred_fallthru
          _
        // Predicated region
        $region17: #{_step_normal_eq.1} parent=11 // pred_check
          %p148 = pneg %p52
        $region18: #{_step_normal_eq.1} parent=11 // pred_check_branch
          %150 = sbr.rel (%p148) target = $region20
        $region19: #{_step_normal_eq.1} parent=11 // pred_region
          _
        $region20: #{_step_normal_eq.1} parent=11 // pred_fallthru
          _
      $region12: #{_step_normal_eq.1} parent=5 // pred_fallthru
        _
      %p151 = scmp.lt.s32.totalorder %s10, 2
      // Predicated region
      $region21: #{_step_normal_eq.1} parent=5 // pred_check
        %p152 = pneg %p151
      $region22: #{_step_normal_eq.1} parent=5 // pred_check_branch
        %154 = sbr.rel (%p152) target = $region24
      $region23: #{_step_normal_eq.1} parent=5 // pred_region
        // Predicated region
        $region25: #{_step_normal_eq.1} parent=23 // pred_check
          %p155 = pneg %p72
        $region26: #{_step_normal_eq.1} parent=23 // pred_check_branch
          %157 = sbr.rel (%p155) target = $region28
        $region27: #{_step_normal_eq.1} parent=23 // pred_region
          %s158 = sand.u32 %s62, 1
          %s159 = sand.u32 %s62, 1
          %s160 = smul.addr %s159, 16
          %s161 = scalar_lea.vmem [#allocation2], %s160
          %s162 = smul.addr %s10, 8
          %s163 = scalar_lea.vmem %s2, %s162
          // Predicated region
          $region29: #{_step_normal_eq.1} parent=27 // pred_check
            _
          $region30: #{_step_normal_eq.1} parent=27 // pred_check_branch
            %165 = sbr.rel (0) target = $region32
          $region31: #{_step_normal_eq.1} parent=27 // pred_region
            // Predicated region
            $region33: #{_step_normal_eq.1} parent=31 // pred_check
              _
            $region34: #{_step_normal_eq.1} parent=31 // pred_check_branch
              %167 = sbr.rel (0) target = $region36
            $region35: #{_step_normal_eq.1} parent=31 // pred_region
              // Predicated region
              $region48: #{_step_normal_eq.1} parent=35 // pred_check
                _
              $region49: #{_step_normal_eq.1} parent=35 // pred_check_branch
                %185 = sbr.rel (0) target = $region51
              $region50: #{_step_normal_eq.1} parent=35 // pred_region
                loop: start=0, step=1, limit=1
                $region52: #{_step_normal_eq.1} parent=50 // loop_pre_header
                  _
                $region53: #{_step_normal_eq.1} parent=50 // loop_header
                  %s187 = sphi 0, %s191
                  %p188 = scmp.ge.s32.totalorder %s187, 1
                  %s192 = sphi %s163, %s163
                  %s193 = sphi %s161, %s161
                $region54: #{_step_normal_eq.1} parent=50 // loop_header_branch
                  %190 = sbr.rel (%p188) target = $region58
                $region55: #{_step_normal_eq.1} parent=50 // loop_body
                  %v194 = vld [vmem:[%s192] sm:$0xff]
                  %195 = vst [vmem:[%s193] sm:$0xff] %v194
                  %v196 = vld [vmem:[%s192 + $0x10] sm:$0xff]
                  %197 = vst [vmem:[%s193 + $0x8] sm:$0xff] %v196
                $region56: #{_step_normal_eq.1} parent=50 // loop_footer
                  %s191 = sadd.s32 1, %s187
                $region57: #{_step_normal_eq.1} parent=50 // loop_footer_branch
                  %186 = sbr.rel target = $region53
                $region58: #{_step_normal_eq.1} parent=50 // loop_exit
                  _
              $region51: #{_step_normal_eq.1} parent=35 // pred_fallthru
                _
              // Predicated region
              $region59: #{_step_normal_eq.1} parent=35 // pred_check
                _
              $region60: #{_step_normal_eq.1} parent=35 // pred_check_branch
                %199 = sbr.rel target = $region62
              $region61: #{_step_normal_eq.1} parent=35 // pred_region
                _
              $region62: #{_step_normal_eq.1} parent=35 // pred_fallthru
                _
            $region36: #{_step_normal_eq.1} parent=31 // pred_fallthru
              _
            // Predicated region
            $region37: #{_step_normal_eq.1} parent=31 // pred_check
              _
            $region38: #{_step_normal_eq.1} parent=31 // pred_check_branch
              %169 = sbr.rel target = $region40
            $region39: #{_step_normal_eq.1} parent=31 // pred_region
              %s171 = ssub.s32 256, 1
              loop: start=0, step=1, limit=1
              $region41: #{_step_normal_eq.1} parent=39 // loop_pre_header
                _
              $region42: #{_step_normal_eq.1} parent=39 // loop_header
                %s173 = sphi 0, %s177
                %p174 = scmp.ge.s32.totalorder %s173, 1
                %s178 = sphi %s163, %s163
                %s179 = sphi %s161, %s161
              $region43: #{_step_normal_eq.1} parent=39 // loop_header_branch
                %176 = sbr.rel (%p174) target = $region47
              $region44: #{_step_normal_eq.1} parent=39 // loop_body
                %v180 = vld [vmem:[%s178] sm:%s171]
                %181 = vst [vmem:[%s179] sm:%s171] %v180
                %v182 = vld [vmem:[%s178 + $0x10] sm:%s171]
                %183 = vst [vmem:[%s179 + $0x8] sm:%s171] %v182
              $region45: #{_step_normal_eq.1} parent=39 // loop_footer
                %s177 = sadd.s32 1, %s173
              $region46: #{_step_normal_eq.1} parent=39 // loop_footer_branch
                %172 = sbr.rel target = $region42
              $region47: #{_step_normal_eq.1} parent=39 // loop_exit
                _
            $region40: #{_step_normal_eq.1} parent=31 // pred_fallthru
              _
          $region32: #{_step_normal_eq.1} parent=27 // pred_fallthru
            _
          %200 = vnop
        $region28: #{_step_normal_eq.1} parent=23 // pred_fallthru
          _
        // Predicated region
        $region63: #{_step_normal_eq.1} parent=23 // pred_check
          %p201 = pneg %p98
        $region64: #{_step_normal_eq.1} parent=23 // pred_check_branch
          %203 = sbr.rel (%p201) target = $region66
        $region65: #{_step_normal_eq.1} parent=23 // pred_region
          %p204 = scmp.lt.s32.totalorder %s10, 1
          %s205 = scalar_select %p204, %s10, 1
          %s206 = scalar_lea.vmem %s3, %s205
        $region66: #{_step_normal_eq.1} parent=23 // pred_fallthru
          _
      $region24: #{_step_normal_eq.1} parent=5 // pred_fallthru
        _
      %p207 = scmp.le.s32.totalorder 1, %s10
      %p208 = scmp.lt.s32.totalorder %s10, 3
      %p209 = pnand %p207, %p208
      %p210 = pneg %p209
      // Predicated region
      $region67: #{_step_normal_eq.1} parent=5 // pred_check
        _
      $region68: #{_step_normal_eq.1} parent=5 // pred_check_branch
        %212 = sbr.rel (%p209) target = $region70
      $region69: #{_step_normal_eq.1} parent=5 // pred_region
        %s213 = ssub.s32 %s10, 1
        %s214 = sand.u32 %s65, 1
        %s215 = sand.u32 %s65, 1
        %s216 = smul.addr %s215, 16
        %s217 = scalar_lea.vmem [#allocation2], %s216
        // Predicated region
        $region71: #{_step_normal_eq.1} parent=69 // pred_check
          %p218 = pneg %p78
        $region72: #{_step_normal_eq.1} parent=69 // pred_check_branch
          %220 = sbr.rel (%p218) target = $region74
        $region73: #{_step_normal_eq.1} parent=69 // pred_region
          _
        $region74: #{_step_normal_eq.1} parent=69 // pred_fallthru
          _
        %p221 = pneg %p31
        %p222 = pneg %p28
        %p223 = pneg %p52
        %p224 = pneg %p49
        %s225 = sand.u32 %s65, 1
        %s226 = sand.u32 %s65, 1
        %s227 = smul.addr %s226, 16
        %s228 = scalar_lea.vmem [#allocation2], %s227
        %p229 = pneg %p78
        %p230 = pneg %p75
        %p231 = scmp.lt.s32.totalorder %s15, 1
        %s232 = scalar_select %p231, %s15, 1
        %s233 = scalar_lea.vmem %s3, %s232
        %p234 = pneg %p104
        %p235 = pneg %p101
        %p236 = pneg %p130
        %p237 = pneg %p127
        %p238 = scmp.lt.s32.totalorder %s15, 1
        %s239 = scalar_select %p238, %s15, 1
        %s240 = scalar_lea.vmem %s4, %s239
        %p241 = scmp.lt.s32.totalorder %s15, 1
        %s242 = scalar_select %p241, %s15, 1
        %s243 = scalar_lea.vmem %s3, %s242
        %p244 = scmp.lt.s32.totalorder %s15, 1
        %s245 = scalar_select %p244, %s15, 1
        %s246 = scalar_lea.vmem %s4, %s245
        %v247 = vld [vmem:[%s0] sm:$0xff]
        %v248 = vld [vmem:[%s0 + $0x8] sm:$0xff]
        %v249 = vld [vmem:[%s0 + $0x10] sm:$0xff]
        %v250 = vld [vmem:[%s0 + $0x18] sm:$0xff]
        %v251 = vld [vmem:[%s0 + $0x20] sm:$0xff]
        %v252 = vld [vmem:[%s0 + $0x28] sm:$0xff]
        %v253 = vld [vmem:[%s0 + $0x30] sm:$0xff]
        %v254 = vld [vmem:[%s0 + $0x38] sm:$0xff]
        %v255 = vld [vmem:[%s0 + $0x40] sm:$0xff]
        %v256 = vld [vmem:[%s0 + $0x48] sm:$0xff]
        %v257 = vld [vmem:[%s0 + $0x50] sm:$0xff]
        %v258 = vld [vmem:[%s0 + $0x58] sm:$0xff]
        %v259 = vld [vmem:[%s0 + $0x60] sm:$0xff]
        %v260 = vld [vmem:[%s0 + $0x68] sm:$0xff]
        %v261 = vld [vmem:[%s0 + $0x70] sm:$0xff]
        %v262 = vld [vmem:[%s0 + $0x78] sm:$0xff]
        %v263 = vld [vmem:[%s0 + $0x80] sm:$0xff]
        %v264 = vld [vmem:[%s0 + $0x88] sm:$0xff]
        %v265 = vld [vmem:[%s0 + $0x90] sm:$0xff]
        %v266 = vld [vmem:[%s0 + $0x98] sm:$0xff]
        %v267 = vld [vmem:[%s0 + $0xa0] sm:$0xff]
        %v268 = vld [vmem:[%s0 + $0xa8] sm:$0xff]
        %v269 = vld [vmem:[%s0 + $0xb0] sm:$0xff]
        %v270 = vld [vmem:[%s0 + $0xb8] sm:$0xff]
        %v271 = vld [vmem:[%s0 + $0xc0] sm:$0xff]
        %v272 = vld [vmem:[%s0 + $0xc8] sm:$0xff]
        %v273 = vld [vmem:[%s0 + $0xd0] sm:$0xff]
        %v274 = vld [vmem:[%s0 + $0xd8] sm:$0xff]
        %v275 = vld [vmem:[%s0 + $0xe0] sm:$0xff]
        %v276 = vld [vmem:[%s0 + $0xe8] sm:$0xff]
        %v277 = vld [vmem:[%s0 + $0xf0] sm:$0xff]
        %v278 = vld [vmem:[%s0 + $0xf8] sm:$0xff]
        %v279 = vld [vmem:[%s0 + $0x100] sm:$0xff]
        %v280 = vld [vmem:[%s0 + $0x108] sm:$0xff]
        %v281 = vld [vmem:[%s0 + $0x110] sm:$0xff]
        %v282 = vld [vmem:[%s0 + $0x118] sm:$0xff]
        %v283 = vld [vmem:[%s0 + $0x120] sm:$0xff]
        %v284 = vld [vmem:[%s0 + $0x128] sm:$0xff]
        %v285 = vld [vmem:[%s0 + $0x130] sm:$0xff]
        %v286 = vld [vmem:[%s0 + $0x138] sm:$0xff]
        %v287 = vld [vmem:[%s0 + $0x140] sm:$0xff]
        %v288 = vld [vmem:[%s0 + $0x148] sm:$0xff]
        %v289 = vld [vmem:[%s0 + $0x150] sm:$0xff]
        %v290 = vld [vmem:[%s0 + $0x158] sm:$0xff]
        %v291 = vld [vmem:[%s0 + $0x160] sm:$0xff]
        %v292 = vld [vmem:[%s0 + $0x168] sm:$0xff]
        %v293 = vld [vmem:[%s0 + $0x170] sm:$0xff]
        %v294 = vld [vmem:[%s0 + $0x178] sm:$0xff]
        %v295 = vld [vmem:[%s0 + $0x180] sm:$0xff]
        %v296 = vld [vmem:[%s0 + $0x188] sm:$0xff]
        %v297 = vld [vmem:[%s0 + $0x190] sm:$0xff]
        %v298 = vld [vmem:[%s0 + $0x198] sm:$0xff]
        %v299 = vld [vmem:[%s0 + $0x1a0] sm:$0xff]
        %v300 = vld [vmem:[%s0 + $0x1a8] sm:$0xff]
        %v301 = vld [vmem:[%s0 + $0x1b0] sm:$0xff]
        %v302 = vld [vmem:[%s0 + $0x1b8] sm:$0xff]
        %v303 = vld [vmem:[%s0 + $0x1c0] sm:$0xff]
        %v304 = vld [vmem:[%s0 + $0x1c8] sm:$0xff]
        %v305 = vld [vmem:[%s0 + $0x1d0] sm:$0xff]
        %v306 = vld [vmem:[%s0 + $0x1d8] sm:$0xff]
        %v307 = vld [vmem:[%s0 + $0x1e0] sm:$0xff]
        %v308 = vld [vmem:[%s0 + $0x1e8] sm:$0xff]
        %v309 = vld [vmem:[%s0 + $0x1f0] sm:$0xff]
        %v310 = vld [vmem:[%s0 + $0x1f8] sm:$0xff]
        %v311 = vld [vmem:[%s0 + $0x200] sm:$0xff]
        %v312 = vld [vmem:[%s0 + $0x208] sm:$0xff]
        %v313 = vld [vmem:[%s0 + $0x210] sm:$0xff]
        %v314 = vld [vmem:[%s0 + $0x218] sm:$0xff]
        %v315 = vld [vmem:[%s0 + $0x220] sm:$0xff]
        %v316 = vld [vmem:[%s0 + $0x228] sm:$0xff]
        %v317 = vld [vmem:[%s0 + $0x230] sm:$0xff]
        %v318 = vld [vmem:[%s0 + $0x238] sm:$0xff]
        %v319 = vld [vmem:[%s0 + $0x240] sm:$0xff]
        %v320 = vld [vmem:[%s0 + $0x248] sm:$0xff]
        %v321 = vld [vmem:[%s0 + $0x250] sm:$0xff]
        %v322 = vld [vmem:[%s0 + $0x258] sm:$0xff]
        %v323 = vld [vmem:[%s0 + $0x260] sm:$0xff]
        %v324 = vld [vmem:[%s0 + $0x268] sm:$0xff]
        %v325 = vld [vmem:[%s0 + $0x270] sm:$0xff]
        %v326 = vld [vmem:[%s0 + $0x278] sm:$0xff]
        %v327 = vld [vmem:[%s0 + $0x280] sm:$0xff]
        %v328 = vld [vmem:[%s0 + $0x288] sm:$0xff]
        %v329 = vld [vmem:[%s0 + $0x290] sm:$0xff]
        %v330 = vld [vmem:[%s0 + $0x298] sm:$0xff]
        %v331 = vld [vmem:[%s0 + $0x2a0] sm:$0xff]
        %v332 = vld [vmem:[%s0 + $0x2a8] sm:$0xff]
        %v333 = vld [vmem:[%s0 + $0x2b0] sm:$0xff]
        %v334 = vld [vmem:[%s0 + $0x2b8] sm:$0xff]
        %v335 = vld [vmem:[%s0 + $0x2c0] sm:$0xff]
        %v336 = vld [vmem:[%s0 + $0x2c8] sm:$0xff]
        %v337 = vld [vmem:[%s0 + $0x2d0] sm:$0xff]
        %v338 = vld [vmem:[%s0 + $0x2d8] sm:$0xff]
        %v339 = vld [vmem:[%s0 + $0x2e0] sm:$0xff]
        %v340 = vld [vmem:[%s0 + $0x2e8] sm:$0xff]
        %v341 = vld [vmem:[%s0 + $0x2f0] sm:$0xff]
        %v342 = vld [vmem:[%s0 + $0x2f8] sm:$0xff]
        %v343 = vld [vmem:[%s0 + $0x300] sm:$0xff]
        %v344 = vld [vmem:[%s0 + $0x308] sm:$0xff]
        %v345 = vld [vmem:[%s0 + $0x310] sm:$0xff]
        %v346 = vld [vmem:[%s0 + $0x318] sm:$0xff]
        %v347 = vld [vmem:[%s0 + $0x320] sm:$0xff]
        %v348 = vld [vmem:[%s0 + $0x328] sm:$0xff]
        %v349 = vld [vmem:[%s0 + $0x330] sm:$0xff]
        %v350 = vld [vmem:[%s0 + $0x338] sm:$0xff]
        %v351 = vld [vmem:[%s0 + $0x340] sm:$0xff]
        %v352 = vld [vmem:[%s0 + $0x348] sm:$0xff]
        %v353 = vld [vmem:[%s0 + $0x350] sm:$0xff]
        %v354 = vld [vmem:[%s0 + $0x358] sm:$0xff]
        %v355 = vld [vmem:[%s0 + $0x360] sm:$0xff]
        %v356 = vld [vmem:[%s0 + $0x368] sm:$0xff]
        %v357 = vld [vmem:[%s0 + $0x370] sm:$0xff]
        %v358 = vld [vmem:[%s0 + $0x378] sm:$0xff]
        %v359 = vld [vmem:[%s0 + $0x380] sm:$0xff]
        %v360 = vld [vmem:[%s0 + $0x388] sm:$0xff]
        %v361 = vld [vmem:[%s0 + $0x390] sm:$0xff]
        %v362 = vld [vmem:[%s0 + $0x398] sm:$0xff]
        %v363 = vld [vmem:[%s0 + $0x3a0] sm:$0xff]
        %v364 = vld [vmem:[%s0 + $0x3a8] sm:$0xff]
        %v365 = vld [vmem:[%s0 + $0x3b0] sm:$0xff]
        %v366 = vld [vmem:[%s0 + $0x3b8] sm:$0xff]
        %v367 = vld [vmem:[%s0 + $0x3c0] sm:$0xff]
        %v368 = vld [vmem:[%s0 + $0x3c8] sm:$0xff]
        %v369 = vld [vmem:[%s0 + $0x3d0] sm:$0xff]
        %v370 = vld [vmem:[%s0 + $0x3d8] sm:$0xff]
        %v371 = vld [vmem:[%s0 + $0x3e0] sm:$0xff]
        %v372 = vld [vmem:[%s0 + $0x3e8] sm:$0xff]
        %v373 = vld [vmem:[%s0 + $0x3f0] sm:$0xff]
        %v374 = vld [vmem:[%s0 + $0x3f8] sm:$0xff]
        %v375 = vld [vmem:[%s217] sm:$0xff]
        %v376 = vld [vmem:[%s217 + $0x8] sm:$0xff]
        %v377 = vld [vmem:[%s243] sm:$0x1]
        %v379 = vperm.slane %v377, 0
        %vm381 = vcmask 130048
        %v383 = vsel %vm381, %v247, 0
        %v386 = vsel %vm381, %v248, 0
        %v389 = vsel %vm381, %v249, 0
        %v392 = vsel %vm381, %v250, 0
        %v395 = vsel %vm381, %v251, 0
        %v398 = vsel %vm381, %v252, 0
        %v401 = vsel %vm381, %v253, 0
        %v404 = vsel %vm381, %v254, 0
        %v407 = vsel %vm381, %v255, 0
        %v410 = vsel %vm381, %v256, 0
        %v413 = vsel %vm381, %v257, 0
        %v416 = vsel %vm381, %v258, 0
        %v419 = vsel %vm381, %v259, 0
        %v422 = vsel %vm381, %v260, 0
        %v425 = vsel %vm381, %v261, 0
        %v428 = vsel %vm381, %v262, 0
        %v431 = vsel %vm381, %v263, 0
        %v434 = vsel %vm381, %v264, 0
        %v437 = vsel %vm381, %v265, 0
        %v440 = vsel %vm381, %v266, 0
        %v443 = vsel %vm381, %v267, 0
        %v446 = vsel %vm381, %v268, 0
        %v449 = vsel %vm381, %v269, 0
        %v452 = vsel %vm381, %v270, 0
        %v455 = vsel %vm381, %v271, 0
        %v458 = vsel %vm381, %v272, 0
        %v461 = vsel %vm381, %v273, 0
        %v464 = vsel %vm381, %v274, 0
        %v467 = vsel %vm381, %v275, 0
        %v470 = vsel %vm381, %v276, 0
        %v473 = vsel %vm381, %v277, 0
        %v476 = vsel %vm381, %v278, 0
        %v479 = vsel %vm381, %v279, 0
        %v482 = vsel %vm381, %v280, 0
        %v485 = vsel %vm381, %v281, 0
        %v488 = vsel %vm381, %v282, 0
        %v491 = vsel %vm381, %v283, 0
        %v494 = vsel %vm381, %v284, 0
        %v497 = vsel %vm381, %v285, 0
        %v500 = vsel %vm381, %v286, 0
        %v503 = vsel %vm381, %v287, 0
        %v506 = vsel %vm381, %v288, 0
        %v509 = vsel %vm381, %v289, 0
        %v512 = vsel %vm381, %v290, 0
        %v515 = vsel %vm381, %v291, 0
        %v518 = vsel %vm381, %v292, 0
        %v521 = vsel %vm381, %v293, 0
        %v524 = vsel %vm381, %v294, 0
        %v527 = vsel %vm381, %v295, 0
        %v530 = vsel %vm381, %v296, 0
        %v533 = vsel %vm381, %v297, 0
        %v536 = vsel %vm381, %v298, 0
        %v539 = vsel %vm381, %v299, 0
        %v542 = vsel %vm381, %v300, 0
        %v545 = vsel %vm381, %v301, 0
        %v548 = vsel %vm381, %v302, 0
        %v551 = vsel %vm381, %v303, 0
        %v554 = vsel %vm381, %v304, 0
        %v557 = vsel %vm381, %v305, 0
        %v560 = vsel %vm381, %v306, 0
        %v563 = vsel %vm381, %v307, 0
        %v566 = vsel %vm381, %v308, 0
        %v569 = vsel %vm381, %v309, 0
        %v572 = vsel %vm381, %v310, 0
        %v575 = vsel %vm381, %v311, 0
        %v578 = vsel %vm381, %v312, 0
        %v581 = vsel %vm381, %v313, 0
        %v584 = vsel %vm381, %v314, 0
        %v587 = vsel %vm381, %v315, 0
        %v590 = vsel %vm381, %v316, 0
        %v593 = vsel %vm381, %v317, 0
        %v596 = vsel %vm381, %v318, 0
        %v599 = vsel %vm381, %v319, 0
        %v602 = vsel %vm381, %v320, 0
        %v605 = vsel %vm381, %v321, 0
        %v608 = vsel %vm381, %v322, 0
        %v611 = vsel %vm381, %v323, 0
        %v614 = vsel %vm381, %v324, 0
        %v617 = vsel %vm381, %v325, 0
        %v620 = vsel %vm381, %v326, 0
        %v623 = vsel %vm381, %v327, 0
        %v626 = vsel %vm381, %v328, 0
        %v629 = vsel %vm381, %v329, 0
        %v632 = vsel %vm381, %v330, 0
        %v635 = vsel %vm381, %v331, 0
        %v638 = vsel %vm381, %v332, 0
        %v641 = vsel %vm381, %v333, 0
        %v644 = vsel %vm381, %v334, 0
        %v647 = vsel %vm381, %v335, 0
        %v650 = vsel %vm381, %v336, 0
        %v653 = vsel %vm381, %v337, 0
        %v656 = vsel %vm381, %v338, 0
        %v659 = vsel %vm381, %v339, 0
        %v662 = vsel %vm381, %v340, 0
        %v665 = vsel %vm381, %v341, 0
        %v668 = vsel %vm381, %v342, 0
        %v671 = vsel %vm381, %v343, 0
        %v674 = vsel %vm381, %v344, 0
        %v677 = vsel %vm381, %v345, 0
        %v680 = vsel %vm381, %v346, 0
        %v683 = vsel %vm381, %v347, 0
        %v686 = vsel %vm381, %v348, 0
        %v689 = vsel %vm381, %v349, 0
        %v692 = vsel %vm381, %v350, 0
        %v695 = vsel %vm381, %v351, 0
        %v698 = vsel %vm381, %v352, 0
        %v701 = vsel %vm381, %v353, 0
        %v704 = vsel %vm381, %v354, 0
        %v707 = vsel %vm381, %v355, 0
        %v710 = vsel %vm381, %v356, 0
        %v713 = vsel %vm381, %v357, 0
        %v716 = vsel %vm381, %v358, 0
        %v719 = vsel %vm381, %v359, 0
        %v722 = vsel %vm381, %v360, 0
        %v725 = vsel %vm381, %v361, 0
        %v728 = vsel %vm381, %v362, 0
        %v731 = vsel %vm381, %v363, 0
        %v734 = vsel %vm381, %v364, 0
        %v737 = vsel %vm381, %v365, 0
        %v740 = vsel %vm381, %v366, 0
        %v743 = vsel %vm381, %v367, 0
        %v746 = vsel %vm381, %v368, 0
        %v749 = vsel %vm381, %v369, 0
        %v752 = vsel %vm381, %v370, 0
        %v755 = vsel %vm381, %v371, 0
        %v758 = vsel %vm381, %v372, 0
        %v761 = vsel %vm381, %v373, 0
        %v764 = vsel %vm381, %v374, 0
        %766 = vmatpush.msra.mxu0 0.0
        %767 = vmatpush.msra.mxu0 0.0
        %768 = vmatpush.msra.mxu0 0.0
        %769 = vmatpush.msra.mxu0 0.0
        %770 = vmatpush.msra.mxu0 0.0
        %771 = vmatpush.msra.mxu0 0.0
        %772 = vmatpush.msra.mxu0 0.0
        %773 = vmatpush.msra.mxu0 0.0
        %774 = vmatpush.msra.mxu0 0.0
        %775 = vmatpush.msra.mxu0 0.0
        %776 = vmatpush.msra.mxu0 0.0
        %777 = vmatpush.msra.mxu0 0.0
        %778 = vmatpush.msra.mxu0 0.0
        %779 = vmatpush.msra.mxu0 0.0
        %780 = vmatpush.msra.mxu0 %v376
        %781 = vmatpush.msra.mxu0 %v375
        %782 = vmatmul.f32.gmra.mxu0 %v383
        %v783 = vpop.f32.mrf.mxu0
        %v784 = vadd.f32 %v379, %v783
        %785 = vmatmul.f32.gmra.mxu0 %v386
        %v786 = vpop.f32.mrf.mxu0
        %v787 = vadd.f32 %v379, %v786
        %788 = vmatmul.f32.gmra.mxu0 %v389
        %v789 = vpop.f32.mrf.mxu0
        %v790 = vadd.f32 %v379, %v789
        %791 = vmatmul.f32.gmra.mxu0 %v392
        %v792 = vpop.f32.mrf.mxu0
        %v793 = vadd.f32 %v379, %v792
        %794 = vmatmul.f32.gmra.mxu0 %v395
        %v795 = vpop.f32.mrf.mxu0
        %v796 = vadd.f32 %v379, %v795
        %797 = vmatmul.f32.gmra.mxu0 %v398
        %v798 = vpop.f32.mrf.mxu0
        %v799 = vadd.f32 %v379, %v798
        %800 = vmatmul.f32.gmra.mxu0 %v401
        %v801 = vpop.f32.mrf.mxu0
        %v802 = vadd.f32 %v379, %v801
        %803 = vmatmul.f32.gmra.mxu0 %v404
        %v804 = vpop.f32.mrf.mxu0
        %v805 = vadd.f32 %v379, %v804
        %806 = vmatmul.f32.gmra.mxu0 %v407
        %v807 = vpop.f32.mrf.mxu0
        %v808 = vadd.f32 %v379, %v807
        %809 = vmatmul.f32.gmra.mxu0 %v410
        %v810 = vpop.f32.mrf.mxu0
        %v811 = vadd.f32 %v379, %v810
        %812 = vmatmul.f32.gmra.mxu0 %v413
        %v813 = vpop.f32.mrf.mxu0
        %v814 = vadd.f32 %v379, %v813
        %815 = vmatmul.f32.gmra.mxu0 %v416
        %v816 = vpop.f32.mrf.mxu0
        %v817 = vadd.f32 %v379, %v816
        %818 = vmatmul.f32.gmra.mxu0 %v419
        %v819 = vpop.f32.mrf.mxu0
        %v820 = vadd.f32 %v379, %v819
        %821 = vmatmul.f32.gmra.mxu0 %v422
        %v822 = vpop.f32.mrf.mxu0
        %v823 = vadd.f32 %v379, %v822
        %824 = vmatmul.f32.gmra.mxu0 %v425
        %v825 = vpop.f32.mrf.mxu0
        %v826 = vadd.f32 %v379, %v825
        %827 = vmatmul.f32.gmra.mxu0 %v428
        %v828 = vpop.f32.mrf.mxu0
        %v829 = vadd.f32 %v379, %v828
        %830 = vmatmul.f32.gmra.mxu0 %v431
        %v831 = vpop.f32.mrf.mxu0
        %v832 = vadd.f32 %v379, %v831
        %833 = vmatmul.f32.gmra.mxu0 %v434
        %v834 = vpop.f32.mrf.mxu0
        %v835 = vadd.f32 %v379, %v834
        %836 = vmatmul.f32.gmra.mxu0 %v437
        %v837 = vpop.f32.mrf.mxu0
        %v838 = vadd.f32 %v379, %v837
        %839 = vmatmul.f32.gmra.mxu0 %v440
        %v840 = vpop.f32.mrf.mxu0
        %v841 = vadd.f32 %v379, %v840
        %842 = vmatmul.f32.gmra.mxu0 %v443
        %v843 = vpop.f32.mrf.mxu0
        %v844 = vadd.f32 %v379, %v843
        %845 = vmatmul.f32.gmra.mxu0 %v446
        %v846 = vpop.f32.mrf.mxu0
        %v847 = vadd.f32 %v379, %v846
        %848 = vmatmul.f32.gmra.mxu0 %v449
        %v849 = vpop.f32.mrf.mxu0
        %v850 = vadd.f32 %v379, %v849
        %851 = vmatmul.f32.gmra.mxu0 %v452
        %v852 = vpop.f32.mrf.mxu0
        %v853 = vadd.f32 %v379, %v852
        %854 = vmatmul.f32.gmra.mxu0 %v455
        %v855 = vpop.f32.mrf.mxu0
        %v856 = vadd.f32 %v379, %v855
        %857 = vmatmul.f32.gmra.mxu0 %v458
        %v858 = vpop.f32.mrf.mxu0
        %v859 = vadd.f32 %v379, %v858
        %860 = vmatmul.f32.gmra.mxu0 %v461
        %v861 = vpop.f32.mrf.mxu0
        %v862 = vadd.f32 %v379, %v861
        %863 = vmatmul.f32.gmra.mxu0 %v464
        %v864 = vpop.f32.mrf.mxu0
        %v865 = vadd.f32 %v379, %v864
        %866 = vmatmul.f32.gmra.mxu0 %v467
        %v867 = vpop.f32.mrf.mxu0
        %v868 = vadd.f32 %v379, %v867
        %869 = vmatmul.f32.gmra.mxu0 %v470
        %v870 = vpop.f32.mrf.mxu0
        %v871 = vadd.f32 %v379, %v870
        %872 = vmatmul.f32.gmra.mxu0 %v473
        %v873 = vpop.f32.mrf.mxu0
        %v874 = vadd.f32 %v379, %v873
        %875 = vmatmul.f32.gmra.mxu0 %v476
        %v876 = vpop.f32.mrf.mxu0
        %v877 = vadd.f32 %v379, %v876
        %878 = vmatmul.f32.gmra.mxu0 %v479
        %v879 = vpop.f32.mrf.mxu0
        %v880 = vadd.f32 %v379, %v879
        %881 = vmatmul.f32.gmra.mxu0 %v482
        %v882 = vpop.f32.mrf.mxu0
        %v883 = vadd.f32 %v379, %v882
        %884 = vmatmul.f32.gmra.mxu0 %v485
        %v885 = vpop.f32.mrf.mxu0
        %v886 = vadd.f32 %v379, %v885
        %887 = vmatmul.f32.gmra.mxu0 %v488
        %v888 = vpop.f32.mrf.mxu0
        %v889 = vadd.f32 %v379, %v888
        %890 = vmatmul.f32.gmra.mxu0 %v491
        %v891 = vpop.f32.mrf.mxu0
        %v892 = vadd.f32 %v379, %v891
        %893 = vmatmul.f32.gmra.mxu0 %v494
        %v894 = vpop.f32.mrf.mxu0
        %v895 = vadd.f32 %v379, %v894
        %896 = vmatmul.f32.gmra.mxu0 %v497
        %v897 = vpop.f32.mrf.mxu0
        %v898 = vadd.f32 %v379, %v897
        %899 = vmatmul.f32.gmra.mxu0 %v500
        %v900 = vpop.f32.mrf.mxu0
        %v901 = vadd.f32 %v379, %v900
        %902 = vmatmul.f32.gmra.mxu0 %v503
        %v903 = vpop.f32.mrf.mxu0
        %v904 = vadd.f32 %v379, %v903
        %905 = vmatmul.f32.gmra.mxu0 %v506
        %v906 = vpop.f32.mrf.mxu0
        %v907 = vadd.f32 %v379, %v906
        %908 = vmatmul.f32.gmra.mxu0 %v509
        %v909 = vpop.f32.mrf.mxu0
        %v910 = vadd.f32 %v379, %v909
        %911 = vmatmul.f32.gmra.mxu0 %v512
        %v912 = vpop.f32.mrf.mxu0
        %v913 = vadd.f32 %v379, %v912
        %914 = vmatmul.f32.gmra.mxu0 %v515
        %v915 = vpop.f32.mrf.mxu0
        %v916 = vadd.f32 %v379, %v915
        %917 = vmatmul.f32.gmra.mxu0 %v518
        %v918 = vpop.f32.mrf.mxu0
        %v919 = vadd.f32 %v379, %v918
        %920 = vmatmul.f32.gmra.mxu0 %v521
        %v921 = vpop.f32.mrf.mxu0
        %v922 = vadd.f32 %v379, %v921
        %923 = vmatmul.f32.gmra.mxu0 %v524
        %v924 = vpop.f32.mrf.mxu0
        %v925 = vadd.f32 %v379, %v924
        %926 = vmatmul.f32.gmra.mxu0 %v527
        %v927 = vpop.f32.mrf.mxu0
        %v928 = vadd.f32 %v379, %v927
        %929 = vmatmul.f32.gmra.mxu0 %v530
        %v930 = vpop.f32.mrf.mxu0
        %v931 = vadd.f32 %v379, %v930
        %932 = vmatmul.f32.gmra.mxu0 %v533
        %v933 = vpop.f32.mrf.mxu0
        %v934 = vadd.f32 %v379, %v933
        %935 = vmatmul.f32.gmra.mxu0 %v536
        %v936 = vpop.f32.mrf.mxu0
        %v937 = vadd.f32 %v379, %v936
        %938 = vmatmul.f32.gmra.mxu0 %v539
        %v939 = vpop.f32.mrf.mxu0
        %v940 = vadd.f32 %v379, %v939
        %941 = vmatmul.f32.gmra.mxu0 %v542
        %v942 = vpop.f32.mrf.mxu0
        %v943 = vadd.f32 %v379, %v942
        %944 = vmatmul.f32.gmra.mxu0 %v545
        %v945 = vpop.f32.mrf.mxu0
        %v946 = vadd.f32 %v379, %v945
        %947 = vmatmul.f32.gmra.mxu0 %v548
        %v948 = vpop.f32.mrf.mxu0
        %v949 = vadd.f32 %v379, %v948
        %950 = vmatmul.f32.gmra.mxu0 %v551
        %v951 = vpop.f32.mrf.mxu0
        %v952 = vadd.f32 %v379, %v951
        %953 = vmatmul.f32.gmra.mxu0 %v554
        %v954 = vpop.f32.mrf.mxu0
        %v955 = vadd.f32 %v379, %v954
        %956 = vmatmul.f32.gmra.mxu0 %v557
        %v957 = vpop.f32.mrf.mxu0
        %v958 = vadd.f32 %v379, %v957
        %959 = vmatmul.f32.gmra.mxu0 %v560
        %v960 = vpop.f32.mrf.mxu0
        %v961 = vadd.f32 %v379, %v960
        %962 = vmatmul.f32.gmra.mxu0 %v563
        %v963 = vpop.f32.mrf.mxu0
        %v964 = vadd.f32 %v379, %v963
        %965 = vmatmul.f32.gmra.mxu0 %v566
        %v966 = vpop.f32.mrf.mxu0
        %v967 = vadd.f32 %v379, %v966
        %968 = vmatmul.f32.gmra.mxu0 %v569
        %v969 = vpop.f32.mrf.mxu0
        %v970 = vadd.f32 %v379, %v969
        %971 = vmatmul.f32.gmra.mxu0 %v572
        %v972 = vpop.f32.mrf.mxu0
        %v973 = vadd.f32 %v379, %v972
        %974 = vmatmul.f32.gmra.mxu0 %v575
        %v975 = vpop.f32.mrf.mxu0
        %v976 = vadd.f32 %v379, %v975
        %977 = vmatmul.f32.gmra.mxu0 %v578
        %v978 = vpop.f32.mrf.mxu0
        %v979 = vadd.f32 %v379, %v978
        %980 = vmatmul.f32.gmra.mxu0 %v581
        %v981 = vpop.f32.mrf.mxu0
        %v982 = vadd.f32 %v379, %v981
        %983 = vmatmul.f32.gmra.mxu0 %v584
        %v984 = vpop.f32.mrf.mxu0
        %v985 = vadd.f32 %v379, %v984
        %986 = vmatmul.f32.gmra.mxu0 %v587
        %v987 = vpop.f32.mrf.mxu0
        %v988 = vadd.f32 %v379, %v987
        %989 = vmatmul.f32.gmra.mxu0 %v590
        %v990 = vpop.f32.mrf.mxu0
        %v991 = vadd.f32 %v379, %v990
        %992 = vmatmul.f32.gmra.mxu0 %v593
        %v993 = vpop.f32.mrf.mxu0
        %v994 = vadd.f32 %v379, %v993
        %995 = vmatmul.f32.gmra.mxu0 %v596
        %v996 = vpop.f32.mrf.mxu0
        %v997 = vadd.f32 %v379, %v996
        %998 = vmatmul.f32.gmra.mxu0 %v599
        %v999 = vpop.f32.mrf.mxu0
        %v1000 = vadd.f32 %v379, %v999
        %1001 = vmatmul.f32.gmra.mxu0 %v602
        %v1002 = vpop.f32.mrf.mxu0
        %v1003 = vadd.f32 %v379, %v1002
        %1004 = vmatmul.f32.gmra.mxu0 %v605
        %v1005 = vpop.f32.mrf.mxu0
        %v1006 = vadd.f32 %v379, %v1005
        %1007 = vmatmul.f32.gmra.mxu0 %v608
        %v1008 = vpop.f32.mrf.mxu0
        %v1009 = vadd.f32 %v379, %v1008
        %1010 = vmatmul.f32.gmra.mxu0 %v611
        %v1011 = vpop.f32.mrf.mxu0
        %v1012 = vadd.f32 %v379, %v1011
        %1013 = vmatmul.f32.gmra.mxu0 %v614
        %v1014 = vpop.f32.mrf.mxu0
        %v1015 = vadd.f32 %v379, %v1014
        %1016 = vmatmul.f32.gmra.mxu0 %v617
        %v1017 = vpop.f32.mrf.mxu0
        %v1018 = vadd.f32 %v379, %v1017
        %1019 = vmatmul.f32.gmra.mxu0 %v620
        %v1020 = vpop.f32.mrf.mxu0
        %v1021 = vadd.f32 %v379, %v1020
        %1022 = vmatmul.f32.gmra.mxu0 %v623
        %v1023 = vpop.f32.mrf.mxu0
        %v1024 = vadd.f32 %v379, %v1023
        %1025 = vmatmul.f32.gmra.mxu0 %v626
        %v1026 = vpop.f32.mrf.mxu0
        %v1027 = vadd.f32 %v379, %v1026
        %1028 = vmatmul.f32.gmra.mxu0 %v629
        %v1029 = vpop.f32.mrf.mxu0
        %v1030 = vadd.f32 %v379, %v1029
        %1031 = vmatmul.f32.gmra.mxu0 %v632
        %v1032 = vpop.f32.mrf.mxu0
        %v1033 = vadd.f32 %v379, %v1032
        %1034 = vmatmul.f32.gmra.mxu0 %v635
        %v1035 = vpop.f32.mrf.mxu0
        %v1036 = vadd.f32 %v379, %v1035
        %1037 = vmatmul.f32.gmra.mxu0 %v638
        %v1038 = vpop.f32.mrf.mxu0
        %v1039 = vadd.f32 %v379, %v1038
        %1040 = vmatmul.f32.gmra.mxu0 %v641
        %v1041 = vpop.f32.mrf.mxu0
        %v1042 = vadd.f32 %v379, %v1041
        %1043 = vmatmul.f32.gmra.mxu0 %v644
        %v1044 = vpop.f32.mrf.mxu0
        %v1045 = vadd.f32 %v379, %v1044
        %1046 = vmatmul.f32.gmra.mxu0 %v647
        %v1047 = vpop.f32.mrf.mxu0
        %v1048 = vadd.f32 %v379, %v1047
        %1049 = vmatmul.f32.gmra.mxu0 %v650
        %v1050 = vpop.f32.mrf.mxu0
        %v1051 = vadd.f32 %v379, %v1050
        %1052 = vmatmul.f32.gmra.mxu0 %v653
        %v1053 = vpop.f32.mrf.mxu0
        %v1054 = vadd.f32 %v379, %v1053
        %1055 = vmatmul.f32.gmra.mxu0 %v656
        %v1056 = vpop.f32.mrf.mxu0
        %v1057 = vadd.f32 %v379, %v1056
        %1058 = vmatmul.f32.gmra.mxu0 %v659
        %v1059 = vpop.f32.mrf.mxu0
        %v1060 = vadd.f32 %v379, %v1059
        %1061 = vmatmul.f32.gmra.mxu0 %v662
        %v1062 = vpop.f32.mrf.mxu0
        %v1063 = vadd.f32 %v379, %v1062
        %1064 = vmatmul.f32.gmra.mxu0 %v665
        %v1065 = vpop.f32.mrf.mxu0
        %v1066 = vadd.f32 %v379, %v1065
        %1067 = vmatmul.f32.gmra.mxu0 %v668
        %v1068 = vpop.f32.mrf.mxu0
        %v1069 = vadd.f32 %v379, %v1068
        %1070 = vmatmul.f32.gmra.mxu0 %v671
        %v1071 = vpop.f32.mrf.mxu0
        %v1072 = vadd.f32 %v379, %v1071
        %1073 = vmatmul.f32.gmra.mxu0 %v674
        %v1074 = vpop.f32.mrf.mxu0
        %v1075 = vadd.f32 %v379, %v1074
        %1076 = vmatmul.f32.gmra.mxu0 %v677
        %v1077 = vpop.f32.mrf.mxu0
        %v1078 = vadd.f32 %v379, %v1077
        %1079 = vmatmul.f32.gmra.mxu0 %v680
        %v1080 = vpop.f32.mrf.mxu0
        %v1081 = vadd.f32 %v379, %v1080
        %1082 = vmatmul.f32.gmra.mxu0 %v683
        %v1083 = vpop.f32.mrf.mxu0
        %v1084 = vadd.f32 %v379, %v1083
        %1085 = vmatmul.f32.gmra.mxu0 %v686
        %v1086 = vpop.f32.mrf.mxu0
        %v1087 = vadd.f32 %v379, %v1086
        %1088 = vmatmul.f32.gmra.mxu0 %v689
        %v1089 = vpop.f32.mrf.mxu0
        %v1090 = vadd.f32 %v379, %v1089
        %1091 = vmatmul.f32.gmra.mxu0 %v692
        %v1092 = vpop.f32.mrf.mxu0
        %v1093 = vadd.f32 %v379, %v1092
        %1094 = vmatmul.f32.gmra.mxu0 %v695
        %v1095 = vpop.f32.mrf.mxu0
        %v1096 = vadd.f32 %v379, %v1095
        %1097 = vmatmul.f32.gmra.mxu0 %v698
        %v1098 = vpop.f32.mrf.mxu0
        %v1099 = vadd.f32 %v379, %v1098
        %1100 = vmatmul.f32.gmra.mxu0 %v701
        %v1101 = vpop.f32.mrf.mxu0
        %v1102 = vadd.f32 %v379, %v1101
        %1103 = vmatmul.f32.gmra.mxu0 %v704
        %v1104 = vpop.f32.mrf.mxu0
        %v1105 = vadd.f32 %v379, %v1104
        %1106 = vmatmul.f32.gmra.mxu0 %v707
        %v1107 = vpop.f32.mrf.mxu0
        %v1108 = vadd.f32 %v379, %v1107
        %1109 = vmatmul.f32.gmra.mxu0 %v710
        %v1110 = vpop.f32.mrf.mxu0
        %v1111 = vadd.f32 %v379, %v1110
        %1112 = vmatmul.f32.gmra.mxu0 %v713
        %v1113 = vpop.f32.mrf.mxu0
        %v1114 = vadd.f32 %v379, %v1113
        %1115 = vmatmul.f32.gmra.mxu0 %v716
        %v1116 = vpop.f32.mrf.mxu0
        %v1117 = vadd.f32 %v379, %v1116
        %1118 = vmatmul.f32.gmra.mxu0 %v719
        %v1119 = vpop.f32.mrf.mxu0
        %v1120 = vadd.f32 %v379, %v1119
        %1121 = vmatmul.f32.gmra.mxu0 %v722
        %v1122 = vpop.f32.mrf.mxu0
        %v1123 = vadd.f32 %v379, %v1122
        %1124 = vmatmul.f32.gmra.mxu0 %v725
        %v1125 = vpop.f32.mrf.mxu0
        %v1126 = vadd.f32 %v379, %v1125
        %1127 = vmatmul.f32.gmra.mxu0 %v728
        %v1128 = vpop.f32.mrf.mxu0
        %v1129 = vadd.f32 %v379, %v1128
        %1130 = vmatmul.f32.gmra.mxu0 %v731
        %v1131 = vpop.f32.mrf.mxu0
        %v1132 = vadd.f32 %v379, %v1131
        %1133 = vmatmul.f32.gmra.mxu0 %v734
        %v1134 = vpop.f32.mrf.mxu0
        %v1135 = vadd.f32 %v379, %v1134
        %1136 = vmatmul.f32.gmra.mxu0 %v737
        %v1137 = vpop.f32.mrf.mxu0
        %v1138 = vadd.f32 %v379, %v1137
        %1139 = vmatmul.f32.gmra.mxu0 %v740
        %v1140 = vpop.f32.mrf.mxu0
        %v1141 = vadd.f32 %v379, %v1140
        %1142 = vmatmul.f32.gmra.mxu0 %v743
        %v1143 = vpop.f32.mrf.mxu0
        %v1144 = vadd.f32 %v379, %v1143
        %1145 = vmatmul.f32.gmra.mxu0 %v746
        %v1146 = vpop.f32.mrf.mxu0
        %v1147 = vadd.f32 %v379, %v1146
        %1148 = vmatmul.f32.gmra.mxu0 %v749
        %v1149 = vpop.f32.mrf.mxu0
        %v1150 = vadd.f32 %v379, %v1149
        %1151 = vmatmul.f32.gmra.mxu0 %v752
        %v1152 = vpop.f32.mrf.mxu0
        %v1153 = vadd.f32 %v379, %v1152
        %1154 = vmatmul.f32.gmra.mxu0 %v755
        %v1155 = vpop.f32.mrf.mxu0
        %v1156 = vadd.f32 %v379, %v1155
        %1157 = vmatmul.f32.gmra.mxu0 %v758
        %v1158 = vpop.f32.mrf.mxu0
        %v1159 = vadd.f32 %v379, %v1158
        %1160 = vmatmul.f32.gmra.mxu0 %v761
        %v1161 = vpop.f32.mrf.mxu0
        %v1162 = vadd.f32 %v379, %v1161
        %1163 = vmatmul.f32.gmra.mxu0 %v764
        %v1164 = vpop.f32.mrf.mxu0
        %v1165 = vadd.f32 %v379, %v1164
        %1166 = vdwg.mxu0
        %v1167 = vxor.u32 %v784, 2147483648
        %v1168 = vxor.u32 %v787, 2147483648
        %v1169 = vxor.u32 %v790, 2147483648
        %v1170 = vxor.u32 %v793, 2147483648
        %v1171 = vxor.u32 %v796, 2147483648
        %v1172 = vxor.u32 %v799, 2147483648
        %v1173 = vxor.u32 %v802, 2147483648
        %v1174 = vxor.u32 %v805, 2147483648
        %v1175 = vxor.u32 %v808, 2147483648
        %v1176 = vxor.u32 %v811, 2147483648
        %v1177 = vxor.u32 %v814, 2147483648
        %v1178 = vxor.u32 %v817, 2147483648
        %v1179 = vxor.u32 %v820, 2147483648
        %v1180 = vxor.u32 %v823, 2147483648
        %v1181 = vxor.u32 %v826, 2147483648
        %v1182 = vxor.u32 %v829, 2147483648
        %v1183 = vxor.u32 %v832, 2147483648
        %v1184 = vxor.u32 %v835, 2147483648
        %v1185 = vxor.u32 %v838, 2147483648
        %v1186 = vxor.u32 %v841, 2147483648
        %v1187 = vxor.u32 %v844, 2147483648
        %v1188 = vxor.u32 %v847, 2147483648
        %v1189 = vxor.u32 %v850, 2147483648
        %v1190 = vxor.u32 %v853, 2147483648
        %v1191 = vxor.u32 %v856, 2147483648
        %v1192 = vxor.u32 %v859, 2147483648
        %v1193 = vxor.u32 %v862, 2147483648
        %v1194 = vxor.u32 %v865, 2147483648
        %v1195 = vxor.u32 %v868, 2147483648
        %v1196 = vxor.u32 %v871, 2147483648
        %v1197 = vxor.u32 %v874, 2147483648
        %v1198 = vxor.u32 %v877, 2147483648
        %v1199 = vxor.u32 %v880, 2147483648
        %v1200 = vxor.u32 %v883, 2147483648
        %v1201 = vxor.u32 %v886, 2147483648
        %v1202 = vxor.u32 %v889, 2147483648
        %v1203 = vxor.u32 %v892, 2147483648
        %v1204 = vxor.u32 %v895, 2147483648
        %v1205 = vxor.u32 %v898, 2147483648
        %v1206 = vxor.u32 %v901, 2147483648
        %v1207 = vxor.u32 %v904, 2147483648
        %v1208 = vxor.u32 %v907, 2147483648
        %v1209 = vxor.u32 %v910, 2147483648
        %v1210 = vxor.u32 %v913, 2147483648
        %v1211 = vxor.u32 %v916, 2147483648
        %v1212 = vxor.u32 %v919, 2147483648
        %v1213 = vxor.u32 %v922, 2147483648
        %v1214 = vxor.u32 %v925, 2147483648
        %v1215 = vxor.u32 %v928, 2147483648
        %v1216 = vxor.u32 %v931, 2147483648
        %v1217 = vxor.u32 %v934, 2147483648
        %v1218 = vxor.u32 %v937, 2147483648
        %v1219 = vxor.u32 %v940, 2147483648
        %v1220 = vxor.u32 %v943, 2147483648
        %v1221 = vxor.u32 %v946, 2147483648
        %v1222 = vxor.u32 %v949, 2147483648
        %v1223 = vxor.u32 %v952, 2147483648
        %v1224 = vxor.u32 %v955, 2147483648
        %v1225 = vxor.u32 %v958, 2147483648
        %v1226 = vxor.u32 %v961, 2147483648
        %v1227 = vxor.u32 %v964, 2147483648
        %v1228 = vxor.u32 %v967, 2147483648
        %v1229 = vxor.u32 %v970, 2147483648
        %v1230 = vxor.u32 %v973, 2147483648
        %v1231 = vxor.u32 %v976, 2147483648
        %v1232 = vxor.u32 %v979, 2147483648
        %v1233 = vxor.u32 %v982, 2147483648
        %v1234 = vxor.u32 %v985, 2147483648
        %v1235 = vxor.u32 %v988, 2147483648
        %v1236 = vxor.u32 %v991, 2147483648
        %v1237 = vxor.u32 %v994, 2147483648
        %v1238 = vxor.u32 %v997, 2147483648
        %v1239 = vxor.u32 %v1000, 2147483648
        %v1240 = vxor.u32 %v1003, 2147483648
        %v1241 = vxor.u32 %v1006, 2147483648
        %v1242 = vxor.u32 %v1009, 2147483648
        %v1243 = vxor.u32 %v1012, 2147483648
        %v1244 = vxor.u32 %v1015, 2147483648
        %v1245 = vxor.u32 %v1018, 2147483648
        %v1246 = vxor.u32 %v1021, 2147483648
        %v1247 = vxor.u32 %v1024, 2147483648
        %v1248 = vxor.u32 %v1027, 2147483648
        %v1249 = vxor.u32 %v1030, 2147483648
        %v1250 = vxor.u32 %v1033, 2147483648
        %v1251 = vxor.u32 %v1036, 2147483648
        %v1252 = vxor.u32 %v1039, 2147483648
        %v1253 = vxor.u32 %v1042, 2147483648
        %v1254 = vxor.u32 %v1045, 2147483648
        %v1255 = vxor.u32 %v1048, 2147483648
        %v1256 = vxor.u32 %v1051, 2147483648
        %v1257 = vxor.u32 %v1054, 2147483648
        %v1258 = vxor.u32 %v1057, 2147483648
        %v1259 = vxor.u32 %v1060, 2147483648
        %v1260 = vxor.u32 %v1063, 2147483648
        %v1261 = vxor.u32 %v1066, 2147483648
        %v1262 = vxor.u32 %v1069, 2147483648
        %v1263 = vxor.u32 %v1072, 2147483648
        %v1264 = vxor.u32 %v1075, 2147483648
        %v1265 = vxor.u32 %v1078, 2147483648
        %v1266 = vxor.u32 %v1081, 2147483648
        %v1267 = vxor.u32 %v1084, 2147483648
        %v1268 = vxor.u32 %v1087, 2147483648
        %v1269 = vxor.u32 %v1090, 2147483648
        %v1270 = vxor.u32 %v1093, 2147483648
        %v1271 = vxor.u32 %v1096, 2147483648
        %v1272 = vxor.u32 %v1099, 2147483648
        %v1273 = vxor.u32 %v1102, 2147483648
        %v1274 = vxor.u32 %v1105, 2147483648
        %v1275 = vxor.u32 %v1108, 2147483648
        %v1276 = vxor.u32 %v1111, 2147483648
        %v1277 = vxor.u32 %v1114, 2147483648
        %v1278 = vxor.u32 %v1117, 2147483648
        %v1279 = vxor.u32 %v1120, 2147483648
        %v1280 = vxor.u32 %v1123, 2147483648
        %v1281 = vxor.u32 %v1126, 2147483648
        %v1282 = vxor.u32 %v1129, 2147483648
        %v1283 = vxor.u32 %v1132, 2147483648
        %v1284 = vxor.u32 %v1135, 2147483648
        %v1285 = vxor.u32 %v1138, 2147483648
        %v1286 = vxor.u32 %v1141, 2147483648
        %v1287 = vxor.u32 %v1144, 2147483648
        %v1288 = vxor.u32 %v1147, 2147483648
        %v1289 = vxor.u32 %v1150, 2147483648
        %v1290 = vxor.u32 %v1153, 2147483648
        %v1291 = vxor.u32 %v1156, 2147483648
        %v1292 = vxor.u32 %v1159, 2147483648
        %v1293 = vxor.u32 %v1162, 2147483648
        %v1294 = vxor.u32 %v1165, 2147483648
        %v1295 = vmul.f32 %v1167, 1.442695
        %v1296 = vpow.pop %v1295
        %v1297 = vmul.f32 %v1168, 1.442695
        %v1298 = vpow.pop %v1297
        %v1299 = vmul.f32 %v1169, 1.442695
        %v1300 = vpow.pop %v1299
        %v1301 = vmul.f32 %v1170, 1.442695
        %v1302 = vpow.pop %v1301
        %v1303 = vmul.f32 %v1171, 1.442695
        %v1304 = vpow.pop %v1303
        %v1305 = vmul.f32 %v1172, 1.442695
        %v1306 = vpow.pop %v1305
        %v1307 = vmul.f32 %v1173, 1.442695
        %v1308 = vpow.pop %v1307
        %v1309 = vmul.f32 %v1174, 1.442695
        %v1310 = vpow.pop %v1309
        %v1311 = vmul.f32 %v1175, 1.442695
        %v1312 = vpow.pop %v1311
        %v1313 = vmul.f32 %v1176, 1.442695
        %v1314 = vpow.pop %v1313
        %v1315 = vmul.f32 %v1177, 1.442695
        %v1316 = vpow.pop %v1315
        %v1317 = vmul.f32 %v1178, 1.442695
        %v1318 = vpow.pop %v1317
        %v1319 = vmul.f32 %v1179, 1.442695
        %v1320 = vpow.pop %v1319
        %v1321 = vmul.f32 %v1180, 1.442695
        %v1322 = vpow.pop %v1321
        %v1323 = vmul.f32 %v1181, 1.442695
        %v1324 = vpow.pop %v1323
        %v1325 = vmul.f32 %v1182, 1.442695
        %v1326 = vpow.pop %v1325
        %v1327 = vmul.f32 %v1183, 1.442695
        %v1328 = vpow.pop %v1327
        %v1329 = vmul.f32 %v1184, 1.442695
        %v1330 = vpow.pop %v1329
        %v1331 = vmul.f32 %v1185, 1.442695
        %v1332 = vpow.pop %v1331
        %v1333 = vmul.f32 %v1186, 1.442695
        %v1334 = vpow.pop %v1333
        %v1335 = vmul.f32 %v1187, 1.442695
        %v1336 = vpow.pop %v1335
        %v1337 = vmul.f32 %v1188, 1.442695
        %v1338 = vpow.pop %v1337
        %v1339 = vmul.f32 %v1189, 1.442695
        %v1340 = vpow.pop %v1339
        %v1341 = vmul.f32 %v1190, 1.442695
        %v1342 = vpow.pop %v1341
        %v1343 = vmul.f32 %v1191, 1.442695
        %v1344 = vpow.pop %v1343
        %v1345 = vmul.f32 %v1192, 1.442695
        %v1346 = vpow.pop %v1345
        %v1347 = vmul.f32 %v1193, 1.442695
        %v1348 = vpow.pop %v1347
        %v1349 = vmul.f32 %v1194, 1.442695
        %v1350 = vpow.pop %v1349
        %v1351 = vmul.f32 %v1195, 1.442695
        %v1352 = vpow.pop %v1351
        %v1353 = vmul.f32 %v1196, 1.442695
        %v1354 = vpow.pop %v1353
        %v1355 = vmul.f32 %v1197, 1.442695
        %v1356 = vpow.pop %v1355
        %v1357 = vmul.f32 %v1198, 1.442695
        %v1358 = vpow.pop %v1357
        %v1359 = vmul.f32 %v1199, 1.442695
        %v1360 = vpow.pop %v1359
        %v1361 = vmul.f32 %v1200, 1.442695
        %v1362 = vpow.pop %v1361
        %v1363 = vmul.f32 %v1201, 1.442695
        %v1364 = vpow.pop %v1363
        %v1365 = vmul.f32 %v1202, 1.442695
        %v1366 = vpow.pop %v1365
        %v1367 = vmul.f32 %v1203, 1.442695
        %v1368 = vpow.pop %v1367
        %v1369 = vmul.f32 %v1204, 1.442695
        %v1370 = vpow.pop %v1369
        %v1371 = vmul.f32 %v1205, 1.442695
        %v1372 = vpow.pop %v1371
        %v1373 = vmul.f32 %v1206, 1.442695
        %v1374 = vpow.pop %v1373
        %v1375 = vmul.f32 %v1207, 1.442695
        %v1376 = vpow.pop %v1375
        %v1377 = vmul.f32 %v1208, 1.442695
        %v1378 = vpow.pop %v1377
        %v1379 = vmul.f32 %v1209, 1.442695
        %v1380 = vpow.pop %v1379
        %v1381 = vmul.f32 %v1210, 1.442695
        %v1382 = vpow.pop %v1381
        %v1383 = vmul.f32 %v1211, 1.442695
        %v1384 = vpow.pop %v1383
        %v1385 = vmul.f32 %v1212, 1.442695
        %v1386 = vpow.pop %v1385
        %v1387 = vmul.f32 %v1213, 1.442695
        %v1388 = vpow.pop %v1387
        %v1389 = vmul.f32 %v1214, 1.442695
        %v1390 = vpow.pop %v1389
        %v1391 = vmul.f32 %v1215, 1.442695
        %v1392 = vpow.pop %v1391
        %v1393 = vmul.f32 %v1216, 1.442695
        %v1394 = vpow.pop %v1393
        %v1395 = vmul.f32 %v1217, 1.442695
        %v1396 = vpow.pop %v1395
        %v1397 = vmul.f32 %v1218, 1.442695
        %v1398 = vpow.pop %v1397
        %v1399 = vmul.f32 %v1219, 1.442695
        %v1400 = vpow.pop %v1399
        %v1401 = vmul.f32 %v1220, 1.442695
        %v1402 = vpow.pop %v1401
        %v1403 = vmul.f32 %v1221, 1.442695
        %v1404 = vpow.pop %v1403
        %v1405 = vmul.f32 %v1222, 1.442695
        %v1406 = vpow.pop %v1405
        %v1407 = vmul.f32 %v1223, 1.442695
        %v1408 = vpow.pop %v1407
        %v1409 = vmul.f32 %v1224, 1.442695
        %v1410 = vpow.pop %v1409
        %v1411 = vmul.f32 %v1225, 1.442695
        %v1412 = vpow.pop %v1411
        %v1413 = vmul.f32 %v1226, 1.442695
        %v1414 = vpow.pop %v1413
        %v1415 = vmul.f32 %v1227, 1.442695
        %v1416 = vpow.pop %v1415
        %v1417 = vmul.f32 %v1228, 1.442695
        %v1418 = vpow.pop %v1417
        %v1419 = vmul.f32 %v1229, 1.442695
        %v1420 = vpow.pop %v1419
        %v1421 = vmul.f32 %v1230, 1.442695
        %v1422 = vpow.pop %v1421
        %v1423 = vmul.f32 %v1231, 1.442695
        %v1424 = vpow.pop %v1423
        %v1425 = vmul.f32 %v1232, 1.442695
        %v1426 = vpow.pop %v1425
        %v1427 = vmul.f32 %v1233, 1.442695
        %v1428 = vpow.pop %v1427
        %v1429 = vmul.f32 %v1234, 1.442695
        %v1430 = vpow.pop %v1429
        %v1431 = vmul.f32 %v1235, 1.442695
        %v1432 = vpow.pop %v1431
        %v1433 = vmul.f32 %v1236, 1.442695
        %v1434 = vpow.pop %v1433
        %v1435 = vmul.f32 %v1237, 1.442695
        %v1436 = vpow.pop %v1435
        %v1437 = vmul.f32 %v1238, 1.442695
        %v1438 = vpow.pop %v1437
        %v1439 = vmul.f32 %v1239, 1.442695
        %v1440 = vpow.pop %v1439
        %v1441 = vmul.f32 %v1240, 1.442695
        %v1442 = vpow.pop %v1441
        %v1443 = vmul.f32 %v1241, 1.442695
        %v1444 = vpow.pop %v1443
        %v1445 = vmul.f32 %v1242, 1.442695
        %v1446 = vpow.pop %v1445
        %v1447 = vmul.f32 %v1243, 1.442695
        %v1448 = vpow.pop %v1447
        %v1449 = vmul.f32 %v1244, 1.442695
        %v1450 = vpow.pop %v1449
        %v1451 = vmul.f32 %v1245, 1.442695
        %v1452 = vpow.pop %v1451
        %v1453 = vmul.f32 %v1246, 1.442695
        %v1454 = vpow.pop %v1453
        %v1455 = vmul.f32 %v1247, 1.442695
        %v1456 = vpow.pop %v1455
        %v1457 = vmul.f32 %v1248, 1.442695
        %v1458 = vpow.pop %v1457
        %v1459 = vmul.f32 %v1249, 1.442695
        %v1460 = vpow.pop %v1459
        %v1461 = vmul.f32 %v1250, 1.442695
        %v1462 = vpow.pop %v1461
        %v1463 = vmul.f32 %v1251, 1.442695
        %v1464 = vpow.pop %v1463
        %v1465 = vmul.f32 %v1252, 1.442695
        %v1466 = vpow.pop %v1465
        %v1467 = vmul.f32 %v1253, 1.442695
        %v1468 = vpow.pop %v1467
        %v1469 = vmul.f32 %v1254, 1.442695
        %v1470 = vpow.pop %v1469
        %v1471 = vmul.f32 %v1255, 1.442695
        %v1472 = vpow.pop %v1471
        %v1473 = vmul.f32 %v1256, 1.442695
        %v1474 = vpow.pop %v1473
        %v1475 = vmul.f32 %v1257, 1.442695
        %v1476 = vpow.pop %v1475
        %v1477 = vmul.f32 %v1258, 1.442695
        %v1478 = vpow.pop %v1477
        %v1479 = vmul.f32 %v1259, 1.442695
        %v1480 = vpow.pop %v1479
        %v1481 = vmul.f32 %v1260, 1.442695
        %v1482 = vpow.pop %v1481
        %v1483 = vmul.f32 %v1261, 1.442695
        %v1484 = vpow.pop %v1483
        %v1485 = vmul.f32 %v1262, 1.442695
        %v1486 = vpow.pop %v1485
        %v1487 = vmul.f32 %v1263, 1.442695
        %v1488 = vpow.pop %v1487
        %v1489 = vmul.f32 %v1264, 1.442695
        %v1490 = vpow.pop %v1489
        %v1491 = vmul.f32 %v1265, 1.442695
        %v1492 = vpow.pop %v1491
        %v1493 = vmul.f32 %v1266, 1.442695
        %v1494 = vpow.pop %v1493
        %v1495 = vmul.f32 %v1267, 1.442695
        %v1496 = vpow.pop %v1495
        %v1497 = vmul.f32 %v1268, 1.442695
        %v1498 = vpow.pop %v1497
        %v1499 = vmul.f32 %v1269, 1.442695
        %v1500 = vpow.pop %v1499
        %v1501 = vmul.f32 %v1270, 1.442695
        %v1502 = vpow.pop %v1501
        %v1503 = vmul.f32 %v1271, 1.442695
        %v1504 = vpow.pop %v1503
        %v1505 = vmul.f32 %v1272, 1.442695
        %v1506 = vpow.pop %v1505
        %v1507 = vmul.f32 %v1273, 1.442695
        %v1508 = vpow.pop %v1507
        %v1509 = vmul.f32 %v1274, 1.442695
        %v1510 = vpow.pop %v1509
        %v1511 = vmul.f32 %v1275, 1.442695
        %v1512 = vpow.pop %v1511
        %v1513 = vmul.f32 %v1276, 1.442695
        %v1514 = vpow.pop %v1513
        %v1515 = vmul.f32 %v1277, 1.442695
        %v1516 = vpow.pop %v1515
        %v1517 = vmul.f32 %v1278, 1.442695
        %v1518 = vpow.pop %v1517
        %v1519 = vmul.f32 %v1279, 1.442695
        %v1520 = vpow.pop %v1519
        %v1521 = vmul.f32 %v1280, 1.442695
        %v1522 = vpow.pop %v1521
        %v1523 = vmul.f32 %v1281, 1.442695
        %v1524 = vpow.pop %v1523
        %v1525 = vmul.f32 %v1282, 1.442695
        %v1526 = vpow.pop %v1525
        %v1527 = vmul.f32 %v1283, 1.442695
        %v1528 = vpow.pop %v1527
        %v1529 = vmul.f32 %v1284, 1.442695
        %v1530 = vpow.pop %v1529
        %v1531 = vmul.f32 %v1285, 1.442695
        %v1532 = vpow.pop %v1531
        %v1533 = vmul.f32 %v1286, 1.442695
        %v1534 = vpow.pop %v1533
        %v1535 = vmul.f32 %v1287, 1.442695
        %v1536 = vpow.pop %v1535
        %v1537 = vmul.f32 %v1288, 1.442695
        %v1538 = vpow.pop %v1537
        %v1539 = vmul.f32 %v1289, 1.442695
        %v1540 = vpow.pop %v1539
        %v1541 = vmul.f32 %v1290, 1.442695
        %v1542 = vpow.pop %v1541
        %v1543 = vmul.f32 %v1291, 1.442695
        %v1544 = vpow.pop %v1543
        %v1545 = vmul.f32 %v1292, 1.442695
        %v1546 = vpow.pop %v1545
        %v1547 = vmul.f32 %v1293, 1.442695
        %v1548 = vpow.pop %v1547
        %v1549 = vmul.f32 %v1294, 1.442695
        %v1550 = vpow.pop %v1549
        %v1551 = vadd.f32 %v1296, 1.0
        %v1552 = vadd.f32 %v1298, 1.0
        %v1553 = vadd.f32 %v1300, 1.0
        %v1554 = vadd.f32 %v1302, 1.0
        %v1555 = vadd.f32 %v1304, 1.0
        %v1556 = vadd.f32 %v1306, 1.0
        %v1557 = vadd.f32 %v1308, 1.0
        %v1558 = vadd.f32 %v1310, 1.0
        %v1559 = vadd.f32 %v1312, 1.0
        %v1560 = vadd.f32 %v1314, 1.0
        %v1561 = vadd.f32 %v1316, 1.0
        %v1562 = vadd.f32 %v1318, 1.0
        %v1563 = vadd.f32 %v1320, 1.0
        %v1564 = vadd.f32 %v1322, 1.0
        %v1565 = vadd.f32 %v1324, 1.0
        %v1566 = vadd.f32 %v1326, 1.0
        %v1567 = vadd.f32 %v1328, 1.0
        %v1568 = vadd.f32 %v1330, 1.0
        %v1569 = vadd.f32 %v1332, 1.0
        %v1570 = vadd.f32 %v1334, 1.0
        %v1571 = vadd.f32 %v1336, 1.0
        %v1572 = vadd.f32 %v1338, 1.0
        %v1573 = vadd.f32 %v1340, 1.0
        %v1574 = vadd.f32 %v1342, 1.0
        %v1575 = vadd.f32 %v1344, 1.0
        %v1576 = vadd.f32 %v1346, 1.0
        %v1577 = vadd.f32 %v1348, 1.0
        %v1578 = vadd.f32 %v1350, 1.0
        %v1579 = vadd.f32 %v1352, 1.0
        %v1580 = vadd.f32 %v1354, 1.0
        %v1581 = vadd.f32 %v1356, 1.0
        %v1582 = vadd.f32 %v1358, 1.0
        %v1583 = vadd.f32 %v1360, 1.0
        %v1584 = vadd.f32 %v1362, 1.0
        %v1585 = vadd.f32 %v1364, 1.0
        %v1586 = vadd.f32 %v1366, 1.0
        %v1587 = vadd.f32 %v1368, 1.0
        %v1588 = vadd.f32 %v1370, 1.0
        %v1589 = vadd.f32 %v1372, 1.0
        %v1590 = vadd.f32 %v1374, 1.0
        %v1591 = vadd.f32 %v1376, 1.0
        %v1592 = vadd.f32 %v1378, 1.0
        %v1593 = vadd.f32 %v1380, 1.0
        %v1594 = vadd.f32 %v1382, 1.0
        %v1595 = vadd.f32 %v1384, 1.0
        %v1596 = vadd.f32 %v1386, 1.0
        %v1597 = vadd.f32 %v1388, 1.0
        %v1598 = vadd.f32 %v1390, 1.0
        %v1599 = vadd.f32 %v1392, 1.0
        %v1600 = vadd.f32 %v1394, 1.0
        %v1601 = vadd.f32 %v1396, 1.0
        %v1602 = vadd.f32 %v1398, 1.0
        %v1603 = vadd.f32 %v1400, 1.0
        %v1604 = vadd.f32 %v1402, 1.0
        %v1605 = vadd.f32 %v1404, 1.0
        %v1606 = vadd.f32 %v1406, 1.0
        %v1607 = vadd.f32 %v1408, 1.0
        %v1608 = vadd.f32 %v1410, 1.0
        %v1609 = vadd.f32 %v1412, 1.0
        %v1610 = vadd.f32 %v1414, 1.0
        %v1611 = vadd.f32 %v1416, 1.0
        %v1612 = vadd.f32 %v1418, 1.0
        %v1613 = vadd.f32 %v1420, 1.0
        %v1614 = vadd.f32 %v1422, 1.0
        %v1615 = vadd.f32 %v1424, 1.0
        %v1616 = vadd.f32 %v1426, 1.0
        %v1617 = vadd.f32 %v1428, 1.0
        %v1618 = vadd.f32 %v1430, 1.0
        %v1619 = vadd.f32 %v1432, 1.0
        %v1620 = vadd.f32 %v1434, 1.0
        %v1621 = vadd.f32 %v1436, 1.0
        %v1622 = vadd.f32 %v1438, 1.0
        %v1623 = vadd.f32 %v1440, 1.0
        %v1624 = vadd.f32 %v1442, 1.0
        %v1625 = vadd.f32 %v1444, 1.0
        %v1626 = vadd.f32 %v1446, 1.0
        %v1627 = vadd.f32 %v1448, 1.0
        %v1628 = vadd.f32 %v1450, 1.0
        %v1629 = vadd.f32 %v1452, 1.0
        %v1630 = vadd.f32 %v1454, 1.0
        %v1631 = vadd.f32 %v1456, 1.0
        %v1632 = vadd.f32 %v1458, 1.0
        %v1633 = vadd.f32 %v1460, 1.0
        %v1634 = vadd.f32 %v1462, 1.0
        %v1635 = vadd.f32 %v1464, 1.0
        %v1636 = vadd.f32 %v1466, 1.0
        %v1637 = vadd.f32 %v1468, 1.0
        %v1638 = vadd.f32 %v1470, 1.0
        %v1639 = vadd.f32 %v1472, 1.0
        %v1640 = vadd.f32 %v1474, 1.0
        %v1641 = vadd.f32 %v1476, 1.0
        %v1642 = vadd.f32 %v1478, 1.0
        %v1643 = vadd.f32 %v1480, 1.0
        %v1644 = vadd.f32 %v1482, 1.0
        %v1645 = vadd.f32 %v1484, 1.0
        %v1646 = vadd.f32 %v1486, 1.0
        %v1647 = vadd.f32 %v1488, 1.0
        %v1648 = vadd.f32 %v1490, 1.0
        %v1649 = vadd.f32 %v1492, 1.0
        %v1650 = vadd.f32 %v1494, 1.0
        %v1651 = vadd.f32 %v1496, 1.0
        %v1652 = vadd.f32 %v1498, 1.0
        %v1653 = vadd.f32 %v1500, 1.0
        %v1654 = vadd.f32 %v1502, 1.0
        %v1655 = vadd.f32 %v1504, 1.0
        %v1656 = vadd.f32 %v1506, 1.0
        %v1657 = vadd.f32 %v1508, 1.0
        %v1658 = vadd.f32 %v1510, 1.0
        %v1659 = vadd.f32 %v1512, 1.0
        %v1660 = vadd.f32 %v1514, 1.0
        %v1661 = vadd.f32 %v1516, 1.0
        %v1662 = vadd.f32 %v1518, 1.0
        %v1663 = vadd.f32 %v1520, 1.0
        %v1664 = vadd.f32 %v1522, 1.0
        %v1665 = vadd.f32 %v1524, 1.0
        %v1666 = vadd.f32 %v1526, 1.0
        %v1667 = vadd.f32 %v1528, 1.0
        %v1668 = vadd.f32 %v1530, 1.0
        %v1669 = vadd.f32 %v1532, 1.0
        %v1670 = vadd.f32 %v1534, 1.0
        %v1671 = vadd.f32 %v1536, 1.0
        %v1672 = vadd.f32 %v1538, 1.0
        %v1673 = vadd.f32 %v1540, 1.0
        %v1674 = vadd.f32 %v1542, 1.0
        %v1675 = vadd.f32 %v1544, 1.0
        %v1676 = vadd.f32 %v1546, 1.0
        %v1677 = vadd.f32 %v1548, 1.0
        %v1678 = vadd.f32 %v1550, 1.0
        %v1679 = vrcp.pop %v1551
        %v1680 = vmul.f32 %v1551, %v1679
        %v1681 = vsub.f32 1.0, %v1680
        %v1682 = vmul.f32 %v1679, %v1681
        %v1683 = vadd.f32 %v1679, %v1682
        %vm1684 = vweird.f32 %v1551
        %vm1685 = vweird.f32 %v1679
        %vm1686 = vmor %vm1684, %vm1685
        %v1687 = vsel %vm1686, %v1679, %v1683
        %v1688 = vand.u32 2147483647, %v1551
        %vm1689 = vcmp.eq.f32.partialorder %v1688, 8.507059e+37
        %v1690 = vand.u32 %v1551, 2147483648
        %v1691 = vor.u32 1.1754944e-38, %v1690
        %v1692 = vsel %vm1689, %v1691, %v1687
        %v1693 = vmul.f32 1.0, %v1692
        %v1694 = vrcp.pop %v1552
        %v1695 = vmul.f32 %v1552, %v1694
        %v1696 = vsub.f32 1.0, %v1695
        %v1697 = vmul.f32 %v1694, %v1696
        %v1698 = vadd.f32 %v1694, %v1697
        %vm1699 = vweird.f32 %v1552
        %vm1700 = vweird.f32 %v1694
        %vm1701 = vmor %vm1699, %vm1700
        %v1702 = vsel %vm1701, %v1694, %v1698
        %v1703 = vand.u32 2147483647, %v1552
        %vm1704 = vcmp.eq.f32.partialorder %v1703, 8.507059e+37
        %v1705 = vand.u32 %v1552, 2147483648
        %v1706 = vor.u32 1.1754944e-38, %v1705
        %v1707 = vsel %vm1704, %v1706, %v1702
        %v1708 = vmul.f32 1.0, %v1707
        %v1709 = vrcp.pop %v1553
        %v1710 = vmul.f32 %v1553, %v1709
        %v1711 = vsub.f32 1.0, %v1710
        %v1712 = vmul.f32 %v1709, %v1711
        %v1713 = vadd.f32 %v1709, %v1712
        %vm1714 = vweird.f32 %v1553
        %vm1715 = vweird.f32 %v1709
        %vm1716 = vmor %vm1714, %vm1715
        %v1717 = vsel %vm1716, %v1709, %v1713
        %v1718 = vand.u32 2147483647, %v1553
        %vm1719 = vcmp.eq.f32.partialorder %v1718, 8.507059e+37
        %v1720 = vand.u32 %v1553, 2147483648
        %v1721 = vor.u32 1.1754944e-38, %v1720
        %v1722 = vsel %vm1719, %v1721, %v1717
        %v1723 = vmul.f32 1.0, %v1722
        %v1724 = vrcp.pop %v1554
        %v1725 = vmul.f32 %v1554, %v1724
        %v1726 = vsub.f32 1.0, %v1725
        %v1727 = vmul.f32 %v1724, %v1726
        %v1728 = vadd.f32 %v1724, %v1727
        %vm1729 = vweird.f32 %v1554
        %vm1730 = vweird.f32 %v1724
        %vm1731 = vmor %vm1729, %vm1730
        %v1732 = vsel %vm1731, %v1724, %v1728
        %v1733 = vand.u32 2147483647, %v1554
        %vm1734 = vcmp.eq.f32.partialorder %v1733, 8.507059e+37
        %v1735 = vand.u32 %v1554, 2147483648
        %v1736 = vor.u32 1.1754944e-38, %v1735
        %v1737 = vsel %vm1734, %v1736, %v1732
        %v1738 = vmul.f32 1.0, %v1737
        %v1739 = vrcp.pop %v1555
        %v1740 = vmul.f32 %v1555, %v1739
        %v1741 = vsub.f32 1.0, %v1740
        %v1742 = vmul.f32 %v1739, %v1741
        %v1743 = vadd.f32 %v1739, %v1742
        %vm1744 = vweird.f32 %v1555
        %vm1745 = vweird.f32 %v1739
        %vm1746 = vmor %vm1744, %vm1745
        %v1747 = vsel %vm1746, %v1739, %v1743
        %v1748 = vand.u32 2147483647, %v1555
        %vm1749 = vcmp.eq.f32.partialorder %v1748, 8.507059e+37
        %v1750 = vand.u32 %v1555, 2147483648
        %v1751 = vor.u32 1.1754944e-38, %v1750
        %v1752 = vsel %vm1749, %v1751, %v1747
        %v1753 = vmul.f32 1.0, %v1752
        %v1754 = vrcp.pop %v1556
        %v1755 = vmul.f32 %v1556, %v1754
        %v1756 = vsub.f32 1.0, %v1755
        %v1757 = vmul.f32 %v1754, %v1756
        %v1758 = vadd.f32 %v1754, %v1757
        %vm1759 = vweird.f32 %v1556
        %vm1760 = vweird.f32 %v1754
        %vm1761 = vmor %vm1759, %vm1760
        %v1762 = vsel %vm1761, %v1754, %v1758
        %v1763 = vand.u32 2147483647, %v1556
        %vm1764 = vcmp.eq.f32.partialorder %v1763, 8.507059e+37
        %v1765 = vand.u32 %v1556, 2147483648
        %v1766 = vor.u32 1.1754944e-38, %v1765
        %v1767 = vsel %vm1764, %v1766, %v1762
        %v1768 = vmul.f32 1.0, %v1767
        %v1769 = vrcp.pop %v1557
        %v1770 = vmul.f32 %v1557, %v1769
        %v1771 = vsub.f32 1.0, %v1770
        %v1772 = vmul.f32 %v1769, %v1771
        %v1773 = vadd.f32 %v1769, %v1772
        %vm1774 = vweird.f32 %v1557
        %vm1775 = vweird.f32 %v1769
        %vm1776 = vmor %vm1774, %vm1775
        %v1777 = vsel %vm1776, %v1769, %v1773
        %v1778 = vand.u32 2147483647, %v1557
        %vm1779 = vcmp.eq.f32.partialorder %v1778, 8.507059e+37
        %v1780 = vand.u32 %v1557, 2147483648
        %v1781 = vor.u32 1.1754944e-38, %v1780
        %v1782 = vsel %vm1779, %v1781, %v1777
        %v1783 = vmul.f32 1.0, %v1782
        %v1784 = vrcp.pop %v1558
        %v1785 = vmul.f32 %v1558, %v1784
        %v1786 = vsub.f32 1.0, %v1785
        %v1787 = vmul.f32 %v1784, %v1786
        %v1788 = vadd.f32 %v1784, %v1787
        %vm1789 = vweird.f32 %v1558
        %vm1790 = vweird.f32 %v1784
        %vm1791 = vmor %vm1789, %vm1790
        %v1792 = vsel %vm1791, %v1784, %v1788
        %v1793 = vand.u32 2147483647, %v1558
        %vm1794 = vcmp.eq.f32.partialorder %v1793, 8.507059e+37
        %v1795 = vand.u32 %v1558, 2147483648
        %v1796 = vor.u32 1.1754944e-38, %v1795
        %v1797 = vsel %vm1794, %v1796, %v1792
        %v1798 = vmul.f32 1.0, %v1797
        %v1799 = vrcp.pop %v1559
        %v1800 = vmul.f32 %v1559, %v1799
        %v1801 = vsub.f32 1.0, %v1800
        %v1802 = vmul.f32 %v1799, %v1801
        %v1803 = vadd.f32 %v1799, %v1802
        %vm1804 = vweird.f32 %v1559
        %vm1805 = vweird.f32 %v1799
        %vm1806 = vmor %vm1804, %vm1805
        %v1807 = vsel %vm1806, %v1799, %v1803
        %v1808 = vand.u32 2147483647, %v1559
        %vm1809 = vcmp.eq.f32.partialorder %v1808, 8.507059e+37
        %v1810 = vand.u32 %v1559, 2147483648
        %v1811 = vor.u32 1.1754944e-38, %v1810
        %v1812 = vsel %vm1809, %v1811, %v1807
        %v1813 = vmul.f32 1.0, %v1812
        %v1814 = vrcp.pop %v1560
        %v1815 = vmul.f32 %v1560, %v1814
        %v1816 = vsub.f32 1.0, %v1815
        %v1817 = vmul.f32 %v1814, %v1816
        %v1818 = vadd.f32 %v1814, %v1817
        %vm1819 = vweird.f32 %v1560
        %vm1820 = vweird.f32 %v1814
        %vm1821 = vmor %vm1819, %vm1820
        %v1822 = vsel %vm1821, %v1814, %v1818
        %v1823 = vand.u32 2147483647, %v1560
        %vm1824 = vcmp.eq.f32.partialorder %v1823, 8.507059e+37
        %v1825 = vand.u32 %v1560, 2147483648
        %v1826 = vor.u32 1.1754944e-38, %v1825
        %v1827 = vsel %vm1824, %v1826, %v1822
        %v1828 = vmul.f32 1.0, %v1827
        %v1829 = vrcp.pop %v1561
        %v1830 = vmul.f32 %v1561, %v1829
        %v1831 = vsub.f32 1.0, %v1830
        %v1832 = vmul.f32 %v1829, %v1831
        %v1833 = vadd.f32 %v1829, %v1832
        %vm1834 = vweird.f32 %v1561
        %vm1835 = vweird.f32 %v1829
        %vm1836 = vmor %vm1834, %vm1835
        %v1837 = vsel %vm1836, %v1829, %v1833
        %v1838 = vand.u32 2147483647, %v1561
        %vm1839 = vcmp.eq.f32.partialorder %v1838, 8.507059e+37
        %v1840 = vand.u32 %v1561, 2147483648
        %v1841 = vor.u32 1.1754944e-38, %v1840
        %v1842 = vsel %vm1839, %v1841, %v1837
        %v1843 = vmul.f32 1.0, %v1842
        %v1844 = vrcp.pop %v1562
        %v1845 = vmul.f32 %v1562, %v1844
        %v1846 = vsub.f32 1.0, %v1845
        %v1847 = vmul.f32 %v1844, %v1846
        %v1848 = vadd.f32 %v1844, %v1847
        %vm1849 = vweird.f32 %v1562
        %vm1850 = vweird.f32 %v1844
        %vm1851 = vmor %vm1849, %vm1850
        %v1852 = vsel %vm1851, %v1844, %v1848
        %v1853 = vand.u32 2147483647, %v1562
        %vm1854 = vcmp.eq.f32.partialorder %v1853, 8.507059e+37
        %v1855 = vand.u32 %v1562, 2147483648
        %v1856 = vor.u32 1.1754944e-38, %v1855
        %v1857 = vsel %vm1854, %v1856, %v1852
        %v1858 = vmul.f32 1.0, %v1857
        %v1859 = vrcp.pop %v1563
        %v1860 = vmul.f32 %v1563, %v1859
        %v1861 = vsub.f32 1.0, %v1860
        %v1862 = vmul.f32 %v1859, %v1861
        %v1863 = vadd.f32 %v1859, %v1862
        %vm1864 = vweird.f32 %v1563
        %vm1865 = vweird.f32 %v1859
        %vm1866 = vmor %vm1864, %vm1865
        %v1867 = vsel %vm1866, %v1859, %v1863
        %v1868 = vand.u32 2147483647, %v1563
        %vm1869 = vcmp.eq.f32.partialorder %v1868, 8.507059e+37
        %v1870 = vand.u32 %v1563, 2147483648
        %v1871 = vor.u32 1.1754944e-38, %v1870
        %v1872 = vsel %vm1869, %v1871, %v1867
        %v1873 = vmul.f32 1.0, %v1872
        %v1874 = vrcp.pop %v1564
        %v1875 = vmul.f32 %v1564, %v1874
        %v1876 = vsub.f32 1.0, %v1875
        %v1877 = vmul.f32 %v1874, %v1876
        %v1878 = vadd.f32 %v1874, %v1877
        %vm1879 = vweird.f32 %v1564
        %vm1880 = vweird.f32 %v1874
        %vm1881 = vmor %vm1879, %vm1880
        %v1882 = vsel %vm1881, %v1874, %v1878
        %v1883 = vand.u32 2147483647, %v1564
        %vm1884 = vcmp.eq.f32.partialorder %v1883, 8.507059e+37
        %v1885 = vand.u32 %v1564, 2147483648
        %v1886 = vor.u32 1.1754944e-38, %v1885
        %v1887 = vsel %vm1884, %v1886, %v1882
        %v1888 = vmul.f32 1.0, %v1887
        %v1889 = vrcp.pop %v1565
        %v1890 = vmul.f32 %v1565, %v1889
        %v1891 = vsub.f32 1.0, %v1890
        %v1892 = vmul.f32 %v1889, %v1891
        %v1893 = vadd.f32 %v1889, %v1892
        %vm1894 = vweird.f32 %v1565
        %vm1895 = vweird.f32 %v1889
        %vm1896 = vmor %vm1894, %vm1895
        %v1897 = vsel %vm1896, %v1889, %v1893
        %v1898 = vand.u32 2147483647, %v1565
        %vm1899 = vcmp.eq.f32.partialorder %v1898, 8.507059e+37
        %v1900 = vand.u32 %v1565, 2147483648
        %v1901 = vor.u32 1.1754944e-38, %v1900
        %v1902 = vsel %vm1899, %v1901, %v1897
        %v1903 = vmul.f32 1.0, %v1902
        %v1904 = vrcp.pop %v1566
        %v1905 = vmul.f32 %v1566, %v1904
        %v1906 = vsub.f32 1.0, %v1905
        %v1907 = vmul.f32 %v1904, %v1906
        %v1908 = vadd.f32 %v1904, %v1907
        %vm1909 = vweird.f32 %v1566
        %vm1910 = vweird.f32 %v1904
        %vm1911 = vmor %vm1909, %vm1910
        %v1912 = vsel %vm1911, %v1904, %v1908
        %v1913 = vand.u32 2147483647, %v1566
        %vm1914 = vcmp.eq.f32.partialorder %v1913, 8.507059e+37
        %v1915 = vand.u32 %v1566, 2147483648
        %v1916 = vor.u32 1.1754944e-38, %v1915
        %v1917 = vsel %vm1914, %v1916, %v1912
        %v1918 = vmul.f32 1.0, %v1917
        %v1919 = vrcp.pop %v1567
        %v1920 = vmul.f32 %v1567, %v1919
        %v1921 = vsub.f32 1.0, %v1920
        %v1922 = vmul.f32 %v1919, %v1921
        %v1923 = vadd.f32 %v1919, %v1922
        %vm1924 = vweird.f32 %v1567
        %vm1925 = vweird.f32 %v1919
        %vm1926 = vmor %vm1924, %vm1925
        %v1927 = vsel %vm1926, %v1919, %v1923
        %v1928 = vand.u32 2147483647, %v1567
        %vm1929 = vcmp.eq.f32.partialorder %v1928, 8.507059e+37
        %v1930 = vand.u32 %v1567, 2147483648
        %v1931 = vor.u32 1.1754944e-38, %v1930
        %v1932 = vsel %vm1929, %v1931, %v1927
        %v1933 = vmul.f32 1.0, %v1932
        %v1934 = vrcp.pop %v1568
        %v1935 = vmul.f32 %v1568, %v1934
        %v1936 = vsub.f32 1.0, %v1935
        %v1937 = vmul.f32 %v1934, %v1936
        %v1938 = vadd.f32 %v1934, %v1937
        %vm1939 = vweird.f32 %v1568
        %vm1940 = vweird.f32 %v1934
        %vm1941 = vmor %vm1939, %vm1940
        %v1942 = vsel %vm1941, %v1934, %v1938
        %v1943 = vand.u32 2147483647, %v1568
        %vm1944 = vcmp.eq.f32.partialorder %v1943, 8.507059e+37
        %v1945 = vand.u32 %v1568, 2147483648
        %v1946 = vor.u32 1.1754944e-38, %v1945
        %v1947 = vsel %vm1944, %v1946, %v1942
        %v1948 = vmul.f32 1.0, %v1947
        %v1949 = vrcp.pop %v1569
        %v1950 = vmul.f32 %v1569, %v1949
        %v1951 = vsub.f32 1.0, %v1950
        %v1952 = vmul.f32 %v1949, %v1951
        %v1953 = vadd.f32 %v1949, %v1952
        %vm1954 = vweird.f32 %v1569
        %vm1955 = vweird.f32 %v1949
        %vm1956 = vmor %vm1954, %vm1955
        %v1957 = vsel %vm1956, %v1949, %v1953
        %v1958 = vand.u32 2147483647, %v1569
        %vm1959 = vcmp.eq.f32.partialorder %v1958, 8.507059e+37
        %v1960 = vand.u32 %v1569, 2147483648
        %v1961 = vor.u32 1.1754944e-38, %v1960
        %v1962 = vsel %vm1959, %v1961, %v1957
        %v1963 = vmul.f32 1.0, %v1962
        %v1964 = vrcp.pop %v1570
        %v1965 = vmul.f32 %v1570, %v1964
        %v1966 = vsub.f32 1.0, %v1965
        %v1967 = vmul.f32 %v1964, %v1966
        %v1968 = vadd.f32 %v1964, %v1967
        %vm1969 = vweird.f32 %v1570
        %vm1970 = vweird.f32 %v1964
        %vm1971 = vmor %vm1969, %vm1970
        %v1972 = vsel %vm1971, %v1964, %v1968
        %v1973 = vand.u32 2147483647, %v1570
        %vm1974 = vcmp.eq.f32.partialorder %v1973, 8.507059e+37
        %v1975 = vand.u32 %v1570, 2147483648
        %v1976 = vor.u32 1.1754944e-38, %v1975
        %v1977 = vsel %vm1974, %v1976, %v1972
        %v1978 = vmul.f32 1.0, %v1977
        %v1979 = vrcp.pop %v1571
        %v1980 = vmul.f32 %v1571, %v1979
        %v1981 = vsub.f32 1.0, %v1980
        %v1982 = vmul.f32 %v1979, %v1981
        %v1983 = vadd.f32 %v1979, %v1982
        %vm1984 = vweird.f32 %v1571
        %vm1985 = vweird.f32 %v1979
        %vm1986 = vmor %vm1984, %vm1985
        %v1987 = vsel %vm1986, %v1979, %v1983
        %v1988 = vand.u32 2147483647, %v1571
        %vm1989 = vcmp.eq.f32.partialorder %v1988, 8.507059e+37
        %v1990 = vand.u32 %v1571, 2147483648
        %v1991 = vor.u32 1.1754944e-38, %v1990
        %v1992 = vsel %vm1989, %v1991, %v1987
        %v1993 = vmul.f32 1.0, %v1992
        %v1994 = vrcp.pop %v1572
        %v1995 = vmul.f32 %v1572, %v1994
        %v1996 = vsub.f32 1.0, %v1995
        %v1997 = vmul.f32 %v1994, %v1996
        %v1998 = vadd.f32 %v1994, %v1997
        %vm1999 = vweird.f32 %v1572
        %vm2000 = vweird.f32 %v1994
        %vm2001 = vmor %vm1999, %vm2000
        %v2002 = vsel %vm2001, %v1994, %v1998
        %v2003 = vand.u32 2147483647, %v1572
        %vm2004 = vcmp.eq.f32.partialorder %v2003, 8.507059e+37
        %v2005 = vand.u32 %v1572, 2147483648
        %v2006 = vor.u32 1.1754944e-38, %v2005
        %v2007 = vsel %vm2004, %v2006, %v2002
        %v2008 = vmul.f32 1.0, %v2007
        %v2009 = vrcp.pop %v1573
        %v2010 = vmul.f32 %v1573, %v2009
        %v2011 = vsub.f32 1.0, %v2010
        %v2012 = vmul.f32 %v2009, %v2011
        %v2013 = vadd.f32 %v2009, %v2012
        %vm2014 = vweird.f32 %v1573
        %vm2015 = vweird.f32 %v2009
        %vm2016 = vmor %vm2014, %vm2015
        %v2017 = vsel %vm2016, %v2009, %v2013
        %v2018 = vand.u32 2147483647, %v1573
        %vm2019 = vcmp.eq.f32.partialorder %v2018, 8.507059e+37
        %v2020 = vand.u32 %v1573, 2147483648
        %v2021 = vor.u32 1.1754944e-38, %v2020
        %v2022 = vsel %vm2019, %v2021, %v2017
        %v2023 = vmul.f32 1.0, %v2022
        %v2024 = vrcp.pop %v1574
        %v2025 = vmul.f32 %v1574, %v2024
        %v2026 = vsub.f32 1.0, %v2025
        %v2027 = vmul.f32 %v2024, %v2026
        %v2028 = vadd.f32 %v2024, %v2027
        %vm2029 = vweird.f32 %v1574
        %vm2030 = vweird.f32 %v2024
        %vm2031 = vmor %vm2029, %vm2030
        %v2032 = vsel %vm2031, %v2024, %v2028
        %v2033 = vand.u32 2147483647, %v1574
        %vm2034 = vcmp.eq.f32.partialorder %v2033, 8.507059e+37
        %v2035 = vand.u32 %v1574, 2147483648
        %v2036 = vor.u32 1.1754944e-38, %v2035
        %v2037 = vsel %vm2034, %v2036, %v2032
        %v2038 = vmul.f32 1.0, %v2037
        %v2039 = vrcp.pop %v1575
        %v2040 = vmul.f32 %v1575, %v2039
        %v2041 = vsub.f32 1.0, %v2040
        %v2042 = vmul.f32 %v2039, %v2041
        %v2043 = vadd.f32 %v2039, %v2042
        %vm2044 = vweird.f32 %v1575
        %vm2045 = vweird.f32 %v2039
        %vm2046 = vmor %vm2044, %vm2045
        %v2047 = vsel %vm2046, %v2039, %v2043
        %v2048 = vand.u32 2147483647, %v1575
        %vm2049 = vcmp.eq.f32.partialorder %v2048, 8.507059e+37
        %v2050 = vand.u32 %v1575, 2147483648
        %v2051 = vor.u32 1.1754944e-38, %v2050
        %v2052 = vsel %vm2049, %v2051, %v2047
        %v2053 = vmul.f32 1.0, %v2052
        %v2054 = vrcp.pop %v1576
        %v2055 = vmul.f32 %v1576, %v2054
        %v2056 = vsub.f32 1.0, %v2055
        %v2057 = vmul.f32 %v2054, %v2056
        %v2058 = vadd.f32 %v2054, %v2057
        %vm2059 = vweird.f32 %v1576
        %vm2060 = vweird.f32 %v2054
        %vm2061 = vmor %vm2059, %vm2060
        %v2062 = vsel %vm2061, %v2054, %v2058
        %v2063 = vand.u32 2147483647, %v1576
        %vm2064 = vcmp.eq.f32.partialorder %v2063, 8.507059e+37
        %v2065 = vand.u32 %v1576, 2147483648
        %v2066 = vor.u32 1.1754944e-38, %v2065
        %v2067 = vsel %vm2064, %v2066, %v2062
        %v2068 = vmul.f32 1.0, %v2067
        %v2069 = vrcp.pop %v1577
        %v2070 = vmul.f32 %v1577, %v2069
        %v2071 = vsub.f32 1.0, %v2070
        %v2072 = vmul.f32 %v2069, %v2071
        %v2073 = vadd.f32 %v2069, %v2072
        %vm2074 = vweird.f32 %v1577
        %vm2075 = vweird.f32 %v2069
        %vm2076 = vmor %vm2074, %vm2075
        %v2077 = vsel %vm2076, %v2069, %v2073
        %v2078 = vand.u32 2147483647, %v1577
        %vm2079 = vcmp.eq.f32.partialorder %v2078, 8.507059e+37
        %v2080 = vand.u32 %v1577, 2147483648
        %v2081 = vor.u32 1.1754944e-38, %v2080
        %v2082 = vsel %vm2079, %v2081, %v2077
        %v2083 = vmul.f32 1.0, %v2082
        %v2084 = vrcp.pop %v1578
        %v2085 = vmul.f32 %v1578, %v2084
        %v2086 = vsub.f32 1.0, %v2085
        %v2087 = vmul.f32 %v2084, %v2086
        %v2088 = vadd.f32 %v2084, %v2087
        %vm2089 = vweird.f32 %v1578
        %vm2090 = vweird.f32 %v2084
        %vm2091 = vmor %vm2089, %vm2090
        %v2092 = vsel %vm2091, %v2084, %v2088
        %v2093 = vand.u32 2147483647, %v1578
        %vm2094 = vcmp.eq.f32.partialorder %v2093, 8.507059e+37
        %v2095 = vand.u32 %v1578, 2147483648
        %v2096 = vor.u32 1.1754944e-38, %v2095
        %v2097 = vsel %vm2094, %v2096, %v2092
        %v2098 = vmul.f32 1.0, %v2097
        %v2099 = vrcp.pop %v1579
        %v2100 = vmul.f32 %v1579, %v2099
        %v2101 = vsub.f32 1.0, %v2100
        %v2102 = vmul.f32 %v2099, %v2101
        %v2103 = vadd.f32 %v2099, %v2102
        %vm2104 = vweird.f32 %v1579
        %vm2105 = vweird.f32 %v2099
        %vm2106 = vmor %vm2104, %vm2105
        %v2107 = vsel %vm2106, %v2099, %v2103
        %v2108 = vand.u32 2147483647, %v1579
        %vm2109 = vcmp.eq.f32.partialorder %v2108, 8.507059e+37
        %v2110 = vand.u32 %v1579, 2147483648
        %v2111 = vor.u32 1.1754944e-38, %v2110
        %v2112 = vsel %vm2109, %v2111, %v2107
        %v2113 = vmul.f32 1.0, %v2112
        %v2114 = vrcp.pop %v1580
        %v2115 = vmul.f32 %v1580, %v2114
        %v2116 = vsub.f32 1.0, %v2115
        %v2117 = vmul.f32 %v2114, %v2116
        %v2118 = vadd.f32 %v2114, %v2117
        %vm2119 = vweird.f32 %v1580
        %vm2120 = vweird.f32 %v2114
        %vm2121 = vmor %vm2119, %vm2120
        %v2122 = vsel %vm2121, %v2114, %v2118
        %v2123 = vand.u32 2147483647, %v1580
        %vm2124 = vcmp.eq.f32.partialorder %v2123, 8.507059e+37
        %v2125 = vand.u32 %v1580, 2147483648
        %v2126 = vor.u32 1.1754944e-38, %v2125
        %v2127 = vsel %vm2124, %v2126, %v2122
        %v2128 = vmul.f32 1.0, %v2127
        %v2129 = vrcp.pop %v1581
        %v2130 = vmul.f32 %v1581, %v2129
        %v2131 = vsub.f32 1.0, %v2130
        %v2132 = vmul.f32 %v2129, %v2131
        %v2133 = vadd.f32 %v2129, %v2132
        %vm2134 = vweird.f32 %v1581
        %vm2135 = vweird.f32 %v2129
        %vm2136 = vmor %vm2134, %vm2135
        %v2137 = vsel %vm2136, %v2129, %v2133
        %v2138 = vand.u32 2147483647, %v1581
        %vm2139 = vcmp.eq.f32.partialorder %v2138, 8.507059e+37
        %v2140 = vand.u32 %v1581, 2147483648
        %v2141 = vor.u32 1.1754944e-38, %v2140
        %v2142 = vsel %vm2139, %v2141, %v2137
        %v2143 = vmul.f32 1.0, %v2142
        %v2144 = vrcp.pop %v1582
        %v2145 = vmul.f32 %v1582, %v2144
        %v2146 = vsub.f32 1.0, %v2145
        %v2147 = vmul.f32 %v2144, %v2146
        %v2148 = vadd.f32 %v2144, %v2147
        %vm2149 = vweird.f32 %v1582
        %vm2150 = vweird.f32 %v2144
        %vm2151 = vmor %vm2149, %vm2150
        %v2152 = vsel %vm2151, %v2144, %v2148
        %v2153 = vand.u32 2147483647, %v1582
        %vm2154 = vcmp.eq.f32.partialorder %v2153, 8.507059e+37
        %v2155 = vand.u32 %v1582, 2147483648
        %v2156 = vor.u32 1.1754944e-38, %v2155
        %v2157 = vsel %vm2154, %v2156, %v2152
        %v2158 = vmul.f32 1.0, %v2157
        %v2159 = vrcp.pop %v1583
        %v2160 = vmul.f32 %v1583, %v2159
        %v2161 = vsub.f32 1.0, %v2160
        %v2162 = vmul.f32 %v2159, %v2161
        %v2163 = vadd.f32 %v2159, %v2162
        %vm2164 = vweird.f32 %v1583
        %vm2165 = vweird.f32 %v2159
        %vm2166 = vmor %vm2164, %vm2165
        %v2167 = vsel %vm2166, %v2159, %v2163
        %v2168 = vand.u32 2147483647, %v1583
        %vm2169 = vcmp.eq.f32.partialorder %v2168, 8.507059e+37
        %v2170 = vand.u32 %v1583, 2147483648
        %v2171 = vor.u32 1.1754944e-38, %v2170
        %v2172 = vsel %vm2169, %v2171, %v2167
        %v2173 = vmul.f32 1.0, %v2172
        %v2174 = vrcp.pop %v1584
        %v2175 = vmul.f32 %v1584, %v2174
        %v2176 = vsub.f32 1.0, %v2175
        %v2177 = vmul.f32 %v2174, %v2176
        %v2178 = vadd.f32 %v2174, %v2177
        %vm2179 = vweird.f32 %v1584
        %vm2180 = vweird.f32 %v2174
        %vm2181 = vmor %vm2179, %vm2180
        %v2182 = vsel %vm2181, %v2174, %v2178
        %v2183 = vand.u32 2147483647, %v1584
        %vm2184 = vcmp.eq.f32.partialorder %v2183, 8.507059e+37
        %v2185 = vand.u32 %v1584, 2147483648
        %v2186 = vor.u32 1.1754944e-38, %v2185
        %v2187 = vsel %vm2184, %v2186, %v2182
        %v2188 = vmul.f32 1.0, %v2187
        %v2189 = vrcp.pop %v1585
        %v2190 = vmul.f32 %v1585, %v2189
        %v2191 = vsub.f32 1.0, %v2190
        %v2192 = vmul.f32 %v2189, %v2191
        %v2193 = vadd.f32 %v2189, %v2192
        %vm2194 = vweird.f32 %v1585
        %vm2195 = vweird.f32 %v2189
        %vm2196 = vmor %vm2194, %vm2195
        %v2197 = vsel %vm2196, %v2189, %v2193
        %v2198 = vand.u32 2147483647, %v1585
        %vm2199 = vcmp.eq.f32.partialorder %v2198, 8.507059e+37
        %v2200 = vand.u32 %v1585, 2147483648
        %v2201 = vor.u32 1.1754944e-38, %v2200
        %v2202 = vsel %vm2199, %v2201, %v2197
        %v2203 = vmul.f32 1.0, %v2202
        %v2204 = vrcp.pop %v1586
        %v2205 = vmul.f32 %v1586, %v2204
        %v2206 = vsub.f32 1.0, %v2205
        %v2207 = vmul.f32 %v2204, %v2206
        %v2208 = vadd.f32 %v2204, %v2207
        %vm2209 = vweird.f32 %v1586
        %vm2210 = vweird.f32 %v2204
        %vm2211 = vmor %vm2209, %vm2210
        %v2212 = vsel %vm2211, %v2204, %v2208
        %v2213 = vand.u32 2147483647, %v1586
        %vm2214 = vcmp.eq.f32.partialorder %v2213, 8.507059e+37
        %v2215 = vand.u32 %v1586, 2147483648
        %v2216 = vor.u32 1.1754944e-38, %v2215
        %v2217 = vsel %vm2214, %v2216, %v2212
        %v2218 = vmul.f32 1.0, %v2217
        %v2219 = vrcp.pop %v1587
        %v2220 = vmul.f32 %v1587, %v2219
        %v2221 = vsub.f32 1.0, %v2220
        %v2222 = vmul.f32 %v2219, %v2221
        %v2223 = vadd.f32 %v2219, %v2222
        %vm2224 = vweird.f32 %v1587
        %vm2225 = vweird.f32 %v2219
        %vm2226 = vmor %vm2224, %vm2225
        %v2227 = vsel %vm2226, %v2219, %v2223
        %v2228 = vand.u32 2147483647, %v1587
        %vm2229 = vcmp.eq.f32.partialorder %v2228, 8.507059e+37
        %v2230 = vand.u32 %v1587, 2147483648
        %v2231 = vor.u32 1.1754944e-38, %v2230
        %v2232 = vsel %vm2229, %v2231, %v2227
        %v2233 = vmul.f32 1.0, %v2232
        %v2234 = vrcp.pop %v1588
        %v2235 = vmul.f32 %v1588, %v2234
        %v2236 = vsub.f32 1.0, %v2235
        %v2237 = vmul.f32 %v2234, %v2236
        %v2238 = vadd.f32 %v2234, %v2237
        %vm2239 = vweird.f32 %v1588
        %vm2240 = vweird.f32 %v2234
        %vm2241 = vmor %vm2239, %vm2240
        %v2242 = vsel %vm2241, %v2234, %v2238
        %v2243 = vand.u32 2147483647, %v1588
        %vm2244 = vcmp.eq.f32.partialorder %v2243, 8.507059e+37
        %v2245 = vand.u32 %v1588, 2147483648
        %v2246 = vor.u32 1.1754944e-38, %v2245
        %v2247 = vsel %vm2244, %v2246, %v2242
        %v2248 = vmul.f32 1.0, %v2247
        %v2249 = vrcp.pop %v1589
        %v2250 = vmul.f32 %v1589, %v2249
        %v2251 = vsub.f32 1.0, %v2250
        %v2252 = vmul.f32 %v2249, %v2251
        %v2253 = vadd.f32 %v2249, %v2252
        %vm2254 = vweird.f32 %v1589
        %vm2255 = vweird.f32 %v2249
        %vm2256 = vmor %vm2254, %vm2255
        %v2257 = vsel %vm2256, %v2249, %v2253
        %v2258 = vand.u32 2147483647, %v1589
        %vm2259 = vcmp.eq.f32.partialorder %v2258, 8.507059e+37
        %v2260 = vand.u32 %v1589, 2147483648
        %v2261 = vor.u32 1.1754944e-38, %v2260
        %v2262 = vsel %vm2259, %v2261, %v2257
        %v2263 = vmul.f32 1.0, %v2262
        %v2264 = vrcp.pop %v1590
        %v2265 = vmul.f32 %v1590, %v2264
        %v2266 = vsub.f32 1.0, %v2265
        %v2267 = vmul.f32 %v2264, %v2266
        %v2268 = vadd.f32 %v2264, %v2267
        %vm2269 = vweird.f32 %v1590
        %vm2270 = vweird.f32 %v2264
        %vm2271 = vmor %vm2269, %vm2270
        %v2272 = vsel %vm2271, %v2264, %v2268
        %v2273 = vand.u32 2147483647, %v1590
        %vm2274 = vcmp.eq.f32.partialorder %v2273, 8.507059e+37
        %v2275 = vand.u32 %v1590, 2147483648
        %v2276 = vor.u32 1.1754944e-38, %v2275
        %v2277 = vsel %vm2274, %v2276, %v2272
        %v2278 = vmul.f32 1.0, %v2277
        %v2279 = vrcp.pop %v1591
        %v2280 = vmul.f32 %v1591, %v2279
        %v2281 = vsub.f32 1.0, %v2280
        %v2282 = vmul.f32 %v2279, %v2281
        %v2283 = vadd.f32 %v2279, %v2282
        %vm2284 = vweird.f32 %v1591
        %vm2285 = vweird.f32 %v2279
        %vm2286 = vmor %vm2284, %vm2285
        %v2287 = vsel %vm2286, %v2279, %v2283
        %v2288 = vand.u32 2147483647, %v1591
        %vm2289 = vcmp.eq.f32.partialorder %v2288, 8.507059e+37
        %v2290 = vand.u32 %v1591, 2147483648
        %v2291 = vor.u32 1.1754944e-38, %v2290
        %v2292 = vsel %vm2289, %v2291, %v2287
        %v2293 = vmul.f32 1.0, %v2292
        %v2294 = vrcp.pop %v1592
        %v2295 = vmul.f32 %v1592, %v2294
        %v2296 = vsub.f32 1.0, %v2295
        %v2297 = vmul.f32 %v2294, %v2296
        %v2298 = vadd.f32 %v2294, %v2297
        %vm2299 = vweird.f32 %v1592
        %vm2300 = vweird.f32 %v2294
        %vm2301 = vmor %vm2299, %vm2300
        %v2302 = vsel %vm2301, %v2294, %v2298
        %v2303 = vand.u32 2147483647, %v1592
        %vm2304 = vcmp.eq.f32.partialorder %v2303, 8.507059e+37
        %v2305 = vand.u32 %v1592, 2147483648
        %v2306 = vor.u32 1.1754944e-38, %v2305
        %v2307 = vsel %vm2304, %v2306, %v2302
        %v2308 = vmul.f32 1.0, %v2307
        %v2309 = vrcp.pop %v1593
        %v2310 = vmul.f32 %v1593, %v2309
        %v2311 = vsub.f32 1.0, %v2310
        %v2312 = vmul.f32 %v2309, %v2311
        %v2313 = vadd.f32 %v2309, %v2312
        %vm2314 = vweird.f32 %v1593
        %vm2315 = vweird.f32 %v2309
        %vm2316 = vmor %vm2314, %vm2315
        %v2317 = vsel %vm2316, %v2309, %v2313
        %v2318 = vand.u32 2147483647, %v1593
        %vm2319 = vcmp.eq.f32.partialorder %v2318, 8.507059e+37
        %v2320 = vand.u32 %v1593, 2147483648
        %v2321 = vor.u32 1.1754944e-38, %v2320
        %v2322 = vsel %vm2319, %v2321, %v2317
        %v2323 = vmul.f32 1.0, %v2322
        %v2324 = vrcp.pop %v1594
        %v2325 = vmul.f32 %v1594, %v2324
        %v2326 = vsub.f32 1.0, %v2325
        %v2327 = vmul.f32 %v2324, %v2326
        %v2328 = vadd.f32 %v2324, %v2327
        %vm2329 = vweird.f32 %v1594
        %vm2330 = vweird.f32 %v2324
        %vm2331 = vmor %vm2329, %vm2330
        %v2332 = vsel %vm2331, %v2324, %v2328
        %v2333 = vand.u32 2147483647, %v1594
        %vm2334 = vcmp.eq.f32.partialorder %v2333, 8.507059e+37
        %v2335 = vand.u32 %v1594, 2147483648
        %v2336 = vor.u32 1.1754944e-38, %v2335
        %v2337 = vsel %vm2334, %v2336, %v2332
        %v2338 = vmul.f32 1.0, %v2337
        %v2339 = vrcp.pop %v1595
        %v2340 = vmul.f32 %v1595, %v2339
        %v2341 = vsub.f32 1.0, %v2340
        %v2342 = vmul.f32 %v2339, %v2341
        %v2343 = vadd.f32 %v2339, %v2342
        %vm2344 = vweird.f32 %v1595
        %vm2345 = vweird.f32 %v2339
        %vm2346 = vmor %vm2344, %vm2345
        %v2347 = vsel %vm2346, %v2339, %v2343
        %v2348 = vand.u32 2147483647, %v1595
        %vm2349 = vcmp.eq.f32.partialorder %v2348, 8.507059e+37
        %v2350 = vand.u32 %v1595, 2147483648
        %v2351 = vor.u32 1.1754944e-38, %v2350
        %v2352 = vsel %vm2349, %v2351, %v2347
        %v2353 = vmul.f32 1.0, %v2352
        %v2354 = vrcp.pop %v1596
        %v2355 = vmul.f32 %v1596, %v2354
        %v2356 = vsub.f32 1.0, %v2355
        %v2357 = vmul.f32 %v2354, %v2356
        %v2358 = vadd.f32 %v2354, %v2357
        %vm2359 = vweird.f32 %v1596
        %vm2360 = vweird.f32 %v2354
        %vm2361 = vmor %vm2359, %vm2360
        %v2362 = vsel %vm2361, %v2354, %v2358
        %v2363 = vand.u32 2147483647, %v1596
        %vm2364 = vcmp.eq.f32.partialorder %v2363, 8.507059e+37
        %v2365 = vand.u32 %v1596, 2147483648
        %v2366 = vor.u32 1.1754944e-38, %v2365
        %v2367 = vsel %vm2364, %v2366, %v2362
        %v2368 = vmul.f32 1.0, %v2367
        %v2369 = vrcp.pop %v1597
        %v2370 = vmul.f32 %v1597, %v2369
        %v2371 = vsub.f32 1.0, %v2370
        %v2372 = vmul.f32 %v2369, %v2371
        %v2373 = vadd.f32 %v2369, %v2372
        %vm2374 = vweird.f32 %v1597
        %vm2375 = vweird.f32 %v2369
        %vm2376 = vmor %vm2374, %vm2375
        %v2377 = vsel %vm2376, %v2369, %v2373
        %v2378 = vand.u32 2147483647, %v1597
        %vm2379 = vcmp.eq.f32.partialorder %v2378, 8.507059e+37
        %v2380 = vand.u32 %v1597, 2147483648
        %v2381 = vor.u32 1.1754944e-38, %v2380
        %v2382 = vsel %vm2379, %v2381, %v2377
        %v2383 = vmul.f32 1.0, %v2382
        %v2384 = vrcp.pop %v1598
        %v2385 = vmul.f32 %v1598, %v2384
        %v2386 = vsub.f32 1.0, %v2385
        %v2387 = vmul.f32 %v2384, %v2386
        %v2388 = vadd.f32 %v2384, %v2387
        %vm2389 = vweird.f32 %v1598
        %vm2390 = vweird.f32 %v2384
        %vm2391 = vmor %vm2389, %vm2390
        %v2392 = vsel %vm2391, %v2384, %v2388
        %v2393 = vand.u32 2147483647, %v1598
        %vm2394 = vcmp.eq.f32.partialorder %v2393, 8.507059e+37
        %v2395 = vand.u32 %v1598, 2147483648
        %v2396 = vor.u32 1.1754944e-38, %v2395
        %v2397 = vsel %vm2394, %v2396, %v2392
        %v2398 = vmul.f32 1.0, %v2397
        %v2399 = vrcp.pop %v1599
        %v2400 = vmul.f32 %v1599, %v2399
        %v2401 = vsub.f32 1.0, %v2400
        %v2402 = vmul.f32 %v2399, %v2401
        %v2403 = vadd.f32 %v2399, %v2402
        %vm2404 = vweird.f32 %v1599
        %vm2405 = vweird.f32 %v2399
        %vm2406 = vmor %vm2404, %vm2405
        %v2407 = vsel %vm2406, %v2399, %v2403
        %v2408 = vand.u32 2147483647, %v1599
        %vm2409 = vcmp.eq.f32.partialorder %v2408, 8.507059e+37
        %v2410 = vand.u32 %v1599, 2147483648
        %v2411 = vor.u32 1.1754944e-38, %v2410
        %v2412 = vsel %vm2409, %v2411, %v2407
        %v2413 = vmul.f32 1.0, %v2412
        %v2414 = vrcp.pop %v1600
        %v2415 = vmul.f32 %v1600, %v2414
        %v2416 = vsub.f32 1.0, %v2415
        %v2417 = vmul.f32 %v2414, %v2416
        %v2418 = vadd.f32 %v2414, %v2417
        %vm2419 = vweird.f32 %v1600
        %vm2420 = vweird.f32 %v2414
        %vm2421 = vmor %vm2419, %vm2420
        %v2422 = vsel %vm2421, %v2414, %v2418
        %v2423 = vand.u32 2147483647, %v1600
        %vm2424 = vcmp.eq.f32.partialorder %v2423, 8.507059e+37
        %v2425 = vand.u32 %v1600, 2147483648
        %v2426 = vor.u32 1.1754944e-38, %v2425
        %v2427 = vsel %vm2424, %v2426, %v2422
        %v2428 = vmul.f32 1.0, %v2427
        %v2429 = vrcp.pop %v1601
        %v2430 = vmul.f32 %v1601, %v2429
        %v2431 = vsub.f32 1.0, %v2430
        %v2432 = vmul.f32 %v2429, %v2431
        %v2433 = vadd.f32 %v2429, %v2432
        %vm2434 = vweird.f32 %v1601
        %vm2435 = vweird.f32 %v2429
        %vm2436 = vmor %vm2434, %vm2435
        %v2437 = vsel %vm2436, %v2429, %v2433
        %v2438 = vand.u32 2147483647, %v1601
        %vm2439 = vcmp.eq.f32.partialorder %v2438, 8.507059e+37
        %v2440 = vand.u32 %v1601, 2147483648
        %v2441 = vor.u32 1.1754944e-38, %v2440
        %v2442 = vsel %vm2439, %v2441, %v2437
        %v2443 = vmul.f32 1.0, %v2442
        %v2444 = vrcp.pop %v1602
        %v2445 = vmul.f32 %v1602, %v2444
        %v2446 = vsub.f32 1.0, %v2445
        %v2447 = vmul.f32 %v2444, %v2446
        %v2448 = vadd.f32 %v2444, %v2447
        %vm2449 = vweird.f32 %v1602
        %vm2450 = vweird.f32 %v2444
        %vm2451 = vmor %vm2449, %vm2450
        %v2452 = vsel %vm2451, %v2444, %v2448
        %v2453 = vand.u32 2147483647, %v1602
        %vm2454 = vcmp.eq.f32.partialorder %v2453, 8.507059e+37
        %v2455 = vand.u32 %v1602, 2147483648
        %v2456 = vor.u32 1.1754944e-38, %v2455
        %v2457 = vsel %vm2454, %v2456, %v2452
        %v2458 = vmul.f32 1.0, %v2457
        %v2459 = vrcp.pop %v1603
        %v2460 = vmul.f32 %v1603, %v2459
        %v2461 = vsub.f32 1.0, %v2460
        %v2462 = vmul.f32 %v2459, %v2461
        %v2463 = vadd.f32 %v2459, %v2462
        %vm2464 = vweird.f32 %v1603
        %vm2465 = vweird.f32 %v2459
        %vm2466 = vmor %vm2464, %vm2465
        %v2467 = vsel %vm2466, %v2459, %v2463
        %v2468 = vand.u32 2147483647, %v1603
        %vm2469 = vcmp.eq.f32.partialorder %v2468, 8.507059e+37
        %v2470 = vand.u32 %v1603, 2147483648
        %v2471 = vor.u32 1.1754944e-38, %v2470
        %v2472 = vsel %vm2469, %v2471, %v2467
        %v2473 = vmul.f32 1.0, %v2472
        %v2474 = vrcp.pop %v1604
        %v2475 = vmul.f32 %v1604, %v2474
        %v2476 = vsub.f32 1.0, %v2475
        %v2477 = vmul.f32 %v2474, %v2476
        %v2478 = vadd.f32 %v2474, %v2477
        %vm2479 = vweird.f32 %v1604
        %vm2480 = vweird.f32 %v2474
        %vm2481 = vmor %vm2479, %vm2480
        %v2482 = vsel %vm2481, %v2474, %v2478
        %v2483 = vand.u32 2147483647, %v1604
        %vm2484 = vcmp.eq.f32.partialorder %v2483, 8.507059e+37
        %v2485 = vand.u32 %v1604, 2147483648
        %v2486 = vor.u32 1.1754944e-38, %v2485
        %v2487 = vsel %vm2484, %v2486, %v2482
        %v2488 = vmul.f32 1.0, %v2487
        %v2489 = vrcp.pop %v1605
        %v2490 = vmul.f32 %v1605, %v2489
        %v2491 = vsub.f32 1.0, %v2490
        %v2492 = vmul.f32 %v2489, %v2491
        %v2493 = vadd.f32 %v2489, %v2492
        %vm2494 = vweird.f32 %v1605
        %vm2495 = vweird.f32 %v2489
        %vm2496 = vmor %vm2494, %vm2495
        %v2497 = vsel %vm2496, %v2489, %v2493
        %v2498 = vand.u32 2147483647, %v1605
        %vm2499 = vcmp.eq.f32.partialorder %v2498, 8.507059e+37
        %v2500 = vand.u32 %v1605, 2147483648
        %v2501 = vor.u32 1.1754944e-38, %v2500
        %v2502 = vsel %vm2499, %v2501, %v2497
        %v2503 = vmul.f32 1.0, %v2502
        %v2504 = vrcp.pop %v1606
        %v2505 = vmul.f32 %v1606, %v2504
        %v2506 = vsub.f32 1.0, %v2505
        %v2507 = vmul.f32 %v2504, %v2506
        %v2508 = vadd.f32 %v2504, %v2507
        %vm2509 = vweird.f32 %v1606
        %vm2510 = vweird.f32 %v2504
        %vm2511 = vmor %vm2509, %vm2510
        %v2512 = vsel %vm2511, %v2504, %v2508
        %v2513 = vand.u32 2147483647, %v1606
        %vm2514 = vcmp.eq.f32.partialorder %v2513, 8.507059e+37
        %v2515 = vand.u32 %v1606, 2147483648
        %v2516 = vor.u32 1.1754944e-38, %v2515
        %v2517 = vsel %vm2514, %v2516, %v2512
        %v2518 = vmul.f32 1.0, %v2517
        %v2519 = vrcp.pop %v1607
        %v2520 = vmul.f32 %v1607, %v2519
        %v2521 = vsub.f32 1.0, %v2520
        %v2522 = vmul.f32 %v2519, %v2521
        %v2523 = vadd.f32 %v2519, %v2522
        %vm2524 = vweird.f32 %v1607
        %vm2525 = vweird.f32 %v2519
        %vm2526 = vmor %vm2524, %vm2525
        %v2527 = vsel %vm2526, %v2519, %v2523
        %v2528 = vand.u32 2147483647, %v1607
        %vm2529 = vcmp.eq.f32.partialorder %v2528, 8.507059e+37
        %v2530 = vand.u32 %v1607, 2147483648
        %v2531 = vor.u32 1.1754944e-38, %v2530
        %v2532 = vsel %vm2529, %v2531, %v2527
        %v2533 = vmul.f32 1.0, %v2532
        %v2534 = vrcp.pop %v1608
        %v2535 = vmul.f32 %v1608, %v2534
        %v2536 = vsub.f32 1.0, %v2535
        %v2537 = vmul.f32 %v2534, %v2536
        %v2538 = vadd.f32 %v2534, %v2537
        %vm2539 = vweird.f32 %v1608
        %vm2540 = vweird.f32 %v2534
        %vm2541 = vmor %vm2539, %vm2540
        %v2542 = vsel %vm2541, %v2534, %v2538
        %v2543 = vand.u32 2147483647, %v1608
        %vm2544 = vcmp.eq.f32.partialorder %v2543, 8.507059e+37
        %v2545 = vand.u32 %v1608, 2147483648
        %v2546 = vor.u32 1.1754944e-38, %v2545
        %v2547 = vsel %vm2544, %v2546, %v2542
        %v2548 = vmul.f32 1.0, %v2547
        %v2549 = vrcp.pop %v1609
        %v2550 = vmul.f32 %v1609, %v2549
        %v2551 = vsub.f32 1.0, %v2550
        %v2552 = vmul.f32 %v2549, %v2551
        %v2553 = vadd.f32 %v2549, %v2552
        %vm2554 = vweird.f32 %v1609
        %vm2555 = vweird.f32 %v2549
        %vm2556 = vmor %vm2554, %vm2555
        %v2557 = vsel %vm2556, %v2549, %v2553
        %v2558 = vand.u32 2147483647, %v1609
        %vm2559 = vcmp.eq.f32.partialorder %v2558, 8.507059e+37
        %v2560 = vand.u32 %v1609, 2147483648
        %v2561 = vor.u32 1.1754944e-38, %v2560
        %v2562 = vsel %vm2559, %v2561, %v2557
        %v2563 = vmul.f32 1.0, %v2562
        %v2564 = vrcp.pop %v1610
        %v2565 = vmul.f32 %v1610, %v2564
        %v2566 = vsub.f32 1.0, %v2565
        %v2567 = vmul.f32 %v2564, %v2566
        %v2568 = vadd.f32 %v2564, %v2567
        %vm2569 = vweird.f32 %v1610
        %vm2570 = vweird.f32 %v2564
        %vm2571 = vmor %vm2569, %vm2570
        %v2572 = vsel %vm2571, %v2564, %v2568
        %v2573 = vand.u32 2147483647, %v1610
        %vm2574 = vcmp.eq.f32.partialorder %v2573, 8.507059e+37
        %v2575 = vand.u32 %v1610, 2147483648
        %v2576 = vor.u32 1.1754944e-38, %v2575
        %v2577 = vsel %vm2574, %v2576, %v2572
        %v2578 = vmul.f32 1.0, %v2577
        %v2579 = vrcp.pop %v1611
        %v2580 = vmul.f32 %v1611, %v2579
        %v2581 = vsub.f32 1.0, %v2580
        %v2582 = vmul.f32 %v2579, %v2581
        %v2583 = vadd.f32 %v2579, %v2582
        %vm2584 = vweird.f32 %v1611
        %vm2585 = vweird.f32 %v2579
        %vm2586 = vmor %vm2584, %vm2585
        %v2587 = vsel %vm2586, %v2579, %v2583
        %v2588 = vand.u32 2147483647, %v1611
        %vm2589 = vcmp.eq.f32.partialorder %v2588, 8.507059e+37
        %v2590 = vand.u32 %v1611, 2147483648
        %v2591 = vor.u32 1.1754944e-38, %v2590
        %v2592 = vsel %vm2589, %v2591, %v2587
        %v2593 = vmul.f32 1.0, %v2592
        %v2594 = vrcp.pop %v1612
        %v2595 = vmul.f32 %v1612, %v2594
        %v2596 = vsub.f32 1.0, %v2595
        %v2597 = vmul.f32 %v2594, %v2596
        %v2598 = vadd.f32 %v2594, %v2597
        %vm2599 = vweird.f32 %v1612
        %vm2600 = vweird.f32 %v2594
        %vm2601 = vmor %vm2599, %vm2600
        %v2602 = vsel %vm2601, %v2594, %v2598
        %v2603 = vand.u32 2147483647, %v1612
        %vm2604 = vcmp.eq.f32.partialorder %v2603, 8.507059e+37
        %v2605 = vand.u32 %v1612, 2147483648
        %v2606 = vor.u32 1.1754944e-38, %v2605
        %v2607 = vsel %vm2604, %v2606, %v2602
        %v2608 = vmul.f32 1.0, %v2607
        %v2609 = vrcp.pop %v1613
        %v2610 = vmul.f32 %v1613, %v2609
        %v2611 = vsub.f32 1.0, %v2610
        %v2612 = vmul.f32 %v2609, %v2611
        %v2613 = vadd.f32 %v2609, %v2612
        %vm2614 = vweird.f32 %v1613
        %vm2615 = vweird.f32 %v2609
        %vm2616 = vmor %vm2614, %vm2615
        %v2617 = vsel %vm2616, %v2609, %v2613
        %v2618 = vand.u32 2147483647, %v1613
        %vm2619 = vcmp.eq.f32.partialorder %v2618, 8.507059e+37
        %v2620 = vand.u32 %v1613, 2147483648
        %v2621 = vor.u32 1.1754944e-38, %v2620
        %v2622 = vsel %vm2619, %v2621, %v2617
        %v2623 = vmul.f32 1.0, %v2622
        %v2624 = vrcp.pop %v1614
        %v2625 = vmul.f32 %v1614, %v2624
        %v2626 = vsub.f32 1.0, %v2625
        %v2627 = vmul.f32 %v2624, %v2626
        %v2628 = vadd.f32 %v2624, %v2627
        %vm2629 = vweird.f32 %v1614
        %vm2630 = vweird.f32 %v2624
        %vm2631 = vmor %vm2629, %vm2630
        %v2632 = vsel %vm2631, %v2624, %v2628
        %v2633 = vand.u32 2147483647, %v1614
        %vm2634 = vcmp.eq.f32.partialorder %v2633, 8.507059e+37
        %v2635 = vand.u32 %v1614, 2147483648
        %v2636 = vor.u32 1.1754944e-38, %v2635
        %v2637 = vsel %vm2634, %v2636, %v2632
        %v2638 = vmul.f32 1.0, %v2637
        %v2639 = vrcp.pop %v1615
        %v2640 = vmul.f32 %v1615, %v2639
        %v2641 = vsub.f32 1.0, %v2640
        %v2642 = vmul.f32 %v2639, %v2641
        %v2643 = vadd.f32 %v2639, %v2642
        %vm2644 = vweird.f32 %v1615
        %vm2645 = vweird.f32 %v2639
        %vm2646 = vmor %vm2644, %vm2645
        %v2647 = vsel %vm2646, %v2639, %v2643
        %v2648 = vand.u32 2147483647, %v1615
        %vm2649 = vcmp.eq.f32.partialorder %v2648, 8.507059e+37
        %v2650 = vand.u32 %v1615, 2147483648
        %v2651 = vor.u32 1.1754944e-38, %v2650
        %v2652 = vsel %vm2649, %v2651, %v2647
        %v2653 = vmul.f32 1.0, %v2652
        %v2654 = vrcp.pop %v1616
        %v2655 = vmul.f32 %v1616, %v2654
        %v2656 = vsub.f32 1.0, %v2655
        %v2657 = vmul.f32 %v2654, %v2656
        %v2658 = vadd.f32 %v2654, %v2657
        %vm2659 = vweird.f32 %v1616
        %vm2660 = vweird.f32 %v2654
        %vm2661 = vmor %vm2659, %vm2660
        %v2662 = vsel %vm2661, %v2654, %v2658
        %v2663 = vand.u32 2147483647, %v1616
        %vm2664 = vcmp.eq.f32.partialorder %v2663, 8.507059e+37
        %v2665 = vand.u32 %v1616, 2147483648
        %v2666 = vor.u32 1.1754944e-38, %v2665
        %v2667 = vsel %vm2664, %v2666, %v2662
        %v2668 = vmul.f32 1.0, %v2667
        %v2669 = vrcp.pop %v1617
        %v2670 = vmul.f32 %v1617, %v2669
        %v2671 = vsub.f32 1.0, %v2670
        %v2672 = vmul.f32 %v2669, %v2671
        %v2673 = vadd.f32 %v2669, %v2672
        %vm2674 = vweird.f32 %v1617
        %vm2675 = vweird.f32 %v2669
        %vm2676 = vmor %vm2674, %vm2675
        %v2677 = vsel %vm2676, %v2669, %v2673
        %v2678 = vand.u32 2147483647, %v1617
        %vm2679 = vcmp.eq.f32.partialorder %v2678, 8.507059e+37
        %v2680 = vand.u32 %v1617, 2147483648
        %v2681 = vor.u32 1.1754944e-38, %v2680
        %v2682 = vsel %vm2679, %v2681, %v2677
        %v2683 = vmul.f32 1.0, %v2682
        %v2684 = vrcp.pop %v1618
        %v2685 = vmul.f32 %v1618, %v2684
        %v2686 = vsub.f32 1.0, %v2685
        %v2687 = vmul.f32 %v2684, %v2686
        %v2688 = vadd.f32 %v2684, %v2687
        %vm2689 = vweird.f32 %v1618
        %vm2690 = vweird.f32 %v2684
        %vm2691 = vmor %vm2689, %vm2690
        %v2692 = vsel %vm2691, %v2684, %v2688
        %v2693 = vand.u32 2147483647, %v1618
        %vm2694 = vcmp.eq.f32.partialorder %v2693, 8.507059e+37
        %v2695 = vand.u32 %v1618, 2147483648
        %v2696 = vor.u32 1.1754944e-38, %v2695
        %v2697 = vsel %vm2694, %v2696, %v2692
        %v2698 = vmul.f32 1.0, %v2697
        %v2699 = vrcp.pop %v1619
        %v2700 = vmul.f32 %v1619, %v2699
        %v2701 = vsub.f32 1.0, %v2700
        %v2702 = vmul.f32 %v2699, %v2701
        %v2703 = vadd.f32 %v2699, %v2702
        %vm2704 = vweird.f32 %v1619
        %vm2705 = vweird.f32 %v2699
        %vm2706 = vmor %vm2704, %vm2705
        %v2707 = vsel %vm2706, %v2699, %v2703
        %v2708 = vand.u32 2147483647, %v1619
        %vm2709 = vcmp.eq.f32.partialorder %v2708, 8.507059e+37
        %v2710 = vand.u32 %v1619, 2147483648
        %v2711 = vor.u32 1.1754944e-38, %v2710
        %v2712 = vsel %vm2709, %v2711, %v2707
        %v2713 = vmul.f32 1.0, %v2712
        %v2714 = vrcp.pop %v1620
        %v2715 = vmul.f32 %v1620, %v2714
        %v2716 = vsub.f32 1.0, %v2715
        %v2717 = vmul.f32 %v2714, %v2716
        %v2718 = vadd.f32 %v2714, %v2717
        %vm2719 = vweird.f32 %v1620
        %vm2720 = vweird.f32 %v2714
        %vm2721 = vmor %vm2719, %vm2720
        %v2722 = vsel %vm2721, %v2714, %v2718
        %v2723 = vand.u32 2147483647, %v1620
        %vm2724 = vcmp.eq.f32.partialorder %v2723, 8.507059e+37
        %v2725 = vand.u32 %v1620, 2147483648
        %v2726 = vor.u32 1.1754944e-38, %v2725
        %v2727 = vsel %vm2724, %v2726, %v2722
        %v2728 = vmul.f32 1.0, %v2727
        %v2729 = vrcp.pop %v1621
        %v2730 = vmul.f32 %v1621, %v2729
        %v2731 = vsub.f32 1.0, %v2730
        %v2732 = vmul.f32 %v2729, %v2731
        %v2733 = vadd.f32 %v2729, %v2732
        %vm2734 = vweird.f32 %v1621
        %vm2735 = vweird.f32 %v2729
        %vm2736 = vmor %vm2734, %vm2735
        %v2737 = vsel %vm2736, %v2729, %v2733
        %v2738 = vand.u32 2147483647, %v1621
        %vm2739 = vcmp.eq.f32.partialorder %v2738, 8.507059e+37
        %v2740 = vand.u32 %v1621, 2147483648
        %v2741 = vor.u32 1.1754944e-38, %v2740
        %v2742 = vsel %vm2739, %v2741, %v2737
        %v2743 = vmul.f32 1.0, %v2742
        %v2744 = vrcp.pop %v1622
        %v2745 = vmul.f32 %v1622, %v2744
        %v2746 = vsub.f32 1.0, %v2745
        %v2747 = vmul.f32 %v2744, %v2746
        %v2748 = vadd.f32 %v2744, %v2747
        %vm2749 = vweird.f32 %v1622
        %vm2750 = vweird.f32 %v2744
        %vm2751 = vmor %vm2749, %vm2750
        %v2752 = vsel %vm2751, %v2744, %v2748
        %v2753 = vand.u32 2147483647, %v1622
        %vm2754 = vcmp.eq.f32.partialorder %v2753, 8.507059e+37
        %v2755 = vand.u32 %v1622, 2147483648
        %v2756 = vor.u32 1.1754944e-38, %v2755
        %v2757 = vsel %vm2754, %v2756, %v2752
        %v2758 = vmul.f32 1.0, %v2757
        %v2759 = vrcp.pop %v1623
        %v2760 = vmul.f32 %v1623, %v2759
        %v2761 = vsub.f32 1.0, %v2760
        %v2762 = vmul.f32 %v2759, %v2761
        %v2763 = vadd.f32 %v2759, %v2762
        %vm2764 = vweird.f32 %v1623
        %vm2765 = vweird.f32 %v2759
        %vm2766 = vmor %vm2764, %vm2765
        %v2767 = vsel %vm2766, %v2759, %v2763
        %v2768 = vand.u32 2147483647, %v1623
        %vm2769 = vcmp.eq.f32.partialorder %v2768, 8.507059e+37
        %v2770 = vand.u32 %v1623, 2147483648
        %v2771 = vor.u32 1.1754944e-38, %v2770
        %v2772 = vsel %vm2769, %v2771, %v2767
        %v2773 = vmul.f32 1.0, %v2772
        %v2774 = vrcp.pop %v1624
        %v2775 = vmul.f32 %v1624, %v2774
        %v2776 = vsub.f32 1.0, %v2775
        %v2777 = vmul.f32 %v2774, %v2776
        %v2778 = vadd.f32 %v2774, %v2777
        %vm2779 = vweird.f32 %v1624
        %vm2780 = vweird.f32 %v2774
        %vm2781 = vmor %vm2779, %vm2780
        %v2782 = vsel %vm2781, %v2774, %v2778
        %v2783 = vand.u32 2147483647, %v1624
        %vm2784 = vcmp.eq.f32.partialorder %v2783, 8.507059e+37
        %v2785 = vand.u32 %v1624, 2147483648
        %v2786 = vor.u32 1.1754944e-38, %v2785
        %v2787 = vsel %vm2784, %v2786, %v2782
        %v2788 = vmul.f32 1.0, %v2787
        %v2789 = vrcp.pop %v1625
        %v2790 = vmul.f32 %v1625, %v2789
        %v2791 = vsub.f32 1.0, %v2790
        %v2792 = vmul.f32 %v2789, %v2791
        %v2793 = vadd.f32 %v2789, %v2792
        %vm2794 = vweird.f32 %v1625
        %vm2795 = vweird.f32 %v2789
        %vm2796 = vmor %vm2794, %vm2795
        %v2797 = vsel %vm2796, %v2789, %v2793
        %v2798 = vand.u32 2147483647, %v1625
        %vm2799 = vcmp.eq.f32.partialorder %v2798, 8.507059e+37
        %v2800 = vand.u32 %v1625, 2147483648
        %v2801 = vor.u32 1.1754944e-38, %v2800
        %v2802 = vsel %vm2799, %v2801, %v2797
        %v2803 = vmul.f32 1.0, %v2802
        %v2804 = vrcp.pop %v1626
        %v2805 = vmul.f32 %v1626, %v2804
        %v2806 = vsub.f32 1.0, %v2805
        %v2807 = vmul.f32 %v2804, %v2806
        %v2808 = vadd.f32 %v2804, %v2807
        %vm2809 = vweird.f32 %v1626
        %vm2810 = vweird.f32 %v2804
        %vm2811 = vmor %vm2809, %vm2810
        %v2812 = vsel %vm2811, %v2804, %v2808
        %v2813 = vand.u32 2147483647, %v1626
        %vm2814 = vcmp.eq.f32.partialorder %v2813, 8.507059e+37
        %v2815 = vand.u32 %v1626, 2147483648
        %v2816 = vor.u32 1.1754944e-38, %v2815
        %v2817 = vsel %vm2814, %v2816, %v2812
        %v2818 = vmul.f32 1.0, %v2817
        %v2819 = vrcp.pop %v1627
        %v2820 = vmul.f32 %v1627, %v2819
        %v2821 = vsub.f32 1.0, %v2820
        %v2822 = vmul.f32 %v2819, %v2821
        %v2823 = vadd.f32 %v2819, %v2822
        %vm2824 = vweird.f32 %v1627
        %vm2825 = vweird.f32 %v2819
        %vm2826 = vmor %vm2824, %vm2825
        %v2827 = vsel %vm2826, %v2819, %v2823
        %v2828 = vand.u32 2147483647, %v1627
        %vm2829 = vcmp.eq.f32.partialorder %v2828, 8.507059e+37
        %v2830 = vand.u32 %v1627, 2147483648
        %v2831 = vor.u32 1.1754944e-38, %v2830
        %v2832 = vsel %vm2829, %v2831, %v2827
        %v2833 = vmul.f32 1.0, %v2832
        %v2834 = vrcp.pop %v1628
        %v2835 = vmul.f32 %v1628, %v2834
        %v2836 = vsub.f32 1.0, %v2835
        %v2837 = vmul.f32 %v2834, %v2836
        %v2838 = vadd.f32 %v2834, %v2837
        %vm2839 = vweird.f32 %v1628
        %vm2840 = vweird.f32 %v2834
        %vm2841 = vmor %vm2839, %vm2840
        %v2842 = vsel %vm2841, %v2834, %v2838
        %v2843 = vand.u32 2147483647, %v1628
        %vm2844 = vcmp.eq.f32.partialorder %v2843, 8.507059e+37
        %v2845 = vand.u32 %v1628, 2147483648
        %v2846 = vor.u32 1.1754944e-38, %v2845
        %v2847 = vsel %vm2844, %v2846, %v2842
        %v2848 = vmul.f32 1.0, %v2847
        %v2849 = vrcp.pop %v1629
        %v2850 = vmul.f32 %v1629, %v2849
        %v2851 = vsub.f32 1.0, %v2850
        %v2852 = vmul.f32 %v2849, %v2851
        %v2853 = vadd.f32 %v2849, %v2852
        %vm2854 = vweird.f32 %v1629
        %vm2855 = vweird.f32 %v2849
        %vm2856 = vmor %vm2854, %vm2855
        %v2857 = vsel %vm2856, %v2849, %v2853
        %v2858 = vand.u32 2147483647, %v1629
        %vm2859 = vcmp.eq.f32.partialorder %v2858, 8.507059e+37
        %v2860 = vand.u32 %v1629, 2147483648
        %v2861 = vor.u32 1.1754944e-38, %v2860
        %v2862 = vsel %vm2859, %v2861, %v2857
        %v2863 = vmul.f32 1.0, %v2862
        %v2864 = vrcp.pop %v1630
        %v2865 = vmul.f32 %v1630, %v2864
        %v2866 = vsub.f32 1.0, %v2865
        %v2867 = vmul.f32 %v2864, %v2866
        %v2868 = vadd.f32 %v2864, %v2867
        %vm2869 = vweird.f32 %v1630
        %vm2870 = vweird.f32 %v2864
        %vm2871 = vmor %vm2869, %vm2870
        %v2872 = vsel %vm2871, %v2864, %v2868
        %v2873 = vand.u32 2147483647, %v1630
        %vm2874 = vcmp.eq.f32.partialorder %v2873, 8.507059e+37
        %v2875 = vand.u32 %v1630, 2147483648
        %v2876 = vor.u32 1.1754944e-38, %v2875
        %v2877 = vsel %vm2874, %v2876, %v2872
        %v2878 = vmul.f32 1.0, %v2877
        %v2879 = vrcp.pop %v1631
        %v2880 = vmul.f32 %v1631, %v2879
        %v2881 = vsub.f32 1.0, %v2880
        %v2882 = vmul.f32 %v2879, %v2881
        %v2883 = vadd.f32 %v2879, %v2882
        %vm2884 = vweird.f32 %v1631
        %vm2885 = vweird.f32 %v2879
        %vm2886 = vmor %vm2884, %vm2885
        %v2887 = vsel %vm2886, %v2879, %v2883
        %v2888 = vand.u32 2147483647, %v1631
        %vm2889 = vcmp.eq.f32.partialorder %v2888, 8.507059e+37
        %v2890 = vand.u32 %v1631, 2147483648
        %v2891 = vor.u32 1.1754944e-38, %v2890
        %v2892 = vsel %vm2889, %v2891, %v2887
        %v2893 = vmul.f32 1.0, %v2892
        %v2894 = vrcp.pop %v1632
        %v2895 = vmul.f32 %v1632, %v2894
        %v2896 = vsub.f32 1.0, %v2895
        %v2897 = vmul.f32 %v2894, %v2896
        %v2898 = vadd.f32 %v2894, %v2897
        %vm2899 = vweird.f32 %v1632
        %vm2900 = vweird.f32 %v2894
        %vm2901 = vmor %vm2899, %vm2900
        %v2902 = vsel %vm2901, %v2894, %v2898
        %v2903 = vand.u32 2147483647, %v1632
        %vm2904 = vcmp.eq.f32.partialorder %v2903, 8.507059e+37
        %v2905 = vand.u32 %v1632, 2147483648
        %v2906 = vor.u32 1.1754944e-38, %v2905
        %v2907 = vsel %vm2904, %v2906, %v2902
        %v2908 = vmul.f32 1.0, %v2907
        %v2909 = vrcp.pop %v1633
        %v2910 = vmul.f32 %v1633, %v2909
        %v2911 = vsub.f32 1.0, %v2910
        %v2912 = vmul.f32 %v2909, %v2911
        %v2913 = vadd.f32 %v2909, %v2912
        %vm2914 = vweird.f32 %v1633
        %vm2915 = vweird.f32 %v2909
        %vm2916 = vmor %vm2914, %vm2915
        %v2917 = vsel %vm2916, %v2909, %v2913
        %v2918 = vand.u32 2147483647, %v1633
        %vm2919 = vcmp.eq.f32.partialorder %v2918, 8.507059e+37
        %v2920 = vand.u32 %v1633, 2147483648
        %v2921 = vor.u32 1.1754944e-38, %v2920
        %v2922 = vsel %vm2919, %v2921, %v2917
        %v2923 = vmul.f32 1.0, %v2922
        %v2924 = vrcp.pop %v1634
        %v2925 = vmul.f32 %v1634, %v2924
        %v2926 = vsub.f32 1.0, %v2925
        %v2927 = vmul.f32 %v2924, %v2926
        %v2928 = vadd.f32 %v2924, %v2927
        %vm2929 = vweird.f32 %v1634
        %vm2930 = vweird.f32 %v2924
        %vm2931 = vmor %vm2929, %vm2930
        %v2932 = vsel %vm2931, %v2924, %v2928
        %v2933 = vand.u32 2147483647, %v1634
        %vm2934 = vcmp.eq.f32.partialorder %v2933, 8.507059e+37
        %v2935 = vand.u32 %v1634, 2147483648
        %v2936 = vor.u32 1.1754944e-38, %v2935
        %v2937 = vsel %vm2934, %v2936, %v2932
        %v2938 = vmul.f32 1.0, %v2937
        %v2939 = vrcp.pop %v1635
        %v2940 = vmul.f32 %v1635, %v2939
        %v2941 = vsub.f32 1.0, %v2940
        %v2942 = vmul.f32 %v2939, %v2941
        %v2943 = vadd.f32 %v2939, %v2942
        %vm2944 = vweird.f32 %v1635
        %vm2945 = vweird.f32 %v2939
        %vm2946 = vmor %vm2944, %vm2945
        %v2947 = vsel %vm2946, %v2939, %v2943
        %v2948 = vand.u32 2147483647, %v1635
        %vm2949 = vcmp.eq.f32.partialorder %v2948, 8.507059e+37
        %v2950 = vand.u32 %v1635, 2147483648
        %v2951 = vor.u32 1.1754944e-38, %v2950
        %v2952 = vsel %vm2949, %v2951, %v2947
        %v2953 = vmul.f32 1.0, %v2952
        %v2954 = vrcp.pop %v1636
        %v2955 = vmul.f32 %v1636, %v2954
        %v2956 = vsub.f32 1.0, %v2955
        %v2957 = vmul.f32 %v2954, %v2956
        %v2958 = vadd.f32 %v2954, %v2957
        %vm2959 = vweird.f32 %v1636
        %vm2960 = vweird.f32 %v2954
        %vm2961 = vmor %vm2959, %vm2960
        %v2962 = vsel %vm2961, %v2954, %v2958
        %v2963 = vand.u32 2147483647, %v1636
        %vm2964 = vcmp.eq.f32.partialorder %v2963, 8.507059e+37
        %v2965 = vand.u32 %v1636, 2147483648
        %v2966 = vor.u32 1.1754944e-38, %v2965
        %v2967 = vsel %vm2964, %v2966, %v2962
        %v2968 = vmul.f32 1.0, %v2967
        %v2969 = vrcp.pop %v1637
        %v2970 = vmul.f32 %v1637, %v2969
        %v2971 = vsub.f32 1.0, %v2970
        %v2972 = vmul.f32 %v2969, %v2971
        %v2973 = vadd.f32 %v2969, %v2972
        %vm2974 = vweird.f32 %v1637
        %vm2975 = vweird.f32 %v2969
        %vm2976 = vmor %vm2974, %vm2975
        %v2977 = vsel %vm2976, %v2969, %v2973
        %v2978 = vand.u32 2147483647, %v1637
        %vm2979 = vcmp.eq.f32.partialorder %v2978, 8.507059e+37
        %v2980 = vand.u32 %v1637, 2147483648
        %v2981 = vor.u32 1.1754944e-38, %v2980
        %v2982 = vsel %vm2979, %v2981, %v2977
        %v2983 = vmul.f32 1.0, %v2982
        %v2984 = vrcp.pop %v1638
        %v2985 = vmul.f32 %v1638, %v2984
        %v2986 = vsub.f32 1.0, %v2985
        %v2987 = vmul.f32 %v2984, %v2986
        %v2988 = vadd.f32 %v2984, %v2987
        %vm2989 = vweird.f32 %v1638
        %vm2990 = vweird.f32 %v2984
        %vm2991 = vmor %vm2989, %vm2990
        %v2992 = vsel %vm2991, %v2984, %v2988
        %v2993 = vand.u32 2147483647, %v1638
        %vm2994 = vcmp.eq.f32.partialorder %v2993, 8.507059e+37
        %v2995 = vand.u32 %v1638, 2147483648
        %v2996 = vor.u32 1.1754944e-38, %v2995
        %v2997 = vsel %vm2994, %v2996, %v2992
        %v2998 = vmul.f32 1.0, %v2997
        %v2999 = vrcp.pop %v1639
        %v3000 = vmul.f32 %v1639, %v2999
        %v3001 = vsub.f32 1.0, %v3000
        %v3002 = vmul.f32 %v2999, %v3001
        %v3003 = vadd.f32 %v2999, %v3002
        %vm3004 = vweird.f32 %v1639
        %vm3005 = vweird.f32 %v2999
        %vm3006 = vmor %vm3004, %vm3005
        %v3007 = vsel %vm3006, %v2999, %v3003
        %v3008 = vand.u32 2147483647, %v1639
        %vm3009 = vcmp.eq.f32.partialorder %v3008, 8.507059e+37
        %v3010 = vand.u32 %v1639, 2147483648
        %v3011 = vor.u32 1.1754944e-38, %v3010
        %v3012 = vsel %vm3009, %v3011, %v3007
        %v3013 = vmul.f32 1.0, %v3012
        %v3014 = vrcp.pop %v1640
        %v3015 = vmul.f32 %v1640, %v3014
        %v3016 = vsub.f32 1.0, %v3015
        %v3017 = vmul.f32 %v3014, %v3016
        %v3018 = vadd.f32 %v3014, %v3017
        %vm3019 = vweird.f32 %v1640
        %vm3020 = vweird.f32 %v3014
        %vm3021 = vmor %vm3019, %vm3020
        %v3022 = vsel %vm3021, %v3014, %v3018
        %v3023 = vand.u32 2147483647, %v1640
        %vm3024 = vcmp.eq.f32.partialorder %v3023, 8.507059e+37
        %v3025 = vand.u32 %v1640, 2147483648
        %v3026 = vor.u32 1.1754944e-38, %v3025
        %v3027 = vsel %vm3024, %v3026, %v3022
        %v3028 = vmul.f32 1.0, %v3027
        %v3029 = vrcp.pop %v1641
        %v3030 = vmul.f32 %v1641, %v3029
        %v3031 = vsub.f32 1.0, %v3030
        %v3032 = vmul.f32 %v3029, %v3031
        %v3033 = vadd.f32 %v3029, %v3032
        %vm3034 = vweird.f32 %v1641
        %vm3035 = vweird.f32 %v3029
        %vm3036 = vmor %vm3034, %vm3035
        %v3037 = vsel %vm3036, %v3029, %v3033
        %v3038 = vand.u32 2147483647, %v1641
        %vm3039 = vcmp.eq.f32.partialorder %v3038, 8.507059e+37
        %v3040 = vand.u32 %v1641, 2147483648
        %v3041 = vor.u32 1.1754944e-38, %v3040
        %v3042 = vsel %vm3039, %v3041, %v3037
        %v3043 = vmul.f32 1.0, %v3042
        %v3044 = vrcp.pop %v1642
        %v3045 = vmul.f32 %v1642, %v3044
        %v3046 = vsub.f32 1.0, %v3045
        %v3047 = vmul.f32 %v3044, %v3046
        %v3048 = vadd.f32 %v3044, %v3047
        %vm3049 = vweird.f32 %v1642
        %vm3050 = vweird.f32 %v3044
        %vm3051 = vmor %vm3049, %vm3050
        %v3052 = vsel %vm3051, %v3044, %v3048
        %v3053 = vand.u32 2147483647, %v1642
        %vm3054 = vcmp.eq.f32.partialorder %v3053, 8.507059e+37
        %v3055 = vand.u32 %v1642, 2147483648
        %v3056 = vor.u32 1.1754944e-38, %v3055
        %v3057 = vsel %vm3054, %v3056, %v3052
        %v3058 = vmul.f32 1.0, %v3057
        %v3059 = vrcp.pop %v1643
        %v3060 = vmul.f32 %v1643, %v3059
        %v3061 = vsub.f32 1.0, %v3060
        %v3062 = vmul.f32 %v3059, %v3061
        %v3063 = vadd.f32 %v3059, %v3062
        %vm3064 = vweird.f32 %v1643
        %vm3065 = vweird.f32 %v3059
        %vm3066 = vmor %vm3064, %vm3065
        %v3067 = vsel %vm3066, %v3059, %v3063
        %v3068 = vand.u32 2147483647, %v1643
        %vm3069 = vcmp.eq.f32.partialorder %v3068, 8.507059e+37
        %v3070 = vand.u32 %v1643, 2147483648
        %v3071 = vor.u32 1.1754944e-38, %v3070
        %v3072 = vsel %vm3069, %v3071, %v3067
        %v3073 = vmul.f32 1.0, %v3072
        %v3074 = vrcp.pop %v1644
        %v3075 = vmul.f32 %v1644, %v3074
        %v3076 = vsub.f32 1.0, %v3075
        %v3077 = vmul.f32 %v3074, %v3076
        %v3078 = vadd.f32 %v3074, %v3077
        %vm3079 = vweird.f32 %v1644
        %vm3080 = vweird.f32 %v3074
        %vm3081 = vmor %vm3079, %vm3080
        %v3082 = vsel %vm3081, %v3074, %v3078
        %v3083 = vand.u32 2147483647, %v1644
        %vm3084 = vcmp.eq.f32.partialorder %v3083, 8.507059e+37
        %v3085 = vand.u32 %v1644, 2147483648
        %v3086 = vor.u32 1.1754944e-38, %v3085
        %v3087 = vsel %vm3084, %v3086, %v3082
        %v3088 = vmul.f32 1.0, %v3087
        %v3089 = vrcp.pop %v1645
        %v3090 = vmul.f32 %v1645, %v3089
        %v3091 = vsub.f32 1.0, %v3090
        %v3092 = vmul.f32 %v3089, %v3091
        %v3093 = vadd.f32 %v3089, %v3092
        %vm3094 = vweird.f32 %v1645
        %vm3095 = vweird.f32 %v3089
        %vm3096 = vmor %vm3094, %vm3095
        %v3097 = vsel %vm3096, %v3089, %v3093
        %v3098 = vand.u32 2147483647, %v1645
        %vm3099 = vcmp.eq.f32.partialorder %v3098, 8.507059e+37
        %v3100 = vand.u32 %v1645, 2147483648
        %v3101 = vor.u32 1.1754944e-38, %v3100
        %v3102 = vsel %vm3099, %v3101, %v3097
        %v3103 = vmul.f32 1.0, %v3102
        %v3104 = vrcp.pop %v1646
        %v3105 = vmul.f32 %v1646, %v3104
        %v3106 = vsub.f32 1.0, %v3105
        %v3107 = vmul.f32 %v3104, %v3106
        %v3108 = vadd.f32 %v3104, %v3107
        %vm3109 = vweird.f32 %v1646
        %vm3110 = vweird.f32 %v3104
        %vm3111 = vmor %vm3109, %vm3110
        %v3112 = vsel %vm3111, %v3104, %v3108
        %v3113 = vand.u32 2147483647, %v1646
        %vm3114 = vcmp.eq.f32.partialorder %v3113, 8.507059e+37
        %v3115 = vand.u32 %v1646, 2147483648
        %v3116 = vor.u32 1.1754944e-38, %v3115
        %v3117 = vsel %vm3114, %v3116, %v3112
        %v3118 = vmul.f32 1.0, %v3117
        %v3119 = vrcp.pop %v1647
        %v3120 = vmul.f32 %v1647, %v3119
        %v3121 = vsub.f32 1.0, %v3120
        %v3122 = vmul.f32 %v3119, %v3121
        %v3123 = vadd.f32 %v3119, %v3122
        %vm3124 = vweird.f32 %v1647
        %vm3125 = vweird.f32 %v3119
        %vm3126 = vmor %vm3124, %vm3125
        %v3127 = vsel %vm3126, %v3119, %v3123
        %v3128 = vand.u32 2147483647, %v1647
        %vm3129 = vcmp.eq.f32.partialorder %v3128, 8.507059e+37
        %v3130 = vand.u32 %v1647, 2147483648
        %v3131 = vor.u32 1.1754944e-38, %v3130
        %v3132 = vsel %vm3129, %v3131, %v3127
        %v3133 = vmul.f32 1.0, %v3132
        %v3134 = vrcp.pop %v1648
        %v3135 = vmul.f32 %v1648, %v3134
        %v3136 = vsub.f32 1.0, %v3135
        %v3137 = vmul.f32 %v3134, %v3136
        %v3138 = vadd.f32 %v3134, %v3137
        %vm3139 = vweird.f32 %v1648
        %vm3140 = vweird.f32 %v3134
        %vm3141 = vmor %vm3139, %vm3140
        %v3142 = vsel %vm3141, %v3134, %v3138
        %v3143 = vand.u32 2147483647, %v1648
        %vm3144 = vcmp.eq.f32.partialorder %v3143, 8.507059e+37
        %v3145 = vand.u32 %v1648, 2147483648
        %v3146 = vor.u32 1.1754944e-38, %v3145
        %v3147 = vsel %vm3144, %v3146, %v3142
        %v3148 = vmul.f32 1.0, %v3147
        %v3149 = vrcp.pop %v1649
        %v3150 = vmul.f32 %v1649, %v3149
        %v3151 = vsub.f32 1.0, %v3150
        %v3152 = vmul.f32 %v3149, %v3151
        %v3153 = vadd.f32 %v3149, %v3152
        %vm3154 = vweird.f32 %v1649
        %vm3155 = vweird.f32 %v3149
        %vm3156 = vmor %vm3154, %vm3155
        %v3157 = vsel %vm3156, %v3149, %v3153
        %v3158 = vand.u32 2147483647, %v1649
        %vm3159 = vcmp.eq.f32.partialorder %v3158, 8.507059e+37
        %v3160 = vand.u32 %v1649, 2147483648
        %v3161 = vor.u32 1.1754944e-38, %v3160
        %v3162 = vsel %vm3159, %v3161, %v3157
        %v3163 = vmul.f32 1.0, %v3162
        %v3164 = vrcp.pop %v1650
        %v3165 = vmul.f32 %v1650, %v3164
        %v3166 = vsub.f32 1.0, %v3165
        %v3167 = vmul.f32 %v3164, %v3166
        %v3168 = vadd.f32 %v3164, %v3167
        %vm3169 = vweird.f32 %v1650
        %vm3170 = vweird.f32 %v3164
        %vm3171 = vmor %vm3169, %vm3170
        %v3172 = vsel %vm3171, %v3164, %v3168
        %v3173 = vand.u32 2147483647, %v1650
        %vm3174 = vcmp.eq.f32.partialorder %v3173, 8.507059e+37
        %v3175 = vand.u32 %v1650, 2147483648
        %v3176 = vor.u32 1.1754944e-38, %v3175
        %v3177 = vsel %vm3174, %v3176, %v3172
        %v3178 = vmul.f32 1.0, %v3177
        %v3179 = vrcp.pop %v1651
        %v3180 = vmul.f32 %v1651, %v3179
        %v3181 = vsub.f32 1.0, %v3180
        %v3182 = vmul.f32 %v3179, %v3181
        %v3183 = vadd.f32 %v3179, %v3182
        %vm3184 = vweird.f32 %v1651
        %vm3185 = vweird.f32 %v3179
        %vm3186 = vmor %vm3184, %vm3185
        %v3187 = vsel %vm3186, %v3179, %v3183
        %v3188 = vand.u32 2147483647, %v1651
        %vm3189 = vcmp.eq.f32.partialorder %v3188, 8.507059e+37
        %v3190 = vand.u32 %v1651, 2147483648
        %v3191 = vor.u32 1.1754944e-38, %v3190
        %v3192 = vsel %vm3189, %v3191, %v3187
        %v3193 = vmul.f32 1.0, %v3192
        %v3194 = vrcp.pop %v1652
        %v3195 = vmul.f32 %v1652, %v3194
        %v3196 = vsub.f32 1.0, %v3195
        %v3197 = vmul.f32 %v3194, %v3196
        %v3198 = vadd.f32 %v3194, %v3197
        %vm3199 = vweird.f32 %v1652
        %vm3200 = vweird.f32 %v3194
        %vm3201 = vmor %vm3199, %vm3200
        %v3202 = vsel %vm3201, %v3194, %v3198
        %v3203 = vand.u32 2147483647, %v1652
        %vm3204 = vcmp.eq.f32.partialorder %v3203, 8.507059e+37
        %v3205 = vand.u32 %v1652, 2147483648
        %v3206 = vor.u32 1.1754944e-38, %v3205
        %v3207 = vsel %vm3204, %v3206, %v3202
        %v3208 = vmul.f32 1.0, %v3207
        %v3209 = vrcp.pop %v1653
        %v3210 = vmul.f32 %v1653, %v3209
        %v3211 = vsub.f32 1.0, %v3210
        %v3212 = vmul.f32 %v3209, %v3211
        %v3213 = vadd.f32 %v3209, %v3212
        %vm3214 = vweird.f32 %v1653
        %vm3215 = vweird.f32 %v3209
        %vm3216 = vmor %vm3214, %vm3215
        %v3217 = vsel %vm3216, %v3209, %v3213
        %v3218 = vand.u32 2147483647, %v1653
        %vm3219 = vcmp.eq.f32.partialorder %v3218, 8.507059e+37
        %v3220 = vand.u32 %v1653, 2147483648
        %v3221 = vor.u32 1.1754944e-38, %v3220
        %v3222 = vsel %vm3219, %v3221, %v3217
        %v3223 = vmul.f32 1.0, %v3222
        %v3224 = vrcp.pop %v1654
        %v3225 = vmul.f32 %v1654, %v3224
        %v3226 = vsub.f32 1.0, %v3225
        %v3227 = vmul.f32 %v3224, %v3226
        %v3228 = vadd.f32 %v3224, %v3227
        %vm3229 = vweird.f32 %v1654
        %vm3230 = vweird.f32 %v3224
        %vm3231 = vmor %vm3229, %vm3230
        %v3232 = vsel %vm3231, %v3224, %v3228
        %v3233 = vand.u32 2147483647, %v1654
        %vm3234 = vcmp.eq.f32.partialorder %v3233, 8.507059e+37
        %v3235 = vand.u32 %v1654, 2147483648
        %v3236 = vor.u32 1.1754944e-38, %v3235
        %v3237 = vsel %vm3234, %v3236, %v3232
        %v3238 = vmul.f32 1.0, %v3237
        %v3239 = vrcp.pop %v1655
        %v3240 = vmul.f32 %v1655, %v3239
        %v3241 = vsub.f32 1.0, %v3240
        %v3242 = vmul.f32 %v3239, %v3241
        %v3243 = vadd.f32 %v3239, %v3242
        %vm3244 = vweird.f32 %v1655
        %vm3245 = vweird.f32 %v3239
        %vm3246 = vmor %vm3244, %vm3245
        %v3247 = vsel %vm3246, %v3239, %v3243
        %v3248 = vand.u32 2147483647, %v1655
        %vm3249 = vcmp.eq.f32.partialorder %v3248, 8.507059e+37
        %v3250 = vand.u32 %v1655, 2147483648
        %v3251 = vor.u32 1.1754944e-38, %v3250
        %v3252 = vsel %vm3249, %v3251, %v3247
        %v3253 = vmul.f32 1.0, %v3252
        %v3254 = vrcp.pop %v1656
        %v3255 = vmul.f32 %v1656, %v3254
        %v3256 = vsub.f32 1.0, %v3255
        %v3257 = vmul.f32 %v3254, %v3256
        %v3258 = vadd.f32 %v3254, %v3257
        %vm3259 = vweird.f32 %v1656
        %vm3260 = vweird.f32 %v3254
        %vm3261 = vmor %vm3259, %vm3260
        %v3262 = vsel %vm3261, %v3254, %v3258
        %v3263 = vand.u32 2147483647, %v1656
        %vm3264 = vcmp.eq.f32.partialorder %v3263, 8.507059e+37
        %v3265 = vand.u32 %v1656, 2147483648
        %v3266 = vor.u32 1.1754944e-38, %v3265
        %v3267 = vsel %vm3264, %v3266, %v3262
        %v3268 = vmul.f32 1.0, %v3267
        %v3269 = vrcp.pop %v1657
        %v3270 = vmul.f32 %v1657, %v3269
        %v3271 = vsub.f32 1.0, %v3270
        %v3272 = vmul.f32 %v3269, %v3271
        %v3273 = vadd.f32 %v3269, %v3272
        %vm3274 = vweird.f32 %v1657
        %vm3275 = vweird.f32 %v3269
        %vm3276 = vmor %vm3274, %vm3275
        %v3277 = vsel %vm3276, %v3269, %v3273
        %v3278 = vand.u32 2147483647, %v1657
        %vm3279 = vcmp.eq.f32.partialorder %v3278, 8.507059e+37
        %v3280 = vand.u32 %v1657, 2147483648
        %v3281 = vor.u32 1.1754944e-38, %v3280
        %v3282 = vsel %vm3279, %v3281, %v3277
        %v3283 = vmul.f32 1.0, %v3282
        %v3284 = vrcp.pop %v1658
        %v3285 = vmul.f32 %v1658, %v3284
        %v3286 = vsub.f32 1.0, %v3285
        %v3287 = vmul.f32 %v3284, %v3286
        %v3288 = vadd.f32 %v3284, %v3287
        %vm3289 = vweird.f32 %v1658
        %vm3290 = vweird.f32 %v3284
        %vm3291 = vmor %vm3289, %vm3290
        %v3292 = vsel %vm3291, %v3284, %v3288
        %v3293 = vand.u32 2147483647, %v1658
        %vm3294 = vcmp.eq.f32.partialorder %v3293, 8.507059e+37
        %v3295 = vand.u32 %v1658, 2147483648
        %v3296 = vor.u32 1.1754944e-38, %v3295
        %v3297 = vsel %vm3294, %v3296, %v3292
        %v3298 = vmul.f32 1.0, %v3297
        %v3299 = vrcp.pop %v1659
        %v3300 = vmul.f32 %v1659, %v3299
        %v3301 = vsub.f32 1.0, %v3300
        %v3302 = vmul.f32 %v3299, %v3301
        %v3303 = vadd.f32 %v3299, %v3302
        %vm3304 = vweird.f32 %v1659
        %vm3305 = vweird.f32 %v3299
        %vm3306 = vmor %vm3304, %vm3305
        %v3307 = vsel %vm3306, %v3299, %v3303
        %v3308 = vand.u32 2147483647, %v1659
        %vm3309 = vcmp.eq.f32.partialorder %v3308, 8.507059e+37
        %v3310 = vand.u32 %v1659, 2147483648
        %v3311 = vor.u32 1.1754944e-38, %v3310
        %v3312 = vsel %vm3309, %v3311, %v3307
        %v3313 = vmul.f32 1.0, %v3312
        %v3314 = vrcp.pop %v1660
        %v3315 = vmul.f32 %v1660, %v3314
        %v3316 = vsub.f32 1.0, %v3315
        %v3317 = vmul.f32 %v3314, %v3316
        %v3318 = vadd.f32 %v3314, %v3317
        %vm3319 = vweird.f32 %v1660
        %vm3320 = vweird.f32 %v3314
        %vm3321 = vmor %vm3319, %vm3320
        %v3322 = vsel %vm3321, %v3314, %v3318
        %v3323 = vand.u32 2147483647, %v1660
        %vm3324 = vcmp.eq.f32.partialorder %v3323, 8.507059e+37
        %v3325 = vand.u32 %v1660, 2147483648
        %v3326 = vor.u32 1.1754944e-38, %v3325
        %v3327 = vsel %vm3324, %v3326, %v3322
        %v3328 = vmul.f32 1.0, %v3327
        %v3329 = vrcp.pop %v1661
        %v3330 = vmul.f32 %v1661, %v3329
        %v3331 = vsub.f32 1.0, %v3330
        %v3332 = vmul.f32 %v3329, %v3331
        %v3333 = vadd.f32 %v3329, %v3332
        %vm3334 = vweird.f32 %v1661
        %vm3335 = vweird.f32 %v3329
        %vm3336 = vmor %vm3334, %vm3335
        %v3337 = vsel %vm3336, %v3329, %v3333
        %v3338 = vand.u32 2147483647, %v1661
        %vm3339 = vcmp.eq.f32.partialorder %v3338, 8.507059e+37
        %v3340 = vand.u32 %v1661, 2147483648
        %v3341 = vor.u32 1.1754944e-38, %v3340
        %v3342 = vsel %vm3339, %v3341, %v3337
        %v3343 = vmul.f32 1.0, %v3342
        %v3344 = vrcp.pop %v1662
        %v3345 = vmul.f32 %v1662, %v3344
        %v3346 = vsub.f32 1.0, %v3345
        %v3347 = vmul.f32 %v3344, %v3346
        %v3348 = vadd.f32 %v3344, %v3347
        %vm3349 = vweird.f32 %v1662
        %vm3350 = vweird.f32 %v3344
        %vm3351 = vmor %vm3349, %vm3350
        %v3352 = vsel %vm3351, %v3344, %v3348
        %v3353 = vand.u32 2147483647, %v1662
        %vm3354 = vcmp.eq.f32.partialorder %v3353, 8.507059e+37
        %v3355 = vand.u32 %v1662, 2147483648
        %v3356 = vor.u32 1.1754944e-38, %v3355
        %v3357 = vsel %vm3354, %v3356, %v3352
        %v3358 = vmul.f32 1.0, %v3357
        %v3359 = vrcp.pop %v1663
        %v3360 = vmul.f32 %v1663, %v3359
        %v3361 = vsub.f32 1.0, %v3360
        %v3362 = vmul.f32 %v3359, %v3361
        %v3363 = vadd.f32 %v3359, %v3362
        %vm3364 = vweird.f32 %v1663
        %vm3365 = vweird.f32 %v3359
        %vm3366 = vmor %vm3364, %vm3365
        %v3367 = vsel %vm3366, %v3359, %v3363
        %v3368 = vand.u32 2147483647, %v1663
        %vm3369 = vcmp.eq.f32.partialorder %v3368, 8.507059e+37
        %v3370 = vand.u32 %v1663, 2147483648
        %v3371 = vor.u32 1.1754944e-38, %v3370
        %v3372 = vsel %vm3369, %v3371, %v3367
        %v3373 = vmul.f32 1.0, %v3372
        %v3374 = vrcp.pop %v1664
        %v3375 = vmul.f32 %v1664, %v3374
        %v3376 = vsub.f32 1.0, %v3375
        %v3377 = vmul.f32 %v3374, %v3376
        %v3378 = vadd.f32 %v3374, %v3377
        %vm3379 = vweird.f32 %v1664
        %vm3380 = vweird.f32 %v3374
        %vm3381 = vmor %vm3379, %vm3380
        %v3382 = vsel %vm3381, %v3374, %v3378
        %v3383 = vand.u32 2147483647, %v1664
        %vm3384 = vcmp.eq.f32.partialorder %v3383, 8.507059e+37
        %v3385 = vand.u32 %v1664, 2147483648
        %v3386 = vor.u32 1.1754944e-38, %v3385
        %v3387 = vsel %vm3384, %v3386, %v3382
        %v3388 = vmul.f32 1.0, %v3387
        %v3389 = vrcp.pop %v1665
        %v3390 = vmul.f32 %v1665, %v3389
        %v3391 = vsub.f32 1.0, %v3390
        %v3392 = vmul.f32 %v3389, %v3391
        %v3393 = vadd.f32 %v3389, %v3392
        %vm3394 = vweird.f32 %v1665
        %vm3395 = vweird.f32 %v3389
        %vm3396 = vmor %vm3394, %vm3395
        %v3397 = vsel %vm3396, %v3389, %v3393
        %v3398 = vand.u32 2147483647, %v1665
        %vm3399 = vcmp.eq.f32.partialorder %v3398, 8.507059e+37
        %v3400 = vand.u32 %v1665, 2147483648
        %v3401 = vor.u32 1.1754944e-38, %v3400
        %v3402 = vsel %vm3399, %v3401, %v3397
        %v3403 = vmul.f32 1.0, %v3402
        %v3404 = vrcp.pop %v1666
        %v3405 = vmul.f32 %v1666, %v3404
        %v3406 = vsub.f32 1.0, %v3405
        %v3407 = vmul.f32 %v3404, %v3406
        %v3408 = vadd.f32 %v3404, %v3407
        %vm3409 = vweird.f32 %v1666
        %vm3410 = vweird.f32 %v3404
        %vm3411 = vmor %vm3409, %vm3410
        %v3412 = vsel %vm3411, %v3404, %v3408
        %v3413 = vand.u32 2147483647, %v1666
        %vm3414 = vcmp.eq.f32.partialorder %v3413, 8.507059e+37
        %v3415 = vand.u32 %v1666, 2147483648
        %v3416 = vor.u32 1.1754944e-38, %v3415
        %v3417 = vsel %vm3414, %v3416, %v3412
        %v3418 = vmul.f32 1.0, %v3417
        %v3419 = vrcp.pop %v1667
        %v3420 = vmul.f32 %v1667, %v3419
        %v3421 = vsub.f32 1.0, %v3420
        %v3422 = vmul.f32 %v3419, %v3421
        %v3423 = vadd.f32 %v3419, %v3422
        %vm3424 = vweird.f32 %v1667
        %vm3425 = vweird.f32 %v3419
        %vm3426 = vmor %vm3424, %vm3425
        %v3427 = vsel %vm3426, %v3419, %v3423
        %v3428 = vand.u32 2147483647, %v1667
        %vm3429 = vcmp.eq.f32.partialorder %v3428, 8.507059e+37
        %v3430 = vand.u32 %v1667, 2147483648
        %v3431 = vor.u32 1.1754944e-38, %v3430
        %v3432 = vsel %vm3429, %v3431, %v3427
        %v3433 = vmul.f32 1.0, %v3432
        %v3434 = vrcp.pop %v1668
        %v3435 = vmul.f32 %v1668, %v3434
        %v3436 = vsub.f32 1.0, %v3435
        %v3437 = vmul.f32 %v3434, %v3436
        %v3438 = vadd.f32 %v3434, %v3437
        %vm3439 = vweird.f32 %v1668
        %vm3440 = vweird.f32 %v3434
        %vm3441 = vmor %vm3439, %vm3440
        %v3442 = vsel %vm3441, %v3434, %v3438
        %v3443 = vand.u32 2147483647, %v1668
        %vm3444 = vcmp.eq.f32.partialorder %v3443, 8.507059e+37
        %v3445 = vand.u32 %v1668, 2147483648
        %v3446 = vor.u32 1.1754944e-38, %v3445
        %v3447 = vsel %vm3444, %v3446, %v3442
        %v3448 = vmul.f32 1.0, %v3447
        %v3449 = vrcp.pop %v1669
        %v3450 = vmul.f32 %v1669, %v3449
        %v3451 = vsub.f32 1.0, %v3450
        %v3452 = vmul.f32 %v3449, %v3451
        %v3453 = vadd.f32 %v3449, %v3452
        %vm3454 = vweird.f32 %v1669
        %vm3455 = vweird.f32 %v3449
        %vm3456 = vmor %vm3454, %vm3455
        %v3457 = vsel %vm3456, %v3449, %v3453
        %v3458 = vand.u32 2147483647, %v1669
        %vm3459 = vcmp.eq.f32.partialorder %v3458, 8.507059e+37
        %v3460 = vand.u32 %v1669, 2147483648
        %v3461 = vor.u32 1.1754944e-38, %v3460
        %v3462 = vsel %vm3459, %v3461, %v3457
        %v3463 = vmul.f32 1.0, %v3462
        %v3464 = vrcp.pop %v1670
        %v3465 = vmul.f32 %v1670, %v3464
        %v3466 = vsub.f32 1.0, %v3465
        %v3467 = vmul.f32 %v3464, %v3466
        %v3468 = vadd.f32 %v3464, %v3467
        %vm3469 = vweird.f32 %v1670
        %vm3470 = vweird.f32 %v3464
        %vm3471 = vmor %vm3469, %vm3470
        %v3472 = vsel %vm3471, %v3464, %v3468
        %v3473 = vand.u32 2147483647, %v1670
        %vm3474 = vcmp.eq.f32.partialorder %v3473, 8.507059e+37
        %v3475 = vand.u32 %v1670, 2147483648
        %v3476 = vor.u32 1.1754944e-38, %v3475
        %v3477 = vsel %vm3474, %v3476, %v3472
        %v3478 = vmul.f32 1.0, %v3477
        %v3479 = vrcp.pop %v1671
        %v3480 = vmul.f32 %v1671, %v3479
        %v3481 = vsub.f32 1.0, %v3480
        %v3482 = vmul.f32 %v3479, %v3481
        %v3483 = vadd.f32 %v3479, %v3482
        %vm3484 = vweird.f32 %v1671
        %vm3485 = vweird.f32 %v3479
        %vm3486 = vmor %vm3484, %vm3485
        %v3487 = vsel %vm3486, %v3479, %v3483
        %v3488 = vand.u32 2147483647, %v1671
        %vm3489 = vcmp.eq.f32.partialorder %v3488, 8.507059e+37
        %v3490 = vand.u32 %v1671, 2147483648
        %v3491 = vor.u32 1.1754944e-38, %v3490
        %v3492 = vsel %vm3489, %v3491, %v3487
        %v3493 = vmul.f32 1.0, %v3492
        %v3494 = vrcp.pop %v1672
        %v3495 = vmul.f32 %v1672, %v3494
        %v3496 = vsub.f32 1.0, %v3495
        %v3497 = vmul.f32 %v3494, %v3496
        %v3498 = vadd.f32 %v3494, %v3497
        %vm3499 = vweird.f32 %v1672
        %vm3500 = vweird.f32 %v3494
        %vm3501 = vmor %vm3499, %vm3500
        %v3502 = vsel %vm3501, %v3494, %v3498
        %v3503 = vand.u32 2147483647, %v1672
        %vm3504 = vcmp.eq.f32.partialorder %v3503, 8.507059e+37
        %v3505 = vand.u32 %v1672, 2147483648
        %v3506 = vor.u32 1.1754944e-38, %v3505
        %v3507 = vsel %vm3504, %v3506, %v3502
        %v3508 = vmul.f32 1.0, %v3507
        %v3509 = vrcp.pop %v1673
        %v3510 = vmul.f32 %v1673, %v3509
        %v3511 = vsub.f32 1.0, %v3510
        %v3512 = vmul.f32 %v3509, %v3511
        %v3513 = vadd.f32 %v3509, %v3512
        %vm3514 = vweird.f32 %v1673
        %vm3515 = vweird.f32 %v3509
        %vm3516 = vmor %vm3514, %vm3515
        %v3517 = vsel %vm3516, %v3509, %v3513
        %v3518 = vand.u32 2147483647, %v1673
        %vm3519 = vcmp.eq.f32.partialorder %v3518, 8.507059e+37
        %v3520 = vand.u32 %v1673, 2147483648
        %v3521 = vor.u32 1.1754944e-38, %v3520
        %v3522 = vsel %vm3519, %v3521, %v3517
        %v3523 = vmul.f32 1.0, %v3522
        %v3524 = vrcp.pop %v1674
        %v3525 = vmul.f32 %v1674, %v3524
        %v3526 = vsub.f32 1.0, %v3525
        %v3527 = vmul.f32 %v3524, %v3526
        %v3528 = vadd.f32 %v3524, %v3527
        %vm3529 = vweird.f32 %v1674
        %vm3530 = vweird.f32 %v3524
        %vm3531 = vmor %vm3529, %vm3530
        %v3532 = vsel %vm3531, %v3524, %v3528
        %v3533 = vand.u32 2147483647, %v1674
        %vm3534 = vcmp.eq.f32.partialorder %v3533, 8.507059e+37
        %v3535 = vand.u32 %v1674, 2147483648
        %v3536 = vor.u32 1.1754944e-38, %v3535
        %v3537 = vsel %vm3534, %v3536, %v3532
        %v3538 = vmul.f32 1.0, %v3537
        %v3539 = vrcp.pop %v1675
        %v3540 = vmul.f32 %v1675, %v3539
        %v3541 = vsub.f32 1.0, %v3540
        %v3542 = vmul.f32 %v3539, %v3541
        %v3543 = vadd.f32 %v3539, %v3542
        %vm3544 = vweird.f32 %v1675
        %vm3545 = vweird.f32 %v3539
        %vm3546 = vmor %vm3544, %vm3545
        %v3547 = vsel %vm3546, %v3539, %v3543
        %v3548 = vand.u32 2147483647, %v1675
        %vm3549 = vcmp.eq.f32.partialorder %v3548, 8.507059e+37
        %v3550 = vand.u32 %v1675, 2147483648
        %v3551 = vor.u32 1.1754944e-38, %v3550
        %v3552 = vsel %vm3549, %v3551, %v3547
        %v3553 = vmul.f32 1.0, %v3552
        %v3554 = vrcp.pop %v1676
        %v3555 = vmul.f32 %v1676, %v3554
        %v3556 = vsub.f32 1.0, %v3555
        %v3557 = vmul.f32 %v3554, %v3556
        %v3558 = vadd.f32 %v3554, %v3557
        %vm3559 = vweird.f32 %v1676
        %vm3560 = vweird.f32 %v3554
        %vm3561 = vmor %vm3559, %vm3560
        %v3562 = vsel %vm3561, %v3554, %v3558
        %v3563 = vand.u32 2147483647, %v1676
        %vm3564 = vcmp.eq.f32.partialorder %v3563, 8.507059e+37
        %v3565 = vand.u32 %v1676, 2147483648
        %v3566 = vor.u32 1.1754944e-38, %v3565
        %v3567 = vsel %vm3564, %v3566, %v3562
        %v3568 = vmul.f32 1.0, %v3567
        %v3569 = vrcp.pop %v1677
        %v3570 = vmul.f32 %v1677, %v3569
        %v3571 = vsub.f32 1.0, %v3570
        %v3572 = vmul.f32 %v3569, %v3571
        %v3573 = vadd.f32 %v3569, %v3572
        %vm3574 = vweird.f32 %v1677
        %vm3575 = vweird.f32 %v3569
        %vm3576 = vmor %vm3574, %vm3575
        %v3577 = vsel %vm3576, %v3569, %v3573
        %v3578 = vand.u32 2147483647, %v1677
        %vm3579 = vcmp.eq.f32.partialorder %v3578, 8.507059e+37
        %v3580 = vand.u32 %v1677, 2147483648
        %v3581 = vor.u32 1.1754944e-38, %v3580
        %v3582 = vsel %vm3579, %v3581, %v3577
        %v3583 = vmul.f32 1.0, %v3582
        %v3584 = vrcp.pop %v1678
        %v3585 = vmul.f32 %v1678, %v3584
        %v3586 = vsub.f32 1.0, %v3585
        %v3587 = vmul.f32 %v3584, %v3586
        %v3588 = vadd.f32 %v3584, %v3587
        %vm3589 = vweird.f32 %v1678
        %vm3590 = vweird.f32 %v3584
        %vm3591 = vmor %vm3589, %vm3590
        %v3592 = vsel %vm3591, %v3584, %v3588
        %v3593 = vand.u32 2147483647, %v1678
        %vm3594 = vcmp.eq.f32.partialorder %v3593, 8.507059e+37
        %v3595 = vand.u32 %v1678, 2147483648
        %v3596 = vor.u32 1.1754944e-38, %v3595
        %v3597 = vsel %vm3594, %v3596, %v3592
        %v3598 = vmul.f32 1.0, %v3597
        %v3599 = vld [vmem:[%s1] sm:$0xff]
        %v3600 = vld [vmem:[%s1 + $0x8] sm:$0xff]
        %v3601 = vld [vmem:[%s1 + $0x10] sm:$0xff]
        %v3602 = vld [vmem:[%s1 + $0x18] sm:$0xff]
        %v3603 = vld [vmem:[%s1 + $0x20] sm:$0xff]
        %v3604 = vld [vmem:[%s1 + $0x28] sm:$0xff]
        %v3605 = vld [vmem:[%s1 + $0x30] sm:$0xff]
        %v3606 = vld [vmem:[%s1 + $0x38] sm:$0xff]
        %v3607 = vld [vmem:[%s1 + $0x40] sm:$0xff]
        %v3608 = vld [vmem:[%s1 + $0x48] sm:$0xff]
        %v3609 = vld [vmem:[%s1 + $0x50] sm:$0xff]
        %v3610 = vld [vmem:[%s1 + $0x58] sm:$0xff]
        %v3611 = vld [vmem:[%s1 + $0x60] sm:$0xff]
        %v3612 = vld [vmem:[%s1 + $0x68] sm:$0xff]
        %v3613 = vld [vmem:[%s1 + $0x70] sm:$0xff]
        %v3614 = vld [vmem:[%s1 + $0x78] sm:$0xff]
        %v3615 = vld [vmem:[%s1 + $0x80] sm:$0xff]
        %v3616 = vld [vmem:[%s1 + $0x88] sm:$0xff]
        %v3617 = vld [vmem:[%s1 + $0x90] sm:$0xff]
        %v3618 = vld [vmem:[%s1 + $0x98] sm:$0xff]
        %v3619 = vld [vmem:[%s1 + $0xa0] sm:$0xff]
        %v3620 = vld [vmem:[%s1 + $0xa8] sm:$0xff]
        %v3621 = vld [vmem:[%s1 + $0xb0] sm:$0xff]
        %v3622 = vld [vmem:[%s1 + $0xb8] sm:$0xff]
        %v3623 = vld [vmem:[%s1 + $0xc0] sm:$0xff]
        %v3624 = vld [vmem:[%s1 + $0xc8] sm:$0xff]
        %v3625 = vld [vmem:[%s1 + $0xd0] sm:$0xff]
        %v3626 = vld [vmem:[%s1 + $0xd8] sm:$0xff]
        %v3627 = vld [vmem:[%s1 + $0xe0] sm:$0xff]
        %v3628 = vld [vmem:[%s1 + $0xe8] sm:$0xff]
        %v3629 = vld [vmem:[%s1 + $0xf0] sm:$0xff]
        %v3630 = vld [vmem:[%s1 + $0xf8] sm:$0xff]
        %v3631 = vld [vmem:[%s1 + $0x100] sm:$0xff]
        %v3632 = vld [vmem:[%s1 + $0x108] sm:$0xff]
        %v3633 = vld [vmem:[%s1 + $0x110] sm:$0xff]
        %v3634 = vld [vmem:[%s1 + $0x118] sm:$0xff]
        %v3635 = vld [vmem:[%s1 + $0x120] sm:$0xff]
        %v3636 = vld [vmem:[%s1 + $0x128] sm:$0xff]
        %v3637 = vld [vmem:[%s1 + $0x130] sm:$0xff]
        %v3638 = vld [vmem:[%s1 + $0x138] sm:$0xff]
        %v3639 = vld [vmem:[%s1 + $0x140] sm:$0xff]
        %v3640 = vld [vmem:[%s1 + $0x148] sm:$0xff]
        %v3641 = vld [vmem:[%s1 + $0x150] sm:$0xff]
        %v3642 = vld [vmem:[%s1 + $0x158] sm:$0xff]
        %v3643 = vld [vmem:[%s1 + $0x160] sm:$0xff]
        %v3644 = vld [vmem:[%s1 + $0x168] sm:$0xff]
        %v3645 = vld [vmem:[%s1 + $0x170] sm:$0xff]
        %v3646 = vld [vmem:[%s1 + $0x178] sm:$0xff]
        %v3647 = vld [vmem:[%s1 + $0x180] sm:$0xff]
        %v3648 = vld [vmem:[%s1 + $0x188] sm:$0xff]
        %v3649 = vld [vmem:[%s1 + $0x190] sm:$0xff]
        %v3650 = vld [vmem:[%s1 + $0x198] sm:$0xff]
        %v3651 = vld [vmem:[%s1 + $0x1a0] sm:$0xff]
        %v3652 = vld [vmem:[%s1 + $0x1a8] sm:$0xff]
        %v3653 = vld [vmem:[%s1 + $0x1b0] sm:$0xff]
        %v3654 = vld [vmem:[%s1 + $0x1b8] sm:$0xff]
        %v3655 = vld [vmem:[%s1 + $0x1c0] sm:$0xff]
        %v3656 = vld [vmem:[%s1 + $0x1c8] sm:$0xff]
        %v3657 = vld [vmem:[%s1 + $0x1d0] sm:$0xff]
        %v3658 = vld [vmem:[%s1 + $0x1d8] sm:$0xff]
        %v3659 = vld [vmem:[%s1 + $0x1e0] sm:$0xff]
        %v3660 = vld [vmem:[%s1 + $0x1e8] sm:$0xff]
        %v3661 = vld [vmem:[%s1 + $0x1f0] sm:$0xff]
        %v3662 = vld [vmem:[%s1 + $0x1f8] sm:$0xff]
        %v3663 = vld [vmem:[%s1 + $0x200] sm:$0xff]
        %v3664 = vld [vmem:[%s1 + $0x208] sm:$0xff]
        %v3665 = vld [vmem:[%s1 + $0x210] sm:$0xff]
        %v3666 = vld [vmem:[%s1 + $0x218] sm:$0xff]
        %v3667 = vld [vmem:[%s1 + $0x220] sm:$0xff]
        %v3668 = vld [vmem:[%s1 + $0x228] sm:$0xff]
        %v3669 = vld [vmem:[%s1 + $0x230] sm:$0xff]
        %v3670 = vld [vmem:[%s1 + $0x238] sm:$0xff]
        %v3671 = vld [vmem:[%s1 + $0x240] sm:$0xff]
        %v3672 = vld [vmem:[%s1 + $0x248] sm:$0xff]
        %v3673 = vld [vmem:[%s1 + $0x250] sm:$0xff]
        %v3674 = vld [vmem:[%s1 + $0x258] sm:$0xff]
        %v3675 = vld [vmem:[%s1 + $0x260] sm:$0xff]
        %v3676 = vld [vmem:[%s1 + $0x268] sm:$0xff]
        %v3677 = vld [vmem:[%s1 + $0x270] sm:$0xff]
        %v3678 = vld [vmem:[%s1 + $0x278] sm:$0xff]
        %v3679 = vld [vmem:[%s1 + $0x280] sm:$0xff]
        %v3680 = vld [vmem:[%s1 + $0x288] sm:$0xff]
        %v3681 = vld [vmem:[%s1 + $0x290] sm:$0xff]
        %v3682 = vld [vmem:[%s1 + $0x298] sm:$0xff]
        %v3683 = vld [vmem:[%s1 + $0x2a0] sm:$0xff]
        %v3684 = vld [vmem:[%s1 + $0x2a8] sm:$0xff]
        %v3685 = vld [vmem:[%s1 + $0x2b0] sm:$0xff]
        %v3686 = vld [vmem:[%s1 + $0x2b8] sm:$0xff]
        %v3687 = vld [vmem:[%s1 + $0x2c0] sm:$0xff]
        %v3688 = vld [vmem:[%s1 + $0x2c8] sm:$0xff]
        %v3689 = vld [vmem:[%s1 + $0x2d0] sm:$0xff]
        %v3690 = vld [vmem:[%s1 + $0x2d8] sm:$0xff]
        %v3691 = vld [vmem:[%s1 + $0x2e0] sm:$0xff]
        %v3692 = vld [vmem:[%s1 + $0x2e8] sm:$0xff]
        %v3693 = vld [vmem:[%s1 + $0x2f0] sm:$0xff]
        %v3694 = vld [vmem:[%s1 + $0x2f8] sm:$0xff]
        %v3695 = vld [vmem:[%s1 + $0x300] sm:$0xff]
        %v3696 = vld [vmem:[%s1 + $0x308] sm:$0xff]
        %v3697 = vld [vmem:[%s1 + $0x310] sm:$0xff]
        %v3698 = vld [vmem:[%s1 + $0x318] sm:$0xff]
        %v3699 = vld [vmem:[%s1 + $0x320] sm:$0xff]
        %v3700 = vld [vmem:[%s1 + $0x328] sm:$0xff]
        %v3701 = vld [vmem:[%s1 + $0x330] sm:$0xff]
        %v3702 = vld [vmem:[%s1 + $0x338] sm:$0xff]
        %v3703 = vld [vmem:[%s1 + $0x340] sm:$0xff]
        %v3704 = vld [vmem:[%s1 + $0x348] sm:$0xff]
        %v3705 = vld [vmem:[%s1 + $0x350] sm:$0xff]
        %v3706 = vld [vmem:[%s1 + $0x358] sm:$0xff]
        %v3707 = vld [vmem:[%s1 + $0x360] sm:$0xff]
        %v3708 = vld [vmem:[%s1 + $0x368] sm:$0xff]
        %v3709 = vld [vmem:[%s1 + $0x370] sm:$0xff]
        %v3710 = vld [vmem:[%s1 + $0x378] sm:$0xff]
        %v3711 = vld [vmem:[%s1 + $0x380] sm:$0xff]
        %v3712 = vld [vmem:[%s1 + $0x388] sm:$0xff]
        %v3713 = vld [vmem:[%s1 + $0x390] sm:$0xff]
        %v3714 = vld [vmem:[%s1 + $0x398] sm:$0xff]
        %v3715 = vld [vmem:[%s1 + $0x3a0] sm:$0xff]
        %v3716 = vld [vmem:[%s1 + $0x3a8] sm:$0xff]
        %v3717 = vld [vmem:[%s1 + $0x3b0] sm:$0xff]
        %v3718 = vld [vmem:[%s1 + $0x3b8] sm:$0xff]
        %v3719 = vld [vmem:[%s1 + $0x3c0] sm:$0xff]
        %v3720 = vld [vmem:[%s1 + $0x3c8] sm:$0xff]
        %v3721 = vld [vmem:[%s1 + $0x3d0] sm:$0xff]
        %v3722 = vld [vmem:[%s1 + $0x3d8] sm:$0xff]
        %v3723 = vld [vmem:[%s1 + $0x3e0] sm:$0xff]
        %v3724 = vld [vmem:[%s1 + $0x3e8] sm:$0xff]
        %v3725 = vld [vmem:[%s1 + $0x3f0] sm:$0xff]
        %v3726 = vld [vmem:[%s1 + $0x3f8] sm:$0xff]
        %3727 = vxpose.xlu0.b32.start [1/16] %v3599, 128
        %3728 = vxpose.xlu0.b32.cont [2/16] %v3600, 128
        %3729 = vxpose.xlu0.b32.cont [3/16] %v3601, 128
        %3730 = vxpose.xlu0.b32.cont [4/16] %v3602, 128
        %3731 = vxpose.xlu0.b32.cont [5/16] %v3603, 128
        %3732 = vxpose.xlu0.b32.cont [6/16] %v3604, 128
        %3733 = vxpose.xlu0.b32.cont [7/16] %v3605, 128
        %3734 = vxpose.xlu0.b32.cont [8/16] %v3606, 128
        %3735 = vxpose.xlu0.b32.cont [9/16] %v3607, 128
        %3736 = vxpose.xlu0.b32.cont [10/16] %v3608, 128
        %3737 = vxpose.xlu0.b32.cont [11/16] %v3609, 128
        %3738 = vxpose.xlu0.b32.cont [12/16] %v3610, 128
        %3739 = vxpose.xlu0.b32.cont [13/16] %v3611, 128
        %3740 = vxpose.xlu0.b32.cont [14/16] %v3612, 128
        %3741 = vxpose.xlu0.b32.cont [15/16] %v3613, 128
        %3742 = vxpose.xlu0.b32.end [16/16] %v3614, 128
        %v3743 = vpop.trf.xlu0
        %v3744 = vpop.trf.xlu0
        %v3745 = vpop.trf.xlu0
        %v3746 = vpop.trf.xlu0
        %v3747 = vpop.trf.xlu0
        %v3748 = vpop.trf.xlu0
        %v3749 = vpop.trf.xlu0
        %v3750 = vpop.trf.xlu0
        %v3751 = vpop.trf.xlu0
        %v3752 = vpop.trf.xlu0
        %v3753 = vpop.trf.xlu0
        %v3754 = vpop.trf.xlu0
        %v3755 = vpop.trf.xlu0
        %v3756 = vpop.trf.xlu0
        %v3757 = vpop.trf.xlu0
        %v3758 = vpop.trf.xlu0
        %3759 = vxpose.xlu0.b32.start [1/16] %v3615, 128
        %3760 = vxpose.xlu0.b32.cont [2/16] %v3616, 128
        %3761 = vxpose.xlu0.b32.cont [3/16] %v3617, 128
        %3762 = vxpose.xlu0.b32.cont [4/16] %v3618, 128
        %3763 = vxpose.xlu0.b32.cont [5/16] %v3619, 128
        %3764 = vxpose.xlu0.b32.cont [6/16] %v3620, 128
        %3765 = vxpose.xlu0.b32.cont [7/16] %v3621, 128
        %3766 = vxpose.xlu0.b32.cont [8/16] %v3622, 128
        %3767 = vxpose.xlu0.b32.cont [9/16] %v3623, 128
        %3768 = vxpose.xlu0.b32.cont [10/16] %v3624, 128
        %3769 = vxpose.xlu0.b32.cont [11/16] %v3625, 128
        %3770 = vxpose.xlu0.b32.cont [12/16] %v3626, 128
        %3771 = vxpose.xlu0.b32.cont [13/16] %v3627, 128
        %3772 = vxpose.xlu0.b32.cont [14/16] %v3628, 128
        %3773 = vxpose.xlu0.b32.cont [15/16] %v3629, 128
        %3774 = vxpose.xlu0.b32.end [16/16] %v3630, 128
        %v3775 = vpop.trf.xlu0
        %v3776 = vpop.trf.xlu0
        %v3777 = vpop.trf.xlu0
        %v3778 = vpop.trf.xlu0
        %v3779 = vpop.trf.xlu0
        %v3780 = vpop.trf.xlu0
        %v3781 = vpop.trf.xlu0
        %v3782 = vpop.trf.xlu0
        %v3783 = vpop.trf.xlu0
        %v3784 = vpop.trf.xlu0
        %v3785 = vpop.trf.xlu0
        %v3786 = vpop.trf.xlu0
        %v3787 = vpop.trf.xlu0
        %v3788 = vpop.trf.xlu0
        %v3789 = vpop.trf.xlu0
        %v3790 = vpop.trf.xlu0
        %3791 = vxpose.xlu0.b32.start [1/16] %v3631, 128
        %3792 = vxpose.xlu0.b32.cont [2/16] %v3632, 128
        %3793 = vxpose.xlu0.b32.cont [3/16] %v3633, 128
        %3794 = vxpose.xlu0.b32.cont [4/16] %v3634, 128
        %3795 = vxpose.xlu0.b32.cont [5/16] %v3635, 128
        %3796 = vxpose.xlu0.b32.cont [6/16] %v3636, 128
        %3797 = vxpose.xlu0.b32.cont [7/16] %v3637, 128
        %3798 = vxpose.xlu0.b32.cont [8/16] %v3638, 128
        %3799 = vxpose.xlu0.b32.cont [9/16] %v3639, 128
        %3800 = vxpose.xlu0.b32.cont [10/16] %v3640, 128
        %3801 = vxpose.xlu0.b32.cont [11/16] %v3641, 128
        %3802 = vxpose.xlu0.b32.cont [12/16] %v3642, 128
        %3803 = vxpose.xlu0.b32.cont [13/16] %v3643, 128
        %3804 = vxpose.xlu0.b32.cont [14/16] %v3644, 128
        %3805 = vxpose.xlu0.b32.cont [15/16] %v3645, 128
        %3806 = vxpose.xlu0.b32.end [16/16] %v3646, 128
        %v3807 = vpop.trf.xlu0
        %v3808 = vpop.trf.xlu0
        %v3809 = vpop.trf.xlu0
        %v3810 = vpop.trf.xlu0
        %v3811 = vpop.trf.xlu0
        %v3812 = vpop.trf.xlu0
        %v3813 = vpop.trf.xlu0
        %v3814 = vpop.trf.xlu0
        %v3815 = vpop.trf.xlu0
        %v3816 = vpop.trf.xlu0
        %v3817 = vpop.trf.xlu0
        %v3818 = vpop.trf.xlu0
        %v3819 = vpop.trf.xlu0
        %v3820 = vpop.trf.xlu0
        %v3821 = vpop.trf.xlu0
        %v3822 = vpop.trf.xlu0
        %3823 = vxpose.xlu0.b32.start [1/16] %v3647, 128
        %3824 = vxpose.xlu0.b32.cont [2/16] %v3648, 128
        %3825 = vxpose.xlu0.b32.cont [3/16] %v3649, 128
        %3826 = vxpose.xlu0.b32.cont [4/16] %v3650, 128
        %3827 = vxpose.xlu0.b32.cont [5/16] %v3651, 128
        %3828 = vxpose.xlu0.b32.cont [6/16] %v3652, 128
        %3829 = vxpose.xlu0.b32.cont [7/16] %v3653, 128
        %3830 = vxpose.xlu0.b32.cont [8/16] %v3654, 128
        %3831 = vxpose.xlu0.b32.cont [9/16] %v3655, 128
        %3832 = vxpose.xlu0.b32.cont [10/16] %v3656, 128
        %3833 = vxpose.xlu0.b32.cont [11/16] %v3657, 128
        %3834 = vxpose.xlu0.b32.cont [12/16] %v3658, 128
        %3835 = vxpose.xlu0.b32.cont [13/16] %v3659, 128
        %3836 = vxpose.xlu0.b32.cont [14/16] %v3660, 128
        %3837 = vxpose.xlu0.b32.cont [15/16] %v3661, 128
        %3838 = vxpose.xlu0.b32.end [16/16] %v3662, 128
        %v3839 = vpop.trf.xlu0
        %v3840 = vpop.trf.xlu0
        %v3841 = vpop.trf.xlu0
        %v3842 = vpop.trf.xlu0
        %v3843 = vpop.trf.xlu0
        %v3844 = vpop.trf.xlu0
        %v3845 = vpop.trf.xlu0
        %v3846 = vpop.trf.xlu0
        %v3847 = vpop.trf.xlu0
        %v3848 = vpop.trf.xlu0
        %v3849 = vpop.trf.xlu0
        %v3850 = vpop.trf.xlu0
        %v3851 = vpop.trf.xlu0
        %v3852 = vpop.trf.xlu0
        %v3853 = vpop.trf.xlu0
        %v3854 = vpop.trf.xlu0
        %3855 = vxpose.xlu0.b32.start [1/16] %v3663, 128
        %3856 = vxpose.xlu0.b32.cont [2/16] %v3664, 128
        %3857 = vxpose.xlu0.b32.cont [3/16] %v3665, 128
        %3858 = vxpose.xlu0.b32.cont [4/16] %v3666, 128
        %3859 = vxpose.xlu0.b32.cont [5/16] %v3667, 128
        %3860 = vxpose.xlu0.b32.cont [6/16] %v3668, 128
        %3861 = vxpose.xlu0.b32.cont [7/16] %v3669, 128
        %3862 = vxpose.xlu0.b32.cont [8/16] %v3670, 128
        %3863 = vxpose.xlu0.b32.cont [9/16] %v3671, 128
        %3864 = vxpose.xlu0.b32.cont [10/16] %v3672, 128
        %3865 = vxpose.xlu0.b32.cont [11/16] %v3673, 128
        %3866 = vxpose.xlu0.b32.cont [12/16] %v3674, 128
        %3867 = vxpose.xlu0.b32.cont [13/16] %v3675, 128
        %3868 = vxpose.xlu0.b32.cont [14/16] %v3676, 128
        %3869 = vxpose.xlu0.b32.cont [15/16] %v3677, 128
        %3870 = vxpose.xlu0.b32.end [16/16] %v3678, 128
        %v3871 = vpop.trf.xlu0
        %v3872 = vpop.trf.xlu0
        %v3873 = vpop.trf.xlu0
        %v3874 = vpop.trf.xlu0
        %v3875 = vpop.trf.xlu0
        %v3876 = vpop.trf.xlu0
        %v3877 = vpop.trf.xlu0
        %v3878 = vpop.trf.xlu0
        %v3879 = vpop.trf.xlu0
        %v3880 = vpop.trf.xlu0
        %v3881 = vpop.trf.xlu0
        %v3882 = vpop.trf.xlu0
        %v3883 = vpop.trf.xlu0
        %v3884 = vpop.trf.xlu0
        %v3885 = vpop.trf.xlu0
        %v3886 = vpop.trf.xlu0
        %3887 = vxpose.xlu0.b32.start [1/16] %v3679, 128
        %3888 = vxpose.xlu0.b32.cont [2/16] %v3680, 128
        %3889 = vxpose.xlu0.b32.cont [3/16] %v3681, 128
        %3890 = vxpose.xlu0.b32.cont [4/16] %v3682, 128
        %3891 = vxpose.xlu0.b32.cont [5/16] %v3683, 128
        %3892 = vxpose.xlu0.b32.cont [6/16] %v3684, 128
        %3893 = vxpose.xlu0.b32.cont [7/16] %v3685, 128
        %3894 = vxpose.xlu0.b32.cont [8/16] %v3686, 128
        %3895 = vxpose.xlu0.b32.cont [9/16] %v3687, 128
        %3896 = vxpose.xlu0.b32.cont [10/16] %v3688, 128
        %3897 = vxpose.xlu0.b32.cont [11/16] %v3689, 128
        %3898 = vxpose.xlu0.b32.cont [12/16] %v3690, 128
        %3899 = vxpose.xlu0.b32.cont [13/16] %v3691, 128
        %3900 = vxpose.xlu0.b32.cont [14/16] %v3692, 128
        %3901 = vxpose.xlu0.b32.cont [15/16] %v3693, 128
        %3902 = vxpose.xlu0.b32.end [16/16] %v3694, 128
        %v3903 = vpop.trf.xlu0
        %v3904 = vpop.trf.xlu0
        %v3905 = vpop.trf.xlu0
        %v3906 = vpop.trf.xlu0
        %v3907 = vpop.trf.xlu0
        %v3908 = vpop.trf.xlu0
        %v3909 = vpop.trf.xlu0
        %v3910 = vpop.trf.xlu0
        %v3911 = vpop.trf.xlu0
        %v3912 = vpop.trf.xlu0
        %v3913 = vpop.trf.xlu0
        %v3914 = vpop.trf.xlu0
        %v3915 = vpop.trf.xlu0
        %v3916 = vpop.trf.xlu0
        %v3917 = vpop.trf.xlu0
        %v3918 = vpop.trf.xlu0
        %3919 = vxpose.xlu0.b32.start [1/16] %v3695, 128
        %3920 = vxpose.xlu0.b32.cont [2/16] %v3696, 128
        %3921 = vxpose.xlu0.b32.cont [3/16] %v3697, 128
        %3922 = vxpose.xlu0.b32.cont [4/16] %v3698, 128
        %3923 = vxpose.xlu0.b32.cont [5/16] %v3699, 128
        %3924 = vxpose.xlu0.b32.cont [6/16] %v3700, 128
        %3925 = vxpose.xlu0.b32.cont [7/16] %v3701, 128
        %3926 = vxpose.xlu0.b32.cont [8/16] %v3702, 128
        %3927 = vxpose.xlu0.b32.cont [9/16] %v3703, 128
        %3928 = vxpose.xlu0.b32.cont [10/16] %v3704, 128
        %3929 = vxpose.xlu0.b32.cont [11/16] %v3705, 128
        %3930 = vxpose.xlu0.b32.cont [12/16] %v3706, 128
        %3931 = vxpose.xlu0.b32.cont [13/16] %v3707, 128
        %3932 = vxpose.xlu0.b32.cont [14/16] %v3708, 128
        %3933 = vxpose.xlu0.b32.cont [15/16] %v3709, 128
        %3934 = vxpose.xlu0.b32.end [16/16] %v3710, 128
        %v3935 = vpop.trf.xlu0
        %v3936 = vpop.trf.xlu0
        %v3937 = vpop.trf.xlu0
        %v3938 = vpop.trf.xlu0
        %v3939 = vpop.trf.xlu0
        %v3940 = vpop.trf.xlu0
        %v3941 = vpop.trf.xlu0
        %v3942 = vpop.trf.xlu0
        %v3943 = vpop.trf.xlu0
        %v3944 = vpop.trf.xlu0
        %v3945 = vpop.trf.xlu0
        %v3946 = vpop.trf.xlu0
        %v3947 = vpop.trf.xlu0
        %v3948 = vpop.trf.xlu0
        %v3949 = vpop.trf.xlu0
        %v3950 = vpop.trf.xlu0
        %3951 = vxpose.xlu0.b32.start [1/16] %v3711, 128
        %3952 = vxpose.xlu0.b32.cont [2/16] %v3712, 128
        %3953 = vxpose.xlu0.b32.cont [3/16] %v3713, 128
        %3954 = vxpose.xlu0.b32.cont [4/16] %v3714, 128
        %3955 = vxpose.xlu0.b32.cont [5/16] %v3715, 128
        %3956 = vxpose.xlu0.b32.cont [6/16] %v3716, 128
        %3957 = vxpose.xlu0.b32.cont [7/16] %v3717, 128
        %3958 = vxpose.xlu0.b32.cont [8/16] %v3718, 128
        %3959 = vxpose.xlu0.b32.cont [9/16] %v3719, 128
        %3960 = vxpose.xlu0.b32.cont [10/16] %v3720, 128
        %3961 = vxpose.xlu0.b32.cont [11/16] %v3721, 128
        %3962 = vxpose.xlu0.b32.cont [12/16] %v3722, 128
        %3963 = vxpose.xlu0.b32.cont [13/16] %v3723, 128
        %3964 = vxpose.xlu0.b32.cont [14/16] %v3724, 128
        %3965 = vxpose.xlu0.b32.cont [15/16] %v3725, 128
        %3966 = vxpose.xlu0.b32.end [16/16] %v3726, 128
        %v3967 = vpop.trf.xlu0
        %v3968 = vpop.trf.xlu0
        %v3969 = vpop.trf.xlu0
        %v3970 = vpop.trf.xlu0
        %v3971 = vpop.trf.xlu0
        %v3972 = vpop.trf.xlu0
        %v3973 = vpop.trf.xlu0
        %v3974 = vpop.trf.xlu0
        %v3975 = vpop.trf.xlu0
        %v3976 = vpop.trf.xlu0
        %v3977 = vpop.trf.xlu0
        %v3978 = vpop.trf.xlu0
        %v3979 = vpop.trf.xlu0
        %v3980 = vpop.trf.xlu0
        %v3981 = vpop.trf.xlu0
        %v3982 = vpop.trf.xlu0
        %3983 = vmatpush.msra.mxu0 %v1918
        %3984 = vmatpush.msra.mxu0 %v1903
        %3985 = vmatpush.msra.mxu0 %v1888
        %3986 = vmatpush.msra.mxu0 %v1873
        %3987 = vmatpush.msra.mxu0 %v1858
        %3988 = vmatpush.msra.mxu0 %v1843
        %3989 = vmatpush.msra.mxu0 %v1828
        %3990 = vmatpush.msra.mxu0 %v1813
        %3991 = vmatpush.msra.mxu0 %v1798
        %3992 = vmatpush.msra.mxu0 %v1783
        %3993 = vmatpush.msra.mxu0 %v1768
        %3994 = vmatpush.msra.mxu0 %v1753
        %3995 = vmatpush.msra.mxu0 %v1738
        %3996 = vmatpush.msra.mxu0 %v1723
        %3997 = vmatpush.msra.mxu0 %v1708
        %3998 = vmatpush.msra.mxu0 %v1693
        %3999 = vmatmul.f32.gmra.mxu0 %v3743
        %v4000 = vpop.f32.mrf.mxu0
        %v4001 = vadd.f32 0.0, %v4000
        %4002 = vmatmul.f32.gmra.mxu0 %v3744
        %v4003 = vpop.f32.mrf.mxu0
        %v4004 = vadd.f32 0.0, %v4003
        %4005 = vdwg.mxu0
        %4006 = vmatpush.msra.mxu0 %v2158
        %4007 = vmatpush.msra.mxu0 %v2143
        %4008 = vmatpush.msra.mxu0 %v2128
        %4009 = vmatpush.msra.mxu0 %v2113
        %4010 = vmatpush.msra.mxu0 %v2098
        %4011 = vmatpush.msra.mxu0 %v2083
        %4012 = vmatpush.msra.mxu0 %v2068
        %4013 = vmatpush.msra.mxu0 %v2053
        %4014 = vmatpush.msra.mxu0 %v2038
        %4015 = vmatpush.msra.mxu0 %v2023
        %4016 = vmatpush.msra.mxu0 %v2008
        %4017 = vmatpush.msra.mxu0 %v1993
        %4018 = vmatpush.msra.mxu0 %v1978
        %4019 = vmatpush.msra.mxu0 %v1963
        %4020 = vmatpush.msra.mxu0 %v1948
        %4021 = vmatpush.msra.mxu0 %v1933
        %4022 = vmatmul.f32.gmra.mxu0 %v3775
        %v4023 = vpop.f32.mrf.mxu0
        %v4024 = vadd.f32 %v4001, %v4023
        %4025 = vmatmul.f32.gmra.mxu0 %v3776
        %v4026 = vpop.f32.mrf.mxu0
        %v4027 = vadd.f32 %v4004, %v4026
        %4028 = vdwg.mxu0
        %4029 = vmatpush.msra.mxu0 %v2398
        %4030 = vmatpush.msra.mxu0 %v2383
        %4031 = vmatpush.msra.mxu0 %v2368
        %4032 = vmatpush.msra.mxu0 %v2353
        %4033 = vmatpush.msra.mxu0 %v2338
        %4034 = vmatpush.msra.mxu0 %v2323
        %4035 = vmatpush.msra.mxu0 %v2308
        %4036 = vmatpush.msra.mxu0 %v2293
        %4037 = vmatpush.msra.mxu0 %v2278
        %4038 = vmatpush.msra.mxu0 %v2263
        %4039 = vmatpush.msra.mxu0 %v2248
        %4040 = vmatpush.msra.mxu0 %v2233
        %4041 = vmatpush.msra.mxu0 %v2218
        %4042 = vmatpush.msra.mxu0 %v2203
        %4043 = vmatpush.msra.mxu0 %v2188
        %4044 = vmatpush.msra.mxu0 %v2173
        %4045 = vmatmul.f32.gmra.mxu0 %v3807
        %v4046 = vpop.f32.mrf.mxu0
        %v4047 = vadd.f32 %v4024, %v4046
        %4048 = vmatmul.f32.gmra.mxu0 %v3808
        %v4049 = vpop.f32.mrf.mxu0
        %v4050 = vadd.f32 %v4027, %v4049
        %4051 = vdwg.mxu0
        %4052 = vmatpush.msra.mxu0 %v2638
        %4053 = vmatpush.msra.mxu0 %v2623
        %4054 = vmatpush.msra.mxu0 %v2608
        %4055 = vmatpush.msra.mxu0 %v2593
        %4056 = vmatpush.msra.mxu0 %v2578
        %4057 = vmatpush.msra.mxu0 %v2563
        %4058 = vmatpush.msra.mxu0 %v2548
        %4059 = vmatpush.msra.mxu0 %v2533
        %4060 = vmatpush.msra.mxu0 %v2518
        %4061 = vmatpush.msra.mxu0 %v2503
        %4062 = vmatpush.msra.mxu0 %v2488
        %4063 = vmatpush.msra.mxu0 %v2473
        %4064 = vmatpush.msra.mxu0 %v2458
        %4065 = vmatpush.msra.mxu0 %v2443
        %4066 = vmatpush.msra.mxu0 %v2428
        %4067 = vmatpush.msra.mxu0 %v2413
        %4068 = vmatmul.f32.gmra.mxu0 %v3839
        %v4069 = vpop.f32.mrf.mxu0
        %v4070 = vadd.f32 %v4047, %v4069
        %4071 = vmatmul.f32.gmra.mxu0 %v3840
        %v4072 = vpop.f32.mrf.mxu0
        %v4073 = vadd.f32 %v4050, %v4072
        %4074 = vdwg.mxu0
        %4075 = vmatpush.msra.mxu0 %v2878
        %4076 = vmatpush.msra.mxu0 %v2863
        %4077 = vmatpush.msra.mxu0 %v2848
        %4078 = vmatpush.msra.mxu0 %v2833
        %4079 = vmatpush.msra.mxu0 %v2818
        %4080 = vmatpush.msra.mxu0 %v2803
        %4081 = vmatpush.msra.mxu0 %v2788
        %4082 = vmatpush.msra.mxu0 %v2773
        %4083 = vmatpush.msra.mxu0 %v2758
        %4084 = vmatpush.msra.mxu0 %v2743
        %4085 = vmatpush.msra.mxu0 %v2728
        %4086 = vmatpush.msra.mxu0 %v2713
        %4087 = vmatpush.msra.mxu0 %v2698
        %4088 = vmatpush.msra.mxu0 %v2683
        %4089 = vmatpush.msra.mxu0 %v2668
        %4090 = vmatpush.msra.mxu0 %v2653
        %4091 = vmatmul.f32.gmra.mxu0 %v3871
        %v4092 = vpop.f32.mrf.mxu0
        %v4093 = vadd.f32 %v4070, %v4092
        %4094 = vmatmul.f32.gmra.mxu0 %v3872
        %v4095 = vpop.f32.mrf.mxu0
        %v4096 = vadd.f32 %v4073, %v4095
        %4097 = vdwg.mxu0
        %4098 = vmatpush.msra.mxu0 %v3118
        %4099 = vmatpush.msra.mxu0 %v3103
        %4100 = vmatpush.msra.mxu0 %v3088
        %4101 = vmatpush.msra.mxu0 %v3073
        %4102 = vmatpush.msra.mxu0 %v3058
        %4103 = vmatpush.msra.mxu0 %v3043
        %4104 = vmatpush.msra.mxu0 %v3028
        %4105 = vmatpush.msra.mxu0 %v3013
        %4106 = vmatpush.msra.mxu0 %v2998
        %4107 = vmatpush.msra.mxu0 %v2983
        %4108 = vmatpush.msra.mxu0 %v2968
        %4109 = vmatpush.msra.mxu0 %v2953
        %4110 = vmatpush.msra.mxu0 %v2938
        %4111 = vmatpush.msra.mxu0 %v2923
        %4112 = vmatpush.msra.mxu0 %v2908
        %4113 = vmatpush.msra.mxu0 %v2893
        %4114 = vmatmul.f32.gmra.mxu0 %v3903
        %v4115 = vpop.f32.mrf.mxu0
        %v4116 = vadd.f32 %v4093, %v4115
        %4117 = vmatmul.f32.gmra.mxu0 %v3904
        %v4118 = vpop.f32.mrf.mxu0
        %v4119 = vadd.f32 %v4096, %v4118
        %4120 = vdwg.mxu0
        %4121 = vmatpush.msra.mxu0 %v3358
        %4122 = vmatpush.msra.mxu0 %v3343
        %4123 = vmatpush.msra.mxu0 %v3328
        %4124 = vmatpush.msra.mxu0 %v3313
        %4125 = vmatpush.msra.mxu0 %v3298
        %4126 = vmatpush.msra.mxu0 %v3283
        %4127 = vmatpush.msra.mxu0 %v3268
        %4128 = vmatpush.msra.mxu0 %v3253
        %4129 = vmatpush.msra.mxu0 %v3238
        %4130 = vmatpush.msra.mxu0 %v3223
        %4131 = vmatpush.msra.mxu0 %v3208
        %4132 = vmatpush.msra.mxu0 %v3193
        %4133 = vmatpush.msra.mxu0 %v3178
        %4134 = vmatpush.msra.mxu0 %v3163
        %4135 = vmatpush.msra.mxu0 %v3148
        %4136 = vmatpush.msra.mxu0 %v3133
        %4137 = vmatmul.f32.gmra.mxu0 %v3935
        %v4138 = vpop.f32.mrf.mxu0
        %v4139 = vadd.f32 %v4116, %v4138
        %4140 = vmatmul.f32.gmra.mxu0 %v3936
        %v4141 = vpop.f32.mrf.mxu0
        %v4142 = vadd.f32 %v4119, %v4141
        %4143 = vdwg.mxu0
        %4144 = vmatpush.msra.mxu0 %v3598
        %4145 = vmatpush.msra.mxu0 %v3583
        %4146 = vmatpush.msra.mxu0 %v3568
        %4147 = vmatpush.msra.mxu0 %v3553
        %4148 = vmatpush.msra.mxu0 %v3538
        %4149 = vmatpush.msra.mxu0 %v3523
        %4150 = vmatpush.msra.mxu0 %v3508
        %4151 = vmatpush.msra.mxu0 %v3493
        %4152 = vmatpush.msra.mxu0 %v3478
        %4153 = vmatpush.msra.mxu0 %v3463
        %4154 = vmatpush.msra.mxu0 %v3448
        %4155 = vmatpush.msra.mxu0 %v3433
        %4156 = vmatpush.msra.mxu0 %v3418
        %4157 = vmatpush.msra.mxu0 %v3403
        %4158 = vmatpush.msra.mxu0 %v3388
        %4159 = vmatpush.msra.mxu0 %v3373
        %4160 = vmatmul.f32.gmra.mxu0 %v3967
        %v4161 = vpop.f32.mrf.mxu0
        %v4162 = vadd.f32 %v4139, %v4161
        %4163 = vmatmul.f32.gmra.mxu0 %v3968
        %v4164 = vpop.f32.mrf.mxu0
        %v4165 = vadd.f32 %v4142, %v4164
        %4166 = vdwg.mxu0
        %v4167 = vmul.f32 %v1693, %v1693
        %v4168 = vmul.f32 %v1708, %v1708
        %v4169 = vmul.f32 %v1723, %v1723
        %v4170 = vmul.f32 %v1738, %v1738
        %v4171 = vmul.f32 %v1753, %v1753
        %v4172 = vmul.f32 %v1768, %v1768
        %v4173 = vmul.f32 %v1783, %v1783
        %v4174 = vmul.f32 %v1798, %v1798
        %v4175 = vmul.f32 %v1813, %v1813
        %v4176 = vmul.f32 %v1828, %v1828
        %v4177 = vmul.f32 %v1843, %v1843
        %v4178 = vmul.f32 %v1858, %v1858
        %v4179 = vmul.f32 %v1873, %v1873
        %v4180 = vmul.f32 %v1888, %v1888
        %v4181 = vmul.f32 %v1903, %v1903
        %v4182 = vmul.f32 %v1918, %v1918
        %v4183 = vmul.f32 %v1933, %v1933
        %v4184 = vmul.f32 %v1948, %v1948
        %v4185 = vmul.f32 %v1963, %v1963
        %v4186 = vmul.f32 %v1978, %v1978
        %v4187 = vmul.f32 %v1993, %v1993
        %v4188 = vmul.f32 %v2008, %v2008
        %v4189 = vmul.f32 %v2023, %v2023
        %v4190 = vmul.f32 %v2038, %v2038
        %v4191 = vmul.f32 %v2053, %v2053
        %v4192 = vmul.f32 %v2068, %v2068
        %v4193 = vmul.f32 %v2083, %v2083
        %v4194 = vmul.f32 %v2098, %v2098
        %v4195 = vmul.f32 %v2113, %v2113
        %v4196 = vmul.f32 %v2128, %v2128
        %v4197 = vmul.f32 %v2143, %v2143
        %v4198 = vmul.f32 %v2158, %v2158
        %v4199 = vmul.f32 %v2173, %v2173
        %v4200 = vmul.f32 %v2188, %v2188
        %v4201 = vmul.f32 %v2203, %v2203
        %v4202 = vmul.f32 %v2218, %v2218
        %v4203 = vmul.f32 %v2233, %v2233
        %v4204 = vmul.f32 %v2248, %v2248
        %v4205 = vmul.f32 %v2263, %v2263
        %v4206 = vmul.f32 %v2278, %v2278
        %v4207 = vmul.f32 %v2293, %v2293
        %v4208 = vmul.f32 %v2308, %v2308
        %v4209 = vmul.f32 %v2323, %v2323
        %v4210 = vmul.f32 %v2338, %v2338
        %v4211 = vmul.f32 %v2353, %v2353
        %v4212 = vmul.f32 %v2368, %v2368
        %v4213 = vmul.f32 %v2383, %v2383
        %v4214 = vmul.f32 %v2398, %v2398
        %v4215 = vmul.f32 %v2413, %v2413
        %v4216 = vmul.f32 %v2428, %v2428
        %v4217 = vmul.f32 %v2443, %v2443
        %v4218 = vmul.f32 %v2458, %v2458
        %v4219 = vmul.f32 %v2473, %v2473
        %v4220 = vmul.f32 %v2488, %v2488
        %v4221 = vmul.f32 %v2503, %v2503
        %v4222 = vmul.f32 %v2518, %v2518
        %v4223 = vmul.f32 %v2533, %v2533
        %v4224 = vmul.f32 %v2548, %v2548
        %v4225 = vmul.f32 %v2563, %v2563
        %v4226 = vmul.f32 %v2578, %v2578
        %v4227 = vmul.f32 %v2593, %v2593
        %v4228 = vmul.f32 %v2608, %v2608
        %v4229 = vmul.f32 %v2623, %v2623
        %v4230 = vmul.f32 %v2638, %v2638
        %v4231 = vmul.f32 %v2653, %v2653
        %v4232 = vmul.f32 %v2668, %v2668
        %v4233 = vmul.f32 %v2683, %v2683
        %v4234 = vmul.f32 %v2698, %v2698
        %v4235 = vmul.f32 %v2713, %v2713
        %v4236 = vmul.f32 %v2728, %v2728
        %v4237 = vmul.f32 %v2743, %v2743
        %v4238 = vmul.f32 %v2758, %v2758
        %v4239 = vmul.f32 %v2773, %v2773
        %v4240 = vmul.f32 %v2788, %v2788
        %v4241 = vmul.f32 %v2803, %v2803
        %v4242 = vmul.f32 %v2818, %v2818
        %v4243 = vmul.f32 %v2833, %v2833
        %v4244 = vmul.f32 %v2848, %v2848
        %v4245 = vmul.f32 %v2863, %v2863
        %v4246 = vmul.f32 %v2878, %v2878
        %v4247 = vmul.f32 %v2893, %v2893
        %v4248 = vmul.f32 %v2908, %v2908
        %v4249 = vmul.f32 %v2923, %v2923
        %v4250 = vmul.f32 %v2938, %v2938
        %v4251 = vmul.f32 %v2953, %v2953
        %v4252 = vmul.f32 %v2968, %v2968
        %v4253 = vmul.f32 %v2983, %v2983
        %v4254 = vmul.f32 %v2998, %v2998
        %v4255 = vmul.f32 %v3013, %v3013
        %v4256 = vmul.f32 %v3028, %v3028
        %v4257 = vmul.f32 %v3043, %v3043
        %v4258 = vmul.f32 %v3058, %v3058
        %v4259 = vmul.f32 %v3073, %v3073
        %v4260 = vmul.f32 %v3088, %v3088
        %v4261 = vmul.f32 %v3103, %v3103
        %v4262 = vmul.f32 %v3118, %v3118
        %v4263 = vmul.f32 %v3133, %v3133
        %v4264 = vmul.f32 %v3148, %v3148
        %v4265 = vmul.f32 %v3163, %v3163
        %v4266 = vmul.f32 %v3178, %v3178
        %v4267 = vmul.f32 %v3193, %v3193
        %v4268 = vmul.f32 %v3208, %v3208
        %v4269 = vmul.f32 %v3223, %v3223
        %v4270 = vmul.f32 %v3238, %v3238
        %v4271 = vmul.f32 %v3253, %v3253
        %v4272 = vmul.f32 %v3268, %v3268
        %v4273 = vmul.f32 %v3283, %v3283
        %v4274 = vmul.f32 %v3298, %v3298
        %v4275 = vmul.f32 %v3313, %v3313
        %v4276 = vmul.f32 %v3328, %v3328
        %v4277 = vmul.f32 %v3343, %v3343
        %v4278 = vmul.f32 %v3358, %v3358
        %v4279 = vmul.f32 %v3373, %v3373
        %v4280 = vmul.f32 %v3388, %v3388
        %v4281 = vmul.f32 %v3403, %v3403
        %v4282 = vmul.f32 %v3418, %v3418
        %v4283 = vmul.f32 %v3433, %v3433
        %v4284 = vmul.f32 %v3448, %v3448
        %v4285 = vmul.f32 %v3463, %v3463
        %v4286 = vmul.f32 %v3478, %v3478
        %v4287 = vmul.f32 %v3493, %v3493
        %v4288 = vmul.f32 %v3508, %v3508
        %v4289 = vmul.f32 %v3523, %v3523
        %v4290 = vmul.f32 %v3538, %v3538
        %v4291 = vmul.f32 %v3553, %v3553
        %v4292 = vmul.f32 %v3568, %v3568
        %v4293 = vmul.f32 %v3583, %v3583
        %v4294 = vmul.f32 %v3598, %v3598
        %v4295 = vadd.f32 %v4167, %v4168
        %v4296 = vadd.f32 %v4295, %v4169
        %v4297 = vadd.f32 %v4296, %v4170
        %v4298 = vadd.f32 %v4297, %v4171
        %v4299 = vadd.f32 %v4298, %v4172
        %v4300 = vadd.f32 %v4299, %v4173
        %v4301 = vadd.f32 %v4300, %v4174
        %v4302 = vadd.f32 %v4301, %v4175
        %v4303 = vadd.f32 %v4302, %v4176
        %v4304 = vadd.f32 %v4303, %v4177
        %v4305 = vadd.f32 %v4304, %v4178
        %v4306 = vadd.f32 %v4305, %v4179
        %v4307 = vadd.f32 %v4306, %v4180
        %v4308 = vadd.f32 %v4307, %v4181
        %v4309 = vadd.f32 %v4308, %v4182
        %v4310 = vadd.f32 %v4309, %v4183
        %v4311 = vadd.f32 %v4310, %v4184
        %v4312 = vadd.f32 %v4311, %v4185
        %v4313 = vadd.f32 %v4312, %v4186
        %v4314 = vadd.f32 %v4313, %v4187
        %v4315 = vadd.f32 %v4314, %v4188
        %v4316 = vadd.f32 %v4315, %v4189
        %v4317 = vadd.f32 %v4316, %v4190
        %v4318 = vadd.f32 %v4317, %v4191
        %v4319 = vadd.f32 %v4318, %v4192
        %v4320 = vadd.f32 %v4319, %v4193
        %v4321 = vadd.f32 %v4320, %v4194
        %v4322 = vadd.f32 %v4321, %v4195
        %v4323 = vadd.f32 %v4322, %v4196
        %v4324 = vadd.f32 %v4323, %v4197
        %v4325 = vadd.f32 %v4324, %v4198
        %v4326 = vadd.f32 %v4325, %v4199
        %v4327 = vadd.f32 %v4326, %v4200
        %v4328 = vadd.f32 %v4327, %v4201
        %v4329 = vadd.f32 %v4328, %v4202
        %v4330 = vadd.f32 %v4329, %v4203
        %v4331 = vadd.f32 %v4330, %v4204
        %v4332 = vadd.f32 %v4331, %v4205
        %v4333 = vadd.f32 %v4332, %v4206
        %v4334 = vadd.f32 %v4333, %v4207
        %v4335 = vadd.f32 %v4334, %v4208
        %v4336 = vadd.f32 %v4335, %v4209
        %v4337 = vadd.f32 %v4336, %v4210
        %v4338 = vadd.f32 %v4337, %v4211
        %v4339 = vadd.f32 %v4338, %v4212
        %v4340 = vadd.f32 %v4339, %v4213
        %v4341 = vadd.f32 %v4340, %v4214
        %v4342 = vadd.f32 %v4341, %v4215
        %v4343 = vadd.f32 %v4342, %v4216
        %v4344 = vadd.f32 %v4343, %v4217
        %v4345 = vadd.f32 %v4344, %v4218
        %v4346 = vadd.f32 %v4345, %v4219
        %v4347 = vadd.f32 %v4346, %v4220
        %v4348 = vadd.f32 %v4347, %v4221
        %v4349 = vadd.f32 %v4348, %v4222
        %v4350 = vadd.f32 %v4349, %v4223
        %v4351 = vadd.f32 %v4350, %v4224
        %v4352 = vadd.f32 %v4351, %v4225
        %v4353 = vadd.f32 %v4352, %v4226
        %v4354 = vadd.f32 %v4353, %v4227
        %v4355 = vadd.f32 %v4354, %v4228
        %v4356 = vadd.f32 %v4355, %v4229
        %v4357 = vadd.f32 %v4356, %v4230
        %v4358 = vadd.f32 %v4357, %v4231
        %v4359 = vadd.f32 %v4358, %v4232
        %v4360 = vadd.f32 %v4359, %v4233
        %v4361 = vadd.f32 %v4360, %v4234
        %v4362 = vadd.f32 %v4361, %v4235
        %v4363 = vadd.f32 %v4362, %v4236
        %v4364 = vadd.f32 %v4363, %v4237
        %v4365 = vadd.f32 %v4364, %v4238
        %v4366 = vadd.f32 %v4365, %v4239
        %v4367 = vadd.f32 %v4366, %v4240
        %v4368 = vadd.f32 %v4367, %v4241
        %v4369 = vadd.f32 %v4368, %v4242
        %v4370 = vadd.f32 %v4369, %v4243
        %v4371 = vadd.f32 %v4370, %v4244
        %v4372 = vadd.f32 %v4371, %v4245
        %v4373 = vadd.f32 %v4372, %v4246
        %v4374 = vadd.f32 %v4373, %v4247
        %v4375 = vadd.f32 %v4374, %v4248
        %v4376 = vadd.f32 %v4375, %v4249
        %v4377 = vadd.f32 %v4376, %v4250
        %v4378 = vadd.f32 %v4377, %v4251
        %v4379 = vadd.f32 %v4378, %v4252
        %v4380 = vadd.f32 %v4379, %v4253
        %v4381 = vadd.f32 %v4380, %v4254
        %v4382 = vadd.f32 %v4381, %v4255
        %v4383 = vadd.f32 %v4382, %v4256
        %v4384 = vadd.f32 %v4383, %v4257
        %v4385 = vadd.f32 %v4384, %v4258
        %v4386 = vadd.f32 %v4385, %v4259
        %v4387 = vadd.f32 %v4386, %v4260
        %v4388 = vadd.f32 %v4387, %v4261
        %v4389 = vadd.f32 %v4388, %v4262
        %v4390 = vadd.f32 %v4389, %v4263
        %v4391 = vadd.f32 %v4390, %v4264
        %v4392 = vadd.f32 %v4391, %v4265
        %v4393 = vadd.f32 %v4392, %v4266
        %v4394 = vadd.f32 %v4393, %v4267
        %v4395 = vadd.f32 %v4394, %v4268
        %v4396 = vadd.f32 %v4395, %v4269
        %v4397 = vadd.f32 %v4396, %v4270
        %v4398 = vadd.f32 %v4397, %v4271
        %v4399 = vadd.f32 %v4398, %v4272
        %v4400 = vadd.f32 %v4399, %v4273
        %v4401 = vadd.f32 %v4400, %v4274
        %v4402 = vadd.f32 %v4401, %v4275
        %v4403 = vadd.f32 %v4402, %v4276
        %v4404 = vadd.f32 %v4403, %v4277
        %v4405 = vadd.f32 %v4404, %v4278
        %v4406 = vadd.f32 %v4405, %v4279
        %v4407 = vadd.f32 %v4406, %v4280
        %v4408 = vadd.f32 %v4407, %v4281
        %v4409 = vadd.f32 %v4408, %v4282
        %v4410 = vadd.f32 %v4409, %v4283
        %v4411 = vadd.f32 %v4410, %v4284
        %v4412 = vadd.f32 %v4411, %v4285
        %v4413 = vadd.f32 %v4412, %v4286
        %v4414 = vadd.f32 %v4413, %v4287
        %v4415 = vadd.f32 %v4414, %v4288
        %v4416 = vadd.f32 %v4415, %v4289
        %v4417 = vadd.f32 %v4416, %v4290
        %v4418 = vadd.f32 %v4417, %v4291
        %v4419 = vadd.f32 %v4418, %v4292
        %v4420 = vadd.f32 %v4419, %v4293
        %v4421 = vadd.f32 %v4420, %v4294
        %v4422 = vrot.slane %v4421, 4
        %v4423 = vadd.f32 %v4421, %v4422
        %v4424 = vrot.slane %v4423, 2
        %v4425 = vadd.f32 %v4423, %v4424
        %v4426 = vrot.slane %v4425, 1
        %v4427 = vadd.f32 %v4425, %v4426
        %v4428 = vmul.f32 %v4162, %v4162
        %v4429 = vmul.f32 %v4165, %v4165
        %v4430 = vadd.f32 %v4427, 1e-30
        %v4431 = vrcp.pop %v4430
        %v4432 = vmul.f32 %v4430, %v4431
        %v4433 = vsub.f32 1.0, %v4432
        %v4434 = vmul.f32 %v4431, %v4433
        %v4435 = vadd.f32 %v4431, %v4434
        %vm4436 = vweird.f32 %v4430
        %vm4437 = vweird.f32 %v4431
        %vm4438 = vmor %vm4436, %vm4437
        %v4439 = vsel %vm4438, %v4431, %v4435
        %v4440 = vand.u32 2147483647, %v4430
        %vm4441 = vcmp.eq.f32.partialorder %v4440, 8.507059e+37
        %v4442 = vand.u32 %v4430, 2147483648
        %v4443 = vor.u32 1.1754944e-38, %v4442
        %v4444 = vsel %vm4441, %v4443, %v4439
        %v4445 = vmul.f32 %v4428, %v4444
        %v4446 = vmul.f32 %v4429, %v4444
        %vm4447 = vcmask 1041408
        %v4448 = vsel %vm4447, %v4446, 0.0
        %v4449 = vadd.f32 %v4445, %v4448
        %v4450 = vrot.slane %v4449, 4
        %v4451 = vadd.f32 %v4449, %v4450
        %v4452 = vrot.slane %v4451, 2
        %v4453 = vadd.f32 %v4451, %v4452
        %v4454 = vrot.slane %v4453, 1
        %v4455 = vadd.f32 %v4453, %v4454
        %v4456 = vrcp.pop 10.0
        %v4457 = vmul.f32 10.0, %v4456
        %v4458 = vsub.f32 1.0, %v4457
        %v4459 = vmul.f32 %v4456, %v4458
        %v4460 = vadd.f32 %v4456, %v4459
        %vm4461 = vweird.f32 %v4456
        %v4462 = vsel %vm4461, %v4456, %v4460
        %v4463 = vmul.f32 %v4455, %v4462
        %4464 = vst [vmem:[%s246] sm:$0x1] %v4463
        %p4465 = scmp.lt.s32.totalorder %s15, 1
        %s4466 = scalar_select %p4465, %s15, 1
        %s4467 = scalar_lea.vmem %s4, %s4466
        // Predicated region
        $region75: #{_step_normal_eq.1} parent=69 // pred_check
          %p4468 = pneg %p127
        $region76: #{_step_normal_eq.1} parent=69 // pred_check_branch
          %4470 = sbr.rel (%p4468) target = $region78
        $region77: #{_step_normal_eq.1} parent=69 // pred_region
          _
        $region78: #{_step_normal_eq.1} parent=69 // pred_fallthru
          _
      $region70: #{_step_normal_eq.1} parent=5 // pred_fallthru
        _
      %p4471 = scmp.le.s32.totalorder 2, %s10
      // Predicated region
      $region79: #{_step_normal_eq.1} parent=5 // pred_check
        %p4472 = pneg %p4471
      $region80: #{_step_normal_eq.1} parent=5 // pred_check_branch
        %4474 = sbr.rel (%p4472) target = $region82
      $region81: #{_step_normal_eq.1} parent=5 // pred_region
        %s4475 = ssub.s32 %s10, 2
        // Predicated region
        $region83: #{_step_normal_eq.1} parent=81 // pred_check
          %p4476 = pneg %p133
        $region84: #{_step_normal_eq.1} parent=81 // pred_check_branch
          %4478 = sbr.rel (%p4476) target = $region86
        $region85: #{_step_normal_eq.1} parent=81 // pred_region
          %p4479 = scmp.lt.s32.totalorder %s16, 1
          %s4480 = scalar_select %p4479, %s16, 1
          %s4481 = scalar_lea.vmem %s4, %s4480
        $region86: #{_step_normal_eq.1} parent=81 // pred_fallthru
          _
      $region82: #{_step_normal_eq.1} parent=5 // pred_fallthru
        _
    $region6: #{_step_normal_eq.1} parent=1 // loop_footer
      %s14 = sadd.s32 1, %s10
    $region7: #{_step_normal_eq.1} parent=1 // loop_footer_branch
      %9 = sbr.rel target = $region3
    $region8: #{_step_normal_eq.1} parent=1 // loop_exit
      _

</llo_original>
